<compile_context>
chip_gen: v6e
topology: v6e:2x2x1
jax: 0.10.0
libtpu: 0.0.40
codegen_flags: <defaults>
</compile_context>

<pallas_src>
import jax
import jax.numpy as jnp
from jax.experimental import pallas as pl
from jax.experimental.pallas import tpu as pltpu

A_SHP = 768          # input / output feature dim
B_SHP = 3 * A_SHP    # hidden dim (2304)
M = 8                # small batch / sequence rows (multiple of 8 sublanes)
TH = 1152            # hidden-dim tile per grid step (multiple of 128) -> 2 steps


def _gelu_exact(x):
    # nn.GELU() default is the exact (erf-based) GELU.
    inv_sqrt2 = jnp.float32(0.7071067811865476)
    return 0.5 * x * (1.0 + jax.lax.erf(x * inv_sqrt2))


def mlp_kernel(x_ref, w1_ref, w2_ref, o_ref):
    """Fused MLP: out = gelu(x @ W1t) @ W2t, accumulated over hidden tiles.

    The output block index is constant across the reduction axis, so o_ref
    stays VMEM-resident and is used directly as the f32 accumulator.
    """
    k = pl.program_id(0)

    @pl.when(k == 0)
    def _():
        o_ref[...] = jnp.zeros_like(o_ref)

    # First matmul: (M, A)bf16 @ (A, TH)bf16 -> (M, TH), f32 accumulation (MXU).
    h = jnp.dot(x_ref[...], w1_ref[...], preferred_element_type=jnp.float32)
    # Exact GELU on the hidden tile in f32 (VPU/EUP) -- hidden under weight DMA.
    h = _gelu_exact(h)
    # Second matmul partial: (M, TH)bf16 @ (TH, A)bf16 -> accumulate (M, A) f32.
    o_ref[...] += jnp.dot(h.astype(jnp.bfloat16), w2_ref[...],
                          preferred_element_type=jnp.float32)


@jax.jit
def mini_model_forward(x, w1t, w2t):
    """x: (M, A) f32; w1t: (A, B) bf16; w2t: (B, A) bf16 -> (M, A) f32."""
    m, a = x.shape
    b = w1t.shape[1]
    assert b % TH == 0
    grid = (b // TH,)
    x_bf16 = x.astype(jnp.bfloat16)   # tiny (12 KB); MXU-native operand dtype

    bytes_accessed = (x_bf16.size * 2 + w1t.size * 2 + w2t.size * 2 + m * a * 4)
    cost = pl.CostEstimate(
        flops=4 * m * a * b,          # two matmuls: 2*M*A*B each
        transcendentals=m * b,        # erf per hidden element
        bytes_accessed=bytes_accessed,
    )

    return pl.pallas_call(
        mlp_kernel,
        out_shape=jax.ShapeDtypeStruct((m, a), jnp.float32),
        grid_spec=pltpu.PrefetchScalarGridSpec(
            num_scalar_prefetch=0,
            grid=grid,
            in_specs=[
                pl.BlockSpec((m, a), lambda k: (0, 0)),    # x: VMEM-resident
                pl.BlockSpec((a, TH), lambda k: (0, k)),   # W1t hidden tile
                pl.BlockSpec((TH, a), lambda k: (k, 0)),   # W2t hidden tile
            ],
            out_specs=pl.BlockSpec((m, a), lambda k: (0, 0)),  # resident acc
        ),
        compiler_params=pltpu.CompilerParams(
            dimension_semantics=("arbitrary",),            # hidden reduction
            vmem_limit_bytes=32 * 1024 * 1024,             # headroom on v5e
        ),
        cost_estimate=cost,
    )(x_bf16, w1t, w2t)


if __name__ == "__main__":
    key = jax.random.PRNGKey(0)
    kx, k1, k2 = jax.random.split(key, 3)

    # Deterministic parameter init (uniform, ~nn.Linear scale: 1/sqrt(fan_in)).
    # PyTorch stores l1.weight as (B, A) and l2.weight as (A, B); the forward
    # uses weight.t(), so we directly build the transposed matrices.
    w1t_f32 = jax.random.uniform(
        k1, (A_SHP, B_SHP), dtype=jnp.float32,
        minval=-1.0, maxval=1.0) / jnp.sqrt(jnp.float32(A_SHP))
    w2t_f32 = jax.random.uniform(
        k2, (B_SHP, A_SHP), dtype=jnp.float32,
        minval=-1.0, maxval=1.0) / jnp.sqrt(jnp.float32(B_SHP))
    x = jax.random.normal(kx, (M, A_SHP), dtype=jnp.float32)

    # Store weights in bf16 in HBM once (outside jit): halves per-call weight
    # DMA traffic, which dominates wall clock at M=8.
    w1t = w1t_f32.astype(jnp.bfloat16)
    w2t = w2t_f32.astype(jnp.bfloat16)

    out = mini_model_forward(x, w1t, w2t)
    out = jax.block_until_ready(out)

    # Reference check in plain JAX f32 (same math as the PyTorch module).
    # Tolerances loosened to account for intentional bf16 weight streaming.
    ref = jnp.dot(jax.nn.gelu(jnp.dot(x, w1t_f32), approximate=False), w2t_f32)
    assert out.shape == (M, A_SHP)
    assert jnp.allclose(out, ref, rtol=2e-2, atol=2e-2), "mismatch vs reference"

    print("KERNEL_OK")
</pallas_src>

<mosaic_0001>
module attributes {stable_mosaic.version = 11 : i64} {
  func.func @mlp_kernel(%arg0: i32, %arg1: memref<8x768xbf16, #tpu.memory_space<vmem>>, %arg2: memref<768x1152xbf16, #tpu.memory_space<vmem>>, %arg3: memref<1152x768xbf16, #tpu.memory_space<vmem>>, %arg4: memref<8x768xf32, #tpu.memory_space<vmem>>) attributes {dimension_semantics = [#tpu.dimension_semantics<arbitrary>], iteration_bounds = array<i64: 2>, scalar_prefetch = 0 : i64, scratch_operands = 0 : i64, tpu.core_type = #tpu.core_type<tc>, window_params = [{pipeline_mode = #tpu.pipeline_mode<synchronous>, transform_indices = @transform_0, window_bounds = array<i64: 8, 768>}, {transform_indices = @transform_1, window_bounds = array<i64: 768, 1152>}, {transform_indices = @transform_2, window_bounds = array<i64: 1152, 768>}, {pipeline_mode = #tpu.pipeline_mode<synchronous>, transform_indices = @transform_3, window_bounds = array<i64: 8, 768>}]} {
    %c0_i32 = arith.constant 0 : i32
    %0 = arith.cmpi eq, %arg0, %c0_i32 : i32
    %1 = arith.extui %0 : i1 to i32
    %c0_i32_0 = arith.constant 0 : i32
    %2 = arith.cmpi ne, %1, %c0_i32_0 : i32
    scf.if %2 {
      %cst_14 = arith.constant 0.000000e+00 : f32
      %20 = vector.broadcast %cst_14 : f32 to vector<8x768xf32>
      %c0_15 = arith.constant 0 : index
      %c0_16 = arith.constant 0 : index
      %21 = vector.load %arg4[%c0_15, %c0_16] : memref<8x768xf32, #tpu.memory_space<vmem>>, vector<8x768xf32>
      tpu.vector_store %arg4[%c0_15, %c0_16], %20 {strides = array<i32>} : memref<8x768xf32, #tpu.memory_space<vmem>>, vector<8x768xf32>,
    } else {
    }
    %c0 = arith.constant 0 : index
    %c0_1 = arith.constant 0 : index
    %3 = vector.load %arg1[%c0, %c0_1] : memref<8x768xbf16, #tpu.memory_space<vmem>>, vector<8x768xbf16>
    %c0_2 = arith.constant 0 : index
    %c0_3 = arith.constant 0 : index
    %4 = vector.load %arg2[%c0_2, %c0_3] : memref<768x1152xbf16, #tpu.memory_space<vmem>>, vector<768x1152xbf16>
    %cst = arith.constant dense<0.000000e+00> : vector<8x1152xf32>
    %5 = tpu.matmul %3, %4, %cst {dimension_numbers = #tpu.dot_dimension_numbers<[1], [0], [0], [1], [0, 0, 1, 1], [], []>} : vector<8x768xbf16>, vector<768x1152xbf16>, vector<8x1152xf32> -> vector<8x1152xf32>
    %cst_4 = arith.constant 5.000000e-01 : f32
    %6 = vector.broadcast %cst_4 : f32 to vector<8x1152xf32>
    %7 = arith.mulf %6, %5 : vector<8x1152xf32>
    %cst_5 = arith.constant 0.707106769 : f32
    %8 = vector.broadcast %cst_5 : f32 to vector<8x1152xf32>
    %9 = arith.mulf %5, %8 : vector<8x1152xf32>
    %10 = math.erf %9 : vector<8x1152xf32>
    %cst_6 = arith.constant 1.000000e+00 : f32
    %11 = vector.broadcast %cst_6 : f32 to vector<8x1152xf32>
    %12 = arith.addf %11, %10 : vector<8x1152xf32>
    %13 = arith.mulf %7, %12 : vector<8x1152xf32>
    %c0_7 = arith.constant 0 : index
    %c0_8 = arith.constant 0 : index
    %14 = vector.load %arg4[%c0_7, %c0_8] : memref<8x768xf32, #tpu.memory_space<vmem>>, vector<8x768xf32>
    %15 = arith.truncf %13 : vector<8x1152xf32> to vector<8x1152xbf16>
    %c0_9 = arith.constant 0 : index
    %c0_10 = arith.constant 0 : index
    %16 = vector.load %arg3[%c0_9, %c0_10] : memref<1152x768xbf16, #tpu.memory_space<vmem>>, vector<1152x768xbf16>
    %cst_11 = arith.constant dense<0.000000e+00> : vector<8x768xf32>
    %17 = tpu.matmul %15, %16, %cst_11 {dimension_numbers = #tpu.dot_dimension_numbers<[1], [0], [0], [1], [0, 0, 1, 1], [], []>} : vector<8x1152xbf16>, vector<1152x768xbf16>, vector<8x768xf32> -> vector<8x768xf32>
    %18 = arith.addf %14, %17 : vector<8x768xf32>
    %c0_12 = arith.constant 0 : index
    %c0_13 = arith.constant 0 : index
    %19 = vector.load %arg4[%c0_12, %c0_13] : memref<8x768xf32, #tpu.memory_space<vmem>>, vector<8x768xf32>
    tpu.vector_store %arg4[%c0_12, %c0_13], %18 {strides = array<i32>} : memref<8x768xf32, #tpu.memory_space<vmem>>, vector<8x768xf32>,
    return
  }
  func.func @transform_0(%arg0: i32) -> (i32, i32) {
    %c0_i32 = arith.constant 0 : i32
    %c0_i32_0 = arith.constant 0 : i32
    %c0_i32_1 = arith.constant 0 : i32
    return %c0_i32, %c0_i32_0 : i32, i32
  }
  func.func @transform_1(%arg0: i32) -> (i32, i32) {
    %c0_i32 = arith.constant 0 : i32
    %c0_i32_0 = arith.constant 0 : i32
    return %c0_i32, %arg0 : i32, i32
  }
  func.func @transform_2(%arg0: i32) -> (i32, i32) {
    %c0_i32 = arith.constant 0 : i32
    %c0_i32_0 = arith.constant 0 : i32
    return %arg0, %c0_i32 : i32, i32
  }
  func.func @transform_3(%arg0: i32) -> (i32, i32) {
    %c0_i32 = arith.constant 0 : i32
    %c0_i32_0 = arith.constant 0 : i32
    %c0_i32_1 = arith.constant 0 : i32
    return %c0_i32, %c0_i32_0 : i32, i32
  }
}

</mosaic_0001>

<llo_original>
// kernel: mini_model_forward.1
$region0: #{mini_model_forward.1}
  #allocation0 [shape = 'u32[]', space=smem, size = 0x4, offset = 0x4, fixed_abs, tag = 'smem constant byte address 0x4 - core index']
  #allocation1 [shape = 'u32[144,128]{1,0:T(1,128)}', space=vmem, size = 0x12000, scoped, tag = 'internal scratch']
  %s0 = inlined_call_operand.vmem [shape: bf16[8,768], index: 0, kind: input, shape index: {}]
  %s1 = inlined_call_operand.hbm [shape: bf16[768,2304], index: 1, kind: input, shape index: {}]
  %s2 = inlined_call_operand.hbm [shape: bf16[2304,768], index: 2, kind: input, shape index: {}]
  %s3 = inlined_call_operand.hbm [shape: f32[8,768], index: 3, kind: output, shape index: {}]
  %s4 = sld [smem:[#allocation0]]
  $region57: #{mini_model_forward.1} parent=0
    _
  %s6 = ssub.s32 1, %s4
  %s7 = scalar_select 0, %s6, %s4
  $region1: #{mini_model_forward.1} parent=0
    #allocation2 [shape = 'u8[3538944]{0}', space=vmem, size = 0x360000, scoped, tag = 'input window, operand 1']
    #allocation3 [shape = 's32[2]{0}', space=sflag, size = 0x8, scoped, tag = 'scoped memory for mini_model_forward.1']
    #allocation4 [shape = 's32[2]{0}', space=sflag, size = 0x8, scoped, tag = 'scoped memory for mini_model_forward.1']
    #allocation5 [shape = 'u8[3538944]{0}', space=vmem, size = 0x360000, scoped, tag = 'input window, operand 2']
    #allocation6 [shape = 's32[2]{0}', space=sflag, size = 0x8, scoped, tag = 'scoped memory for mini_model_forward.1']
    #allocation7 [shape = 'u8[24576]{0}', space=vmem, size = 0x6000, scoped, tag = 'output window, operand 0, single buffered']
    %8 = vsyncpa [#allocation3], 0
    %s9 = scalar_lea.sflag [#allocation3], 1
    %10 = vsyncpa %s9, 0
    %11 = vsyncpa [#allocation6], 0
    %s12 = scalar_lea.sflag [#allocation6], 1
    %13 = vsyncpa %s12, 0
    %14 = vsyncpa [#allocation4], 0
    loop: start=0, step=1, limit=4
    $region2: #{mini_model_forward.1} parent=1 // loop_pre_header
      _
    $region3: #{mini_model_forward.1} parent=1 // loop_header
      %s16 = sphi 0, %s20
      %p17 = scmp.ge.s32.totalorder %s16, 4
      %s24 = sphi 0, %s24
      %s26 = sphi 0, %s24
      %s27 = sphi 0, %s26
      %s41 = sphi 0, %s27
      %s47 = sphi 0, %s49
      %s50 = sphi 0, %s47
      %s51 = sphi 0, %s50
      %s67 = sphi 0, %s51
      %s73 = sphi 0, %s75
      %s76 = sphi 0, %s73
      %s77 = sphi 0, %s76
      %s93 = sphi 0, %s77
      %s97 = sphi 0, %s97
      %s99 = sphi 0, %s97
      %s100 = sphi 0, %s99
      %s114 = sphi 0, %s100
    $region4: #{mini_model_forward.1} parent=1 // loop_header_branch
      %19 = sbr.rel (%p17) target = $region8
    $region5: #{mini_model_forward.1} parent=1 // loop_body
      %s21 = ssub.s32 %s16, 1
      %s22 = ssub.s32 %s16, 2
      %s23 = sadd.s32 %s16, 1
      %s25 = sadd.s32 %s24, 1
      %p28 = scmp.eq.s32.totalorder %s16, 1
      %p29 = scmp.ne.s32.totalorder %s24, %s26
      %p30 = scmp.eq.s32.totalorder %s16, 0
      %p31 = por %p29, %p30
      %p32 = scmp.ne.s32.totalorder %s24, %s26
      %p33 = scmp.eq.s32.totalorder %s21, 1
      %p34 = por %p32, %p33
      %p35 = scmp.ne.s32.totalorder %s26, %s27
      %p36 = scmp.eq.s32.totalorder %s21, 0
      %p37 = por %p35, %p36
      %p38 = scmp.ne.s32.totalorder %s26, %s27
      %p39 = scmp.eq.s32.totalorder %s22, 1
      %p40 = por %p38, %p39
      %p42 = scmp.ne.s32.totalorder %s27, %s41
      %p43 = scmp.eq.s32.totalorder %s22, 0
      %p44 = por %p42, %p43
      %s45 = ssub.s32 %s16, %s23
      %p46 = scmp.eq.s32.totalorder %s45, 0
      %s48 = sadd.s32 %s47, 1
      %s49 = scalar_select %p46, %s47, %s48
      %p52 = pneg %p46
      %p53 = scmp.eq.s32.totalorder %s16, 1
      %p54 = por %p52, %p53
      %p55 = scmp.ne.s32.totalorder %s47, %s50
      %p56 = scmp.eq.s32.totalorder %s16, 0
      %p57 = por %p55, %p56
      %p58 = scmp.ne.s32.totalorder %s47, %s50
      %p59 = scmp.eq.s32.totalorder %s21, 1
      %p60 = por %p58, %p59
      %p61 = scmp.ne.s32.totalorder %s50, %s51
      %p62 = scmp.eq.s32.totalorder %s21, 0
      %p63 = por %p61, %p62
      %p64 = scmp.ne.s32.totalorder %s50, %s51
      %p65 = scmp.eq.s32.totalorder %s22, 1
      %p66 = por %p64, %p65
      %p68 = scmp.ne.s32.totalorder %s51, %s67
      %p69 = scmp.eq.s32.totalorder %s22, 0
      %p70 = por %p68, %p69
      %s71 = ssub.s32 %s16, %s23
      %p72 = scmp.eq.s32.totalorder %s71, 0
      %s74 = sadd.s32 %s73, 1
      %s75 = scalar_select %p72, %s73, %s74
      %p78 = pneg %p72
      %p79 = scmp.eq.s32.totalorder %s16, 1
      %p80 = por %p78, %p79
      %p81 = scmp.ne.s32.totalorder %s73, %s76
      %p82 = scmp.eq.s32.totalorder %s16, 0
      %p83 = por %p81, %p82
      %p84 = scmp.ne.s32.totalorder %s73, %s76
      %p85 = scmp.eq.s32.totalorder %s21, 1
      %p86 = por %p84, %p85
      %p87 = scmp.ne.s32.totalorder %s76, %s77
      %p88 = scmp.eq.s32.totalorder %s21, 0
      %p89 = por %p87, %p88
      %p90 = scmp.ne.s32.totalorder %s76, %s77
      %p91 = scmp.eq.s32.totalorder %s22, 1
      %p92 = por %p90, %p91
      %p94 = scmp.ne.s32.totalorder %s77, %s93
      %p95 = scmp.eq.s32.totalorder %s22, 0
      %p96 = por %p94, %p95
      %s98 = sadd.s32 %s97, 1
      %p101 = scmp.eq.s32.totalorder %s16, 1
      %p102 = scmp.ne.s32.totalorder %s97, %s99
      %p103 = scmp.eq.s32.totalorder %s16, 0
      %p104 = por %p102, %p103
      %p105 = scmp.ne.s32.totalorder %s97, %s99
      %p106 = scmp.eq.s32.totalorder %s21, 1
      %p107 = por %p105, %p106
      %p108 = scmp.ne.s32.totalorder %s99, %s100
      %p109 = scmp.eq.s32.totalorder %s21, 0
      %p110 = por %p108, %p109
      %p111 = scmp.ne.s32.totalorder %s99, %s100
      %p112 = scmp.eq.s32.totalorder %s22, 1
      %p113 = por %p111, %p112
      %p115 = scmp.ne.s32.totalorder %s100, %s114
      %p116 = scmp.eq.s32.totalorder %s22, 0
      %p117 = por %p115, %p116
      %p118 = scmp.le.s32.totalorder 1, %s16
      %p119 = scmp.lt.s32.totalorder %s16, 3
      %p120 = pnand %p118, %p119
      %p121 = pneg %p120
      // Predicated region
      $region9: #{mini_model_forward.1} parent=5 // pred_check
        _
      $region10: #{mini_model_forward.1} parent=5 // pred_check_branch
        %123 = sbr.rel (%p120) target = $region12
      $region11: #{mini_model_forward.1} parent=5 // pred_region
        %s124 = ssub.s32 %s16, 1
        // Predicated region
        $region13: #{mini_model_forward.1} parent=11 // pred_check
          %p125 = pneg %p37
        $region14: #{mini_model_forward.1} parent=11 // pred_check_branch
          %127 = sbr.rel (%p125) target = $region16
        $region15: #{mini_model_forward.1} parent=11 // pred_region
          _
        $region16: #{mini_model_forward.1} parent=11 // pred_fallthru
          _
      $region12: #{mini_model_forward.1} parent=5 // pred_fallthru
        _
      %p128 = scmp.lt.s32.totalorder %s16, 2
      // Predicated region
      $region17: #{mini_model_forward.1} parent=5 // pred_check
        %p129 = pneg %p128
      $region18: #{mini_model_forward.1} parent=5 // pred_check_branch
        %131 = sbr.rel (%p129) target = $region20
      $region19: #{mini_model_forward.1} parent=5 // pred_region
        // Predicated region
        $region21: #{mini_model_forward.1} parent=19 // pred_check
          %p132 = pneg %p57
        $region22: #{mini_model_forward.1} parent=19 // pred_check_branch
          %134 = sbr.rel (%p132) target = $region24
        $region23: #{mini_model_forward.1} parent=19 // pred_region
          %s135 = sand.u32 %s47, 1
          %s136 = scalar_lea.sflag [#allocation3], %s135
          %s137 = sand.u32 %s47, 1
          %s138 = smul.addr %s137, 3456
          %s139 = scalar_lea.vmem [#allocation2], %s138
          %s140 = smul.u32 9, %s16
          %s142 = ssub.s32 55296, 55296
          %143 = vsyncadd %s136, %s142
          %s144 = smul.addr %s140, 64
          %s145 = scalar_lea.hbm %s1, %s144
          %s146 = sshll.u32 %s139, 4
          %s147 = int_to_ptr.vmem [resolvable:$true] %s146
          %152 = dma.hbm_to_vmem [thread:$0]  %s145, 55296, %s147, %s136, 1152, 576, 36
        $region24: #{mini_model_forward.1} parent=19 // pred_fallthru
          _
        // Predicated region
        $region25: #{mini_model_forward.1} parent=19 // pred_check
          %p153 = pneg %p83
        $region26: #{mini_model_forward.1} parent=19 // pred_check_branch
          %155 = sbr.rel (%p153) target = $region28
        $region27: #{mini_model_forward.1} parent=19 // pred_region
          %s156 = sand.u32 %s73, 1
          %s157 = scalar_lea.sflag [#allocation6], %s156
          %s158 = sand.u32 %s73, 1
          %s159 = smul.addr %s158, 3456
          %s160 = scalar_lea.vmem [#allocation5], %s159
          %s161 = smul.u32 144, %s16
          %s163 = ssub.s32 55296, 55296
          %164 = vsyncadd %s157, %s163
          %s165 = smul.addr %s161, 6
          %s166 = smul.addr %s165, 64
          %s167 = scalar_lea.hbm %s2, %s166
          %s168 = sshll.u32 %s160, 4
          %s169 = int_to_ptr.vmem [resolvable:$true] %s168
          %174 = dma.hbm_to_vmem [thread:$0]  %s167, 55296, %s169, %s157, 384, 384, 24
        $region28: #{mini_model_forward.1} parent=19 // pred_fallthru
          _
      $region20: #{mini_model_forward.1} parent=5 // pred_fallthru
        _
      %p175 = scmp.le.s32.totalorder 1, %s16
      %p176 = scmp.lt.s32.totalorder %s16, 3
      %p177 = pnand %p175, %p176
      %p178 = pneg %p177
      // Predicated region
      $region29: #{mini_model_forward.1} parent=5 // pred_check
        _
      $region30: #{mini_model_forward.1} parent=5 // pred_check_branch
        %180 = sbr.rel (%p177) target = $region32
      $region31: #{mini_model_forward.1} parent=5 // pred_region
        %s181 = ssub.s32 %s16, 1
        %s182 = sand.u32 %s50, 1
        %s183 = scalar_lea.sflag [#allocation3], %s182
        %s184 = sand.u32 %s50, 1
        %s185 = smul.addr %s184, 3456
        %s186 = scalar_lea.vmem [#allocation2], %s185
        // Predicated region
        $region33: #{mini_model_forward.1} parent=31 // pred_check
          %p187 = pneg %p63
        $region34: #{mini_model_forward.1} parent=31 // pred_check_branch
          %189 = sbr.rel (%p187) target = $region36
        $region35: #{mini_model_forward.1} parent=31 // pred_region
          %190 = dma.done %s183, 55296
        $region36: #{mini_model_forward.1} parent=31 // pred_fallthru
          _
        %s191 = sand.u32 %s76, 1
        %s192 = scalar_lea.sflag [#allocation6], %s191
        %s193 = sand.u32 %s76, 1
        %s194 = smul.addr %s193, 3456
        %s195 = scalar_lea.vmem [#allocation5], %s194
        // Predicated region
        $region37: #{mini_model_forward.1} parent=31 // pred_check
          %p196 = pneg %p89
        $region38: #{mini_model_forward.1} parent=31 // pred_check_branch
          %198 = sbr.rel (%p196) target = $region40
        $region39: #{mini_model_forward.1} parent=31 // pred_region
          %199 = dma.done %s192, 55296
        $region40: #{mini_model_forward.1} parent=31 // pred_fallthru
          _
        %p200 = pneg %p37
        %p201 = pneg %p34
        %s202 = sand.u32 %s50, 1
        %s203 = scalar_lea.sflag [#allocation3], %s202
        %s204 = sand.u32 %s50, 1
        %s205 = smul.addr %s204, 3456
        %s206 = scalar_lea.vmem [#allocation2], %s205
        %p207 = pneg %p63
        %p208 = pneg %p60
        %s209 = sand.u32 %s76, 1
        %s210 = scalar_lea.sflag [#allocation6], %s209
        %s211 = sand.u32 %s76, 1
        %s212 = smul.addr %s211, 3456
        %s213 = scalar_lea.vmem [#allocation5], %s212
        %p214 = pneg %p89
        %p215 = pneg %p86
        %p216 = pneg %p110
        %p217 = pneg %p107
        %s218 = smul.u32 9, %s21
        %s219 = smul.u32 144, %s21
        %p221 = scmp.eq.s32.totalorder %s21, 0
        // Predicated region
        $region41: #{mini_model_forward.1} parent=31 // pred_check
          %p222 = pneg %p221
        $region42: #{mini_model_forward.1} parent=31 // pred_check_branch
          %224 = sbr.rel (%p222) target = $region44
        $region43: #{mini_model_forward.1} parent=31 // pred_region
          %225 = vst [vmem:[#allocation7] sm:$0xff] 0.0
          %226 = vst [vmem:[#allocation7 + $0x8] sm:$0xff] 0.0
          %227 = vst [vmem:[#allocation7 + $0x10] sm:$0xff] 0.0
          %228 = vst [vmem:[#allocation7 + $0x18] sm:$0xff] 0.0
          %229 = vst [vmem:[#allocation7 + $0x20] sm:$0xff] 0.0
          %230 = vst [vmem:[#allocation7 + $0x28] sm:$0xff] 0.0
        $region44: #{mini_model_forward.1} parent=31 // pred_fallthru
          _
        %v231 = vld [vmem:[%s0] sm:$0xff]
        %v232 = vld [vmem:[%s0 + $0x8] sm:$0xff]
        %v233 = vld [vmem:[%s0 + $0x10] sm:$0xff]
        %v234 = vld [vmem:[%s186] sm:$0xff]
        %v235 = vld [vmem:[%s186 + $0x8] sm:$0xff]
        %v236 = vld [vmem:[%s186 + $0x10] sm:$0xff]
        %v237 = vld [vmem:[%s186 + $0x18] sm:$0xff]
        %v238 = vld [vmem:[%s186 + $0x20] sm:$0xf]
        %v239 = vld [vmem:[%s186 + $0x24] sm:$0xff]
        %v240 = vld [vmem:[%s186 + $0x2c] sm:$0xff]
        %v241 = vld [vmem:[%s186 + $0x34] sm:$0xff]
        %v242 = vld [vmem:[%s186 + $0x3c] sm:$0xff]
        %v243 = vld [vmem:[%s186 + $0x44] sm:$0xf]
        %v244 = vld [vmem:[%s186 + $0x48] sm:$0xff]
        %v245 = vld [vmem:[%s186 + $0x50] sm:$0xff]
        %v246 = vld [vmem:[%s186 + $0x58] sm:$0xff]
        %v247 = vld [vmem:[%s186 + $0x60] sm:$0xff]
        %v248 = vld [vmem:[%s186 + $0x68] sm:$0xf]
        %v249 = vld [vmem:[%s186 + $0x6c] sm:$0xff]
        %v250 = vld [vmem:[%s186 + $0x74] sm:$0xff]
        %v251 = vld [vmem:[%s186 + $0x7c] sm:$0xff]
        %v252 = vld [vmem:[%s186 + $0x84] sm:$0xff]
        %v253 = vld [vmem:[%s186 + $0x8c] sm:$0xf]
        %v254 = vld [vmem:[%s186 + $0x90] sm:$0xff]
        %v255 = vld [vmem:[%s186 + $0x98] sm:$0xff]
        %v256 = vld [vmem:[%s186 + $0xa0] sm:$0xff]
        %v257 = vld [vmem:[%s186 + $0xa8] sm:$0xff]
        %v258 = vld [vmem:[%s186 + $0xb0] sm:$0xf]
        %v259 = vld [vmem:[%s186 + $0xb4] sm:$0xff]
        %v260 = vld [vmem:[%s186 + $0xbc] sm:$0xff]
        %v261 = vld [vmem:[%s186 + $0xc4] sm:$0xff]
        %v262 = vld [vmem:[%s186 + $0xcc] sm:$0xff]
        %v263 = vld [vmem:[%s186 + $0xd4] sm:$0xf]
        %v264 = vld [vmem:[%s186 + $0xd8] sm:$0xff]
        %v265 = vld [vmem:[%s186 + $0xe0] sm:$0xff]
        %v266 = vld [vmem:[%s186 + $0xe8] sm:$0xff]
        %v267 = vld [vmem:[%s186 + $0xf0] sm:$0xff]
        %v268 = vld [vmem:[%s186 + $0xf8] sm:$0xf]
        %v269 = vld [vmem:[%s186 + $0xfc] sm:$0xff]
        %v270 = vld [vmem:[%s186 + $0x104] sm:$0xff]
        %v271 = vld [vmem:[%s186 + $0x10c] sm:$0xff]
        %v272 = vld [vmem:[%s186 + $0x114] sm:$0xff]
        %v273 = vld [vmem:[%s186 + $0x11c] sm:$0xf]
        %v274 = vld [vmem:[%s186 + $0x120] sm:$0xff]
        %v275 = vld [vmem:[%s186 + $0x128] sm:$0xff]
        %v276 = vld [vmem:[%s186 + $0x130] sm:$0xff]
        %v277 = vld [vmem:[%s186 + $0x138] sm:$0xff]
        %v278 = vld [vmem:[%s186 + $0x140] sm:$0xf]
        %v279 = vld [vmem:[%s186 + $0x144] sm:$0xff]
        %v280 = vld [vmem:[%s186 + $0x14c] sm:$0xff]
        %v281 = vld [vmem:[%s186 + $0x154] sm:$0xff]
        %v282 = vld [vmem:[%s186 + $0x15c] sm:$0xff]
        %v283 = vld [vmem:[%s186 + $0x164] sm:$0xf]
        %v284 = vld [vmem:[%s186 + $0x168] sm:$0xff]
        %v285 = vld [vmem:[%s186 + $0x170] sm:$0xff]
        %v286 = vld [vmem:[%s186 + $0x178] sm:$0xff]
        %v287 = vld [vmem:[%s186 + $0x180] sm:$0xff]
        %v288 = vld [vmem:[%s186 + $0x188] sm:$0xf]
        %v289 = vld [vmem:[%s186 + $0x18c] sm:$0xff]
        %v290 = vld [vmem:[%s186 + $0x194] sm:$0xff]
        %v291 = vld [vmem:[%s186 + $0x19c] sm:$0xff]
        %v292 = vld [vmem:[%s186 + $0x1a4] sm:$0xff]
        %v293 = vld [vmem:[%s186 + $0x1ac] sm:$0xf]
        %v294 = vld [vmem:[%s186 + $0x1b0] sm:$0xff]
        %v295 = vld [vmem:[%s186 + $0x1b8] sm:$0xff]
        %v296 = vld [vmem:[%s186 + $0x1c0] sm:$0xff]
        %v297 = vld [vmem:[%s186 + $0x1c8] sm:$0xff]
        %v298 = vld [vmem:[%s186 + $0x1d0] sm:$0xf]
        %v299 = vld [vmem:[%s186 + $0x1d4] sm:$0xff]
        %v300 = vld [vmem:[%s186 + $0x1dc] sm:$0xff]
        %v301 = vld [vmem:[%s186 + $0x1e4] sm:$0xff]
        %v302 = vld [vmem:[%s186 + $0x1ec] sm:$0xff]
        %v303 = vld [vmem:[%s186 + $0x1f4] sm:$0xf]
        %v304 = vld [vmem:[%s186 + $0x1f8] sm:$0xff]
        %v305 = vld [vmem:[%s186 + $0x200] sm:$0xff]
        %v306 = vld [vmem:[%s186 + $0x208] sm:$0xff]
        %v307 = vld [vmem:[%s186 + $0x210] sm:$0xff]
        %v308 = vld [vmem:[%s186 + $0x218] sm:$0xf]
        %v309 = vld [vmem:[%s186 + $0x21c] sm:$0xff]
        %v310 = vld [vmem:[%s186 + $0x224] sm:$0xff]
        %v311 = vld [vmem:[%s186 + $0x22c] sm:$0xff]
        %v312 = vld [vmem:[%s186 + $0x234] sm:$0xff]
        %v313 = vld [vmem:[%s186 + $0x23c] sm:$0xf]
        %v314 = vld [vmem:[%s186 + $0x240] sm:$0xff]
        %v315 = vld [vmem:[%s186 + $0x248] sm:$0xff]
        %v316 = vld [vmem:[%s186 + $0x250] sm:$0xff]
        %v317 = vld [vmem:[%s186 + $0x258] sm:$0xff]
        %v318 = vld [vmem:[%s186 + $0x260] sm:$0xf]
        %v319 = vld [vmem:[%s186 + $0x264] sm:$0xff]
        %v320 = vld [vmem:[%s186 + $0x26c] sm:$0xff]
        %v321 = vld [vmem:[%s186 + $0x274] sm:$0xff]
        %v322 = vld [vmem:[%s186 + $0x27c] sm:$0xff]
        %v323 = vld [vmem:[%s186 + $0x284] sm:$0xf]
        %v324 = vld [vmem:[%s186 + $0x288] sm:$0xff]
        %v325 = vld [vmem:[%s186 + $0x290] sm:$0xff]
        %v326 = vld [vmem:[%s186 + $0x298] sm:$0xff]
        %v327 = vld [vmem:[%s186 + $0x2a0] sm:$0xff]
        %v328 = vld [vmem:[%s186 + $0x2a8] sm:$0xf]
        %v329 = vld [vmem:[%s186 + $0x2ac] sm:$0xff]
        %v330 = vld [vmem:[%s186 + $0x2b4] sm:$0xff]
        %v331 = vld [vmem:[%s186 + $0x2bc] sm:$0xff]
        %v332 = vld [vmem:[%s186 + $0x2c4] sm:$0xff]
        %v333 = vld [vmem:[%s186 + $0x2cc] sm:$0xf]
        %v334 = vld [vmem:[%s186 + $0x2d0] sm:$0xff]
        %v335 = vld [vmem:[%s186 + $0x2d8] sm:$0xff]
        %v336 = vld [vmem:[%s186 + $0x2e0] sm:$0xff]
        %v337 = vld [vmem:[%s186 + $0x2e8] sm:$0xff]
        %v338 = vld [vmem:[%s186 + $0x2f0] sm:$0xf]
        %v339 = vld [vmem:[%s186 + $0x2f4] sm:$0xff]
        %v340 = vld [vmem:[%s186 + $0x2fc] sm:$0xff]
        %v341 = vld [vmem:[%s186 + $0x304] sm:$0xff]
        %v342 = vld [vmem:[%s186 + $0x30c] sm:$0xff]
        %v343 = vld [vmem:[%s186 + $0x314] sm:$0xf]
        %v344 = vld [vmem:[%s186 + $0x318] sm:$0xff]
        %v345 = vld [vmem:[%s186 + $0x320] sm:$0xff]
        %v346 = vld [vmem:[%s186 + $0x328] sm:$0xff]
        %v347 = vld [vmem:[%s186 + $0x330] sm:$0xff]
        %v348 = vld [vmem:[%s186 + $0x338] sm:$0xf]
        %v349 = vld [vmem:[%s186 + $0x33c] sm:$0xff]
        %v350 = vld [vmem:[%s186 + $0x344] sm:$0xff]
        %v351 = vld [vmem:[%s186 + $0x34c] sm:$0xff]
        %v352 = vld [vmem:[%s186 + $0x354] sm:$0xff]
        %v353 = vld [vmem:[%s186 + $0x35c] sm:$0xf]
        %v354 = vld [vmem:[%s186 + $0x360] sm:$0xff]
        %v355 = vld [vmem:[%s186 + $0x368] sm:$0xff]
        %v356 = vld [vmem:[%s186 + $0x370] sm:$0xff]
        %v357 = vld [vmem:[%s186 + $0x378] sm:$0xff]
        %v358 = vld [vmem:[%s186 + $0x380] sm:$0xf]
        %v359 = vld [vmem:[%s186 + $0x384] sm:$0xff]
        %v360 = vld [vmem:[%s186 + $0x38c] sm:$0xff]
        %v361 = vld [vmem:[%s186 + $0x394] sm:$0xff]
        %v362 = vld [vmem:[%s186 + $0x39c] sm:$0xff]
        %v363 = vld [vmem:[%s186 + $0x3a4] sm:$0xf]
        %v364 = vld [vmem:[%s186 + $0x3a8] sm:$0xff]
        %v365 = vld [vmem:[%s186 + $0x3b0] sm:$0xff]
        %v366 = vld [vmem:[%s186 + $0x3b8] sm:$0xff]
        %v367 = vld [vmem:[%s186 + $0x3c0] sm:$0xff]
        %v368 = vld [vmem:[%s186 + $0x3c8] sm:$0xf]
        %v369 = vld [vmem:[%s186 + $0x3cc] sm:$0xff]
        %v370 = vld [vmem:[%s186 + $0x3d4] sm:$0xff]
        %v371 = vld [vmem:[%s186 + $0x3dc] sm:$0xff]
        %v372 = vld [vmem:[%s186 + $0x3e4] sm:$0xff]
        %v373 = vld [vmem:[%s186 + $0x3ec] sm:$0xf]
        %v374 = vld [vmem:[%s186 + $0x3f0] sm:$0xff]
        %v375 = vld [vmem:[%s186 + $0x3f8] sm:$0xff]
        %v376 = vld [vmem:[%s186 + $0x400] sm:$0xff]
        %v377 = vld [vmem:[%s186 + $0x408] sm:$0xff]
        %v378 = vld [vmem:[%s186 + $0x410] sm:$0xf]
        %v379 = vld [vmem:[%s186 + $0x414] sm:$0xff]
        %v380 = vld [vmem:[%s186 + $0x41c] sm:$0xff]
        %v381 = vld [vmem:[%s186 + $0x424] sm:$0xff]
        %v382 = vld [vmem:[%s186 + $0x42c] sm:$0xff]
        %v383 = vld [vmem:[%s186 + $0x434] sm:$0xf]
        %v384 = vld [vmem:[%s186 + $0x438] sm:$0xff]
        %v385 = vld [vmem:[%s186 + $0x440] sm:$0xff]
        %v386 = vld [vmem:[%s186 + $0x448] sm:$0xff]
        %v387 = vld [vmem:[%s186 + $0x450] sm:$0xff]
        %v388 = vld [vmem:[%s186 + $0x458] sm:$0xf]
        %v389 = vld [vmem:[%s186 + $0x45c] sm:$0xff]
        %v390 = vld [vmem:[%s186 + $0x464] sm:$0xff]
        %v391 = vld [vmem:[%s186 + $0x46c] sm:$0xff]
        %v392 = vld [vmem:[%s186 + $0x474] sm:$0xff]
        %v393 = vld [vmem:[%s186 + $0x47c] sm:$0xf]
        %v394 = vld [vmem:[%s186 + $0x480] sm:$0xff]
        %v395 = vld [vmem:[%s186 + $0x488] sm:$0xff]
        %v396 = vld [vmem:[%s186 + $0x490] sm:$0xff]
        %v397 = vld [vmem:[%s186 + $0x498] sm:$0xff]
        %v398 = vld [vmem:[%s186 + $0x4a0] sm:$0xf]
        %v399 = vld [vmem:[%s186 + $0x4a4] sm:$0xff]
        %v400 = vld [vmem:[%s186 + $0x4ac] sm:$0xff]
        %v401 = vld [vmem:[%s186 + $0x4b4] sm:$0xff]
        %v402 = vld [vmem:[%s186 + $0x4bc] sm:$0xff]
        %v403 = vld [vmem:[%s186 + $0x4c4] sm:$0xf]
        %v404 = vld [vmem:[%s186 + $0x4c8] sm:$0xff]
        %v405 = vld [vmem:[%s186 + $0x4d0] sm:$0xff]
        %v406 = vld [vmem:[%s186 + $0x4d8] sm:$0xff]
        %v407 = vld [vmem:[%s186 + $0x4e0] sm:$0xff]
        %v408 = vld [vmem:[%s186 + $0x4e8] sm:$0xf]
        %v409 = vld [vmem:[%s186 + $0x4ec] sm:$0xff]
        %v410 = vld [vmem:[%s186 + $0x4f4] sm:$0xff]
        %v411 = vld [vmem:[%s186 + $0x4fc] sm:$0xff]
        %v412 = vld [vmem:[%s186 + $0x504] sm:$0xff]
        %v413 = vld [vmem:[%s186 + $0x50c] sm:$0xf]
        %v414 = vld [vmem:[%s186 + $0x510] sm:$0xff]
        %v415 = vld [vmem:[%s186 + $0x518] sm:$0xff]
        %v416 = vld [vmem:[%s186 + $0x520] sm:$0xff]
        %v417 = vld [vmem:[%s186 + $0x528] sm:$0xff]
        %v418 = vld [vmem:[%s186 + $0x530] sm:$0xf]
        %v419 = vld [vmem:[%s186 + $0x534] sm:$0xff]
        %v420 = vld [vmem:[%s186 + $0x53c] sm:$0xff]
        %v421 = vld [vmem:[%s186 + $0x544] sm:$0xff]
        %v422 = vld [vmem:[%s186 + $0x54c] sm:$0xff]
        %v423 = vld [vmem:[%s186 + $0x554] sm:$0xf]
        %v424 = vld [vmem:[%s186 + $0x558] sm:$0xff]
        %v425 = vld [vmem:[%s186 + $0x560] sm:$0xff]
        %v426 = vld [vmem:[%s186 + $0x568] sm:$0xff]
        %v427 = vld [vmem:[%s186 + $0x570] sm:$0xff]
        %v428 = vld [vmem:[%s186 + $0x578] sm:$0xf]
        %v429 = vld [vmem:[%s186 + $0x57c] sm:$0xff]
        %v430 = vld [vmem:[%s186 + $0x584] sm:$0xff]
        %v431 = vld [vmem:[%s186 + $0x58c] sm:$0xff]
        %v432 = vld [vmem:[%s186 + $0x594] sm:$0xff]
        %v433 = vld [vmem:[%s186 + $0x59c] sm:$0xf]
        %v434 = vld [vmem:[%s186 + $0x5a0] sm:$0xff]
        %v435 = vld [vmem:[%s186 + $0x5a8] sm:$0xff]
        %v436 = vld [vmem:[%s186 + $0x5b0] sm:$0xff]
        %v437 = vld [vmem:[%s186 + $0x5b8] sm:$0xff]
        %v438 = vld [vmem:[%s186 + $0x5c0] sm:$0xf]
        %v439 = vld [vmem:[%s186 + $0x5c4] sm:$0xff]
        %v440 = vld [vmem:[%s186 + $0x5cc] sm:$0xff]
        %v441 = vld [vmem:[%s186 + $0x5d4] sm:$0xff]
        %v442 = vld [vmem:[%s186 + $0x5dc] sm:$0xff]
        %v443 = vld [vmem:[%s186 + $0x5e4] sm:$0xf]
        %v444 = vld [vmem:[%s186 + $0x5e8] sm:$0xff]
        %v445 = vld [vmem:[%s186 + $0x5f0] sm:$0xff]
        %v446 = vld [vmem:[%s186 + $0x5f8] sm:$0xff]
        %v447 = vld [vmem:[%s186 + $0x600] sm:$0xff]
        %v448 = vld [vmem:[%s186 + $0x608] sm:$0xf]
        %v449 = vld [vmem:[%s186 + $0x60c] sm:$0xff]
        %v450 = vld [vmem:[%s186 + $0x614] sm:$0xff]
        %v451 = vld [vmem:[%s186 + $0x61c] sm:$0xff]
        %v452 = vld [vmem:[%s186 + $0x624] sm:$0xff]
        %v453 = vld [vmem:[%s186 + $0x62c] sm:$0xf]
        %v454 = vld [vmem:[%s186 + $0x630] sm:$0xff]
        %v455 = vld [vmem:[%s186 + $0x638] sm:$0xff]
        %v456 = vld [vmem:[%s186 + $0x640] sm:$0xff]
        %v457 = vld [vmem:[%s186 + $0x648] sm:$0xff]
        %v458 = vld [vmem:[%s186 + $0x650] sm:$0xf]
        %v459 = vld [vmem:[%s186 + $0x654] sm:$0xff]
        %v460 = vld [vmem:[%s186 + $0x65c] sm:$0xff]
        %v461 = vld [vmem:[%s186 + $0x664] sm:$0xff]
        %v462 = vld [vmem:[%s186 + $0x66c] sm:$0xff]
        %v463 = vld [vmem:[%s186 + $0x674] sm:$0xf]
        %v464 = vld [vmem:[%s186 + $0x678] sm:$0xff]
        %v465 = vld [vmem:[%s186 + $0x680] sm:$0xff]
        %v466 = vld [vmem:[%s186 + $0x688] sm:$0xff]
        %v467 = vld [vmem:[%s186 + $0x690] sm:$0xff]
        %v468 = vld [vmem:[%s186 + $0x698] sm:$0xf]
        %v469 = vld [vmem:[%s186 + $0x69c] sm:$0xff]
        %v470 = vld [vmem:[%s186 + $0x6a4] sm:$0xff]
        %v471 = vld [vmem:[%s186 + $0x6ac] sm:$0xff]
        %v472 = vld [vmem:[%s186 + $0x6b4] sm:$0xff]
        %v473 = vld [vmem:[%s186 + $0x6bc] sm:$0xf]
        %v474 = vld [vmem:[%s186 + $0x6c0] sm:$0xff]
        %v475 = vld [vmem:[%s186 + $0x6c8] sm:$0xff]
        %v476 = vld [vmem:[%s186 + $0x6d0] sm:$0xff]
        %v477 = vld [vmem:[%s186 + $0x6d8] sm:$0xff]
        %v478 = vld [vmem:[%s186 + $0x6e0] sm:$0xf]
        %v479 = vld [vmem:[%s186 + $0x6e4] sm:$0xff]
        %v480 = vld [vmem:[%s186 + $0x6ec] sm:$0xff]
        %v481 = vld [vmem:[%s186 + $0x6f4] sm:$0xff]
        %v482 = vld [vmem:[%s186 + $0x6fc] sm:$0xff]
        %v483 = vld [vmem:[%s186 + $0x704] sm:$0xf]
        %v484 = vld [vmem:[%s186 + $0x708] sm:$0xff]
        %v485 = vld [vmem:[%s186 + $0x710] sm:$0xff]
        %v486 = vld [vmem:[%s186 + $0x718] sm:$0xff]
        %v487 = vld [vmem:[%s186 + $0x720] sm:$0xff]
        %v488 = vld [vmem:[%s186 + $0x728] sm:$0xf]
        %v489 = vld [vmem:[%s186 + $0x72c] sm:$0xff]
        %v490 = vld [vmem:[%s186 + $0x734] sm:$0xff]
        %v491 = vld [vmem:[%s186 + $0x73c] sm:$0xff]
        %v492 = vld [vmem:[%s186 + $0x744] sm:$0xff]
        %v493 = vld [vmem:[%s186 + $0x74c] sm:$0xf]
        %v494 = vld [vmem:[%s186 + $0x750] sm:$0xff]
        %v495 = vld [vmem:[%s186 + $0x758] sm:$0xff]
        %v496 = vld [vmem:[%s186 + $0x760] sm:$0xff]
        %v497 = vld [vmem:[%s186 + $0x768] sm:$0xff]
        %v498 = vld [vmem:[%s186 + $0x770] sm:$0xf]
        %v499 = vld [vmem:[%s186 + $0x774] sm:$0xff]
        %v500 = vld [vmem:[%s186 + $0x77c] sm:$0xff]
        %v501 = vld [vmem:[%s186 + $0x784] sm:$0xff]
        %v502 = vld [vmem:[%s186 + $0x78c] sm:$0xff]
        %v503 = vld [vmem:[%s186 + $0x794] sm:$0xf]
        %v504 = vld [vmem:[%s186 + $0x798] sm:$0xff]
        %v505 = vld [vmem:[%s186 + $0x7a0] sm:$0xff]
        %v506 = vld [vmem:[%s186 + $0x7a8] sm:$0xff]
        %v507 = vld [vmem:[%s186 + $0x7b0] sm:$0xff]
        %v508 = vld [vmem:[%s186 + $0x7b8] sm:$0xf]
        %v509 = vld [vmem:[%s186 + $0x7bc] sm:$0xff]
        %v510 = vld [vmem:[%s186 + $0x7c4] sm:$0xff]
        %v511 = vld [vmem:[%s186 + $0x7cc] sm:$0xff]
        %v512 = vld [vmem:[%s186 + $0x7d4] sm:$0xff]
        %v513 = vld [vmem:[%s186 + $0x7dc] sm:$0xf]
        %v514 = vld [vmem:[%s186 + $0x7e0] sm:$0xff]
        %v515 = vld [vmem:[%s186 + $0x7e8] sm:$0xff]
        %v516 = vld [vmem:[%s186 + $0x7f0] sm:$0xff]
        %v517 = vld [vmem:[%s186 + $0x7f8] sm:$0xff]
        %v518 = vld [vmem:[%s186 + $0x800] sm:$0xf]
        %v519 = vld [vmem:[%s186 + $0x804] sm:$0xff]
        %v520 = vld [vmem:[%s186 + $0x80c] sm:$0xff]
        %v521 = vld [vmem:[%s186 + $0x814] sm:$0xff]
        %v522 = vld [vmem:[%s186 + $0x81c] sm:$0xff]
        %v523 = vld [vmem:[%s186 + $0x824] sm:$0xf]
        %v524 = vld [vmem:[%s186 + $0x828] sm:$0xff]
        %v525 = vld [vmem:[%s186 + $0x830] sm:$0xff]
        %v526 = vld [vmem:[%s186 + $0x838] sm:$0xff]
        %v527 = vld [vmem:[%s186 + $0x840] sm:$0xff]
        %v528 = vld [vmem:[%s186 + $0x848] sm:$0xf]
        %v529 = vld [vmem:[%s186 + $0x84c] sm:$0xff]
        %v530 = vld [vmem:[%s186 + $0x854] sm:$0xff]
        %v531 = vld [vmem:[%s186 + $0x85c] sm:$0xff]
        %v532 = vld [vmem:[%s186 + $0x864] sm:$0xff]
        %v533 = vld [vmem:[%s186 + $0x86c] sm:$0xf]
        %v534 = vld [vmem:[%s186 + $0x870] sm:$0xff]
        %v535 = vld [vmem:[%s186 + $0x878] sm:$0xff]
        %v536 = vld [vmem:[%s186 + $0x880] sm:$0xff]
        %v537 = vld [vmem:[%s186 + $0x888] sm:$0xff]
        %v538 = vld [vmem:[%s186 + $0x890] sm:$0xf]
        %v539 = vld [vmem:[%s186 + $0x894] sm:$0xff]
        %v540 = vld [vmem:[%s186 + $0x89c] sm:$0xff]
        %v541 = vld [vmem:[%s186 + $0x8a4] sm:$0xff]
        %v542 = vld [vmem:[%s186 + $0x8ac] sm:$0xff]
        %v543 = vld [vmem:[%s186 + $0x8b4] sm:$0xf]
        %v544 = vld [vmem:[%s186 + $0x8b8] sm:$0xff]
        %v545 = vld [vmem:[%s186 + $0x8c0] sm:$0xff]
        %v546 = vld [vmem:[%s186 + $0x8c8] sm:$0xff]
        %v547 = vld [vmem:[%s186 + $0x8d0] sm:$0xff]
        %v548 = vld [vmem:[%s186 + $0x8d8] sm:$0xf]
        %v549 = vld [vmem:[%s186 + $0x8dc] sm:$0xff]
        %v550 = vld [vmem:[%s186 + $0x8e4] sm:$0xff]
        %v551 = vld [vmem:[%s186 + $0x8ec] sm:$0xff]
        %v552 = vld [vmem:[%s186 + $0x8f4] sm:$0xff]
        %v553 = vld [vmem:[%s186 + $0x8fc] sm:$0xf]
        %v554 = vld [vmem:[%s186 + $0x900] sm:$0xff]
        %v555 = vld [vmem:[%s186 + $0x908] sm:$0xff]
        %v556 = vld [vmem:[%s186 + $0x910] sm:$0xff]
        %v557 = vld [vmem:[%s186 + $0x918] sm:$0xff]
        %v558 = vld [vmem:[%s186 + $0x920] sm:$0xf]
        %v559 = vld [vmem:[%s186 + $0x924] sm:$0xff]
        %v560 = vld [vmem:[%s186 + $0x92c] sm:$0xff]
        %v561 = vld [vmem:[%s186 + $0x934] sm:$0xff]
        %v562 = vld [vmem:[%s186 + $0x93c] sm:$0xff]
        %v563 = vld [vmem:[%s186 + $0x944] sm:$0xf]
        %v564 = vld [vmem:[%s186 + $0x948] sm:$0xff]
        %v565 = vld [vmem:[%s186 + $0x950] sm:$0xff]
        %v566 = vld [vmem:[%s186 + $0x958] sm:$0xff]
        %v567 = vld [vmem:[%s186 + $0x960] sm:$0xff]
        %v568 = vld [vmem:[%s186 + $0x968] sm:$0xf]
        %v569 = vld [vmem:[%s186 + $0x96c] sm:$0xff]
        %v570 = vld [vmem:[%s186 + $0x974] sm:$0xff]
        %v571 = vld [vmem:[%s186 + $0x97c] sm:$0xff]
        %v572 = vld [vmem:[%s186 + $0x984] sm:$0xff]
        %v573 = vld [vmem:[%s186 + $0x98c] sm:$0xf]
        %v574 = vld [vmem:[%s186 + $0x990] sm:$0xff]
        %v575 = vld [vmem:[%s186 + $0x998] sm:$0xff]
        %v576 = vld [vmem:[%s186 + $0x9a0] sm:$0xff]
        %v577 = vld [vmem:[%s186 + $0x9a8] sm:$0xff]
        %v578 = vld [vmem:[%s186 + $0x9b0] sm:$0xf]
        %v579 = vld [vmem:[%s186 + $0x9b4] sm:$0xff]
        %v580 = vld [vmem:[%s186 + $0x9bc] sm:$0xff]
        %v581 = vld [vmem:[%s186 + $0x9c4] sm:$0xff]
        %v582 = vld [vmem:[%s186 + $0x9cc] sm:$0xff]
        %v583 = vld [vmem:[%s186 + $0x9d4] sm:$0xf]
        %v584 = vld [vmem:[%s186 + $0x9d8] sm:$0xff]
        %v585 = vld [vmem:[%s186 + $0x9e0] sm:$0xff]
        %v586 = vld [vmem:[%s186 + $0x9e8] sm:$0xff]
        %v587 = vld [vmem:[%s186 + $0x9f0] sm:$0xff]
        %v588 = vld [vmem:[%s186 + $0x9f8] sm:$0xf]
        %v589 = vld [vmem:[%s186 + $0x9fc] sm:$0xff]
        %v590 = vld [vmem:[%s186 + $0xa04] sm:$0xff]
        %v591 = vld [vmem:[%s186 + $0xa0c] sm:$0xff]
        %v592 = vld [vmem:[%s186 + $0xa14] sm:$0xff]
        %v593 = vld [vmem:[%s186 + $0xa1c] sm:$0xf]
        %v594 = vld [vmem:[%s186 + $0xa20] sm:$0xff]
        %v595 = vld [vmem:[%s186 + $0xa28] sm:$0xff]
        %v596 = vld [vmem:[%s186 + $0xa30] sm:$0xff]
        %v597 = vld [vmem:[%s186 + $0xa38] sm:$0xff]
        %v598 = vld [vmem:[%s186 + $0xa40] sm:$0xf]
        %v599 = vld [vmem:[%s186 + $0xa44] sm:$0xff]
        %v600 = vld [vmem:[%s186 + $0xa4c] sm:$0xff]
        %v601 = vld [vmem:[%s186 + $0xa54] sm:$0xff]
        %v602 = vld [vmem:[%s186 + $0xa5c] sm:$0xff]
        %v603 = vld [vmem:[%s186 + $0xa64] sm:$0xf]
        %v604 = vld [vmem:[%s186 + $0xa68] sm:$0xff]
        %v605 = vld [vmem:[%s186 + $0xa70] sm:$0xff]
        %v606 = vld [vmem:[%s186 + $0xa78] sm:$0xff]
        %v607 = vld [vmem:[%s186 + $0xa80] sm:$0xff]
        %v608 = vld [vmem:[%s186 + $0xa88] sm:$0xf]
        %v609 = vld [vmem:[%s186 + $0xa8c] sm:$0xff]
        %v610 = vld [vmem:[%s186 + $0xa94] sm:$0xff]
        %v611 = vld [vmem:[%s186 + $0xa9c] sm:$0xff]
        %v612 = vld [vmem:[%s186 + $0xaa4] sm:$0xff]
        %v613 = vld [vmem:[%s186 + $0xaac] sm:$0xf]
        %v614 = vld [vmem:[%s186 + $0xab0] sm:$0xff]
        %v615 = vld [vmem:[%s186 + $0xab8] sm:$0xff]
        %v616 = vld [vmem:[%s186 + $0xac0] sm:$0xff]
        %v617 = vld [vmem:[%s186 + $0xac8] sm:$0xff]
        %v618 = vld [vmem:[%s186 + $0xad0] sm:$0xf]
        %v619 = vld [vmem:[%s186 + $0xad4] sm:$0xff]
        %v620 = vld [vmem:[%s186 + $0xadc] sm:$0xff]
        %v621 = vld [vmem:[%s186 + $0xae4] sm:$0xff]
        %v622 = vld [vmem:[%s186 + $0xaec] sm:$0xff]
        %v623 = vld [vmem:[%s186 + $0xaf4] sm:$0xf]
        %v624 = vld [vmem:[%s186 + $0xaf8] sm:$0xff]
        %v625 = vld [vmem:[%s186 + $0xb00] sm:$0xff]
        %v626 = vld [vmem:[%s186 + $0xb08] sm:$0xff]
        %v627 = vld [vmem:[%s186 + $0xb10] sm:$0xff]
        %v628 = vld [vmem:[%s186 + $0xb18] sm:$0xf]
        %v629 = vld [vmem:[%s186 + $0xb1c] sm:$0xff]
        %v630 = vld [vmem:[%s186 + $0xb24] sm:$0xff]
        %v631 = vld [vmem:[%s186 + $0xb2c] sm:$0xff]
        %v632 = vld [vmem:[%s186 + $0xb34] sm:$0xff]
        %v633 = vld [vmem:[%s186 + $0xb3c] sm:$0xf]
        %v634 = vld [vmem:[%s186 + $0xb40] sm:$0xff]
        %v635 = vld [vmem:[%s186 + $0xb48] sm:$0xff]
        %v636 = vld [vmem:[%s186 + $0xb50] sm:$0xff]
        %v637 = vld [vmem:[%s186 + $0xb58] sm:$0xff]
        %v638 = vld [vmem:[%s186 + $0xb60] sm:$0xf]
        %v639 = vld [vmem:[%s186 + $0xb64] sm:$0xff]
        %v640 = vld [vmem:[%s186 + $0xb6c] sm:$0xff]
        %v641 = vld [vmem:[%s186 + $0xb74] sm:$0xff]
        %v642 = vld [vmem:[%s186 + $0xb7c] sm:$0xff]
        %v643 = vld [vmem:[%s186 + $0xb84] sm:$0xf]
        %v644 = vld [vmem:[%s186 + $0xb88] sm:$0xff]
        %v645 = vld [vmem:[%s186 + $0xb90] sm:$0xff]
        %v646 = vld [vmem:[%s186 + $0xb98] sm:$0xff]
        %v647 = vld [vmem:[%s186 + $0xba0] sm:$0xff]
        %v648 = vld [vmem:[%s186 + $0xba8] sm:$0xf]
        %v649 = vld [vmem:[%s186 + $0xbac] sm:$0xff]
        %v650 = vld [vmem:[%s186 + $0xbb4] sm:$0xff]
        %v651 = vld [vmem:[%s186 + $0xbbc] sm:$0xff]
        %v652 = vld [vmem:[%s186 + $0xbc4] sm:$0xff]
        %v653 = vld [vmem:[%s186 + $0xbcc] sm:$0xf]
        %v654 = vld [vmem:[%s186 + $0xbd0] sm:$0xff]
        %v655 = vld [vmem:[%s186 + $0xbd8] sm:$0xff]
        %v656 = vld [vmem:[%s186 + $0xbe0] sm:$0xff]
        %v657 = vld [vmem:[%s186 + $0xbe8] sm:$0xff]
        %v658 = vld [vmem:[%s186 + $0xbf0] sm:$0xf]
        %v659 = vld [vmem:[%s186 + $0xbf4] sm:$0xff]
        %v660 = vld [vmem:[%s186 + $0xbfc] sm:$0xff]
        %v661 = vld [vmem:[%s186 + $0xc04] sm:$0xff]
        %v662 = vld [vmem:[%s186 + $0xc0c] sm:$0xff]
        %v663 = vld [vmem:[%s186 + $0xc14] sm:$0xf]
        %v664 = vld [vmem:[%s186 + $0xc18] sm:$0xff]
        %v665 = vld [vmem:[%s186 + $0xc20] sm:$0xff]
        %v666 = vld [vmem:[%s186 + $0xc28] sm:$0xff]
        %v667 = vld [vmem:[%s186 + $0xc30] sm:$0xff]
        %v668 = vld [vmem:[%s186 + $0xc38] sm:$0xf]
        %v669 = vld [vmem:[%s186 + $0xc3c] sm:$0xff]
        %v670 = vld [vmem:[%s186 + $0xc44] sm:$0xff]
        %v671 = vld [vmem:[%s186 + $0xc4c] sm:$0xff]
        %v672 = vld [vmem:[%s186 + $0xc54] sm:$0xff]
        %v673 = vld [vmem:[%s186 + $0xc5c] sm:$0xf]
        %v674 = vld [vmem:[%s186 + $0xc60] sm:$0xff]
        %v675 = vld [vmem:[%s186 + $0xc68] sm:$0xff]
        %v676 = vld [vmem:[%s186 + $0xc70] sm:$0xff]
        %v677 = vld [vmem:[%s186 + $0xc78] sm:$0xff]
        %v678 = vld [vmem:[%s186 + $0xc80] sm:$0xf]
        %v679 = vld [vmem:[%s186 + $0xc84] sm:$0xff]
        %v680 = vld [vmem:[%s186 + $0xc8c] sm:$0xff]
        %v681 = vld [vmem:[%s186 + $0xc94] sm:$0xff]
        %v682 = vld [vmem:[%s186 + $0xc9c] sm:$0xff]
        %v683 = vld [vmem:[%s186 + $0xca4] sm:$0xf]
        %v684 = vld [vmem:[%s186 + $0xca8] sm:$0xff]
        %v685 = vld [vmem:[%s186 + $0xcb0] sm:$0xff]
        %v686 = vld [vmem:[%s186 + $0xcb8] sm:$0xff]
        %v687 = vld [vmem:[%s186 + $0xcc0] sm:$0xff]
        %v688 = vld [vmem:[%s186 + $0xcc8] sm:$0xf]
        %v689 = vld [vmem:[%s186 + $0xccc] sm:$0xff]
        %v690 = vld [vmem:[%s186 + $0xcd4] sm:$0xff]
        %v691 = vld [vmem:[%s186 + $0xcdc] sm:$0xff]
        %v692 = vld [vmem:[%s186 + $0xce4] sm:$0xff]
        %v693 = vld [vmem:[%s186 + $0xcec] sm:$0xf]
        %v694 = vld [vmem:[%s186 + $0xcf0] sm:$0xff]
        %v695 = vld [vmem:[%s186 + $0xcf8] sm:$0xff]
        %v696 = vld [vmem:[%s186 + $0xd00] sm:$0xff]
        %v697 = vld [vmem:[%s186 + $0xd08] sm:$0xff]
        %v698 = vld [vmem:[%s186 + $0xd10] sm:$0xf]
        %v699 = vld [vmem:[%s186 + $0xd14] sm:$0xff]
        %v700 = vld [vmem:[%s186 + $0xd1c] sm:$0xff]
        %v701 = vld [vmem:[%s186 + $0xd24] sm:$0xff]
        %v702 = vld [vmem:[%s186 + $0xd2c] sm:$0xff]
        %v703 = vld [vmem:[%s186 + $0xd34] sm:$0xf]
        %v704 = vld [vmem:[%s186 + $0xd38] sm:$0xff]
        %v705 = vld [vmem:[%s186 + $0xd40] sm:$0xff]
        %v706 = vld [vmem:[%s186 + $0xd48] sm:$0xff]
        %v707 = vld [vmem:[%s186 + $0xd50] sm:$0xff]
        %v708 = vld [vmem:[%s186 + $0xd58] sm:$0xf]
        %v709 = vld [vmem:[%s186 + $0xd5c] sm:$0xff]
        %v710 = vld [vmem:[%s186 + $0xd64] sm:$0xff]
        %v711 = vld [vmem:[%s186 + $0xd6c] sm:$0xff]
        %v712 = vld [vmem:[%s186 + $0xd74] sm:$0xff]
        %v713 = vld [vmem:[%s186 + $0xd7c] sm:$0xf]
        %v717 = vunpack.c.l.b16 %v231
        %v718 = vunpack.c.h.b16 %v231
        %v719 = vunpack.c.l.b16 %v232
        %v720 = vunpack.c.h.b16 %v232
        %v721 = vunpack.c.l.b16 %v233
        %v722 = vunpack.c.h.b16 %v233
        %v723 = vpack.c.b16 %v717, %v717
        %v724 = vpack.c.b16 %v718, %v718
        %v725 = vpack.c.b16 %v719, %v719
        %v726 = vpack.c.b16 %v720, %v720
        %v727 = vpack.c.b16 %v721, %v721
        %v728 = vpack.c.b16 %v722, %v722
        %v1215 = vunpack.c.l.b16 %v234
        %v1216 = vunpack.c.h.b16 %v234
        %v1217 = vunpack.c.l.b16 %v235
        %v1218 = vunpack.c.h.b16 %v235
        %v1219 = vunpack.c.l.b16 %v236
        %v1220 = vunpack.c.h.b16 %v236
        %v1221 = vunpack.c.l.b16 %v237
        %v1222 = vunpack.c.h.b16 %v237
        %v1223 = vunpack.c.l.b16 %v238
        %v1224 = vunpack.c.l.b16 %v239
        %v1225 = vunpack.c.h.b16 %v239
        %v1226 = vunpack.c.l.b16 %v240
        %v1227 = vunpack.c.h.b16 %v240
        %v1228 = vunpack.c.l.b16 %v241
        %v1229 = vunpack.c.h.b16 %v241
        %v1230 = vunpack.c.l.b16 %v242
        %v1231 = vunpack.c.h.b16 %v242
        %v1232 = vunpack.c.l.b16 %v243
        %v1233 = vunpack.c.l.b16 %v244
        %v1234 = vunpack.c.h.b16 %v244
        %v1235 = vunpack.c.l.b16 %v245
        %v1236 = vunpack.c.h.b16 %v245
        %v1237 = vunpack.c.l.b16 %v246
        %v1238 = vunpack.c.h.b16 %v246
        %v1239 = vunpack.c.l.b16 %v247
        %v1240 = vunpack.c.h.b16 %v247
        %v1241 = vunpack.c.l.b16 %v248
        %v1242 = vunpack.c.l.b16 %v249
        %v1243 = vunpack.c.h.b16 %v249
        %v1244 = vunpack.c.l.b16 %v250
        %v1245 = vunpack.c.h.b16 %v250
        %v1246 = vunpack.c.l.b16 %v251
        %v1247 = vunpack.c.h.b16 %v251
        %v1248 = vunpack.c.l.b16 %v252
        %v1249 = vunpack.c.h.b16 %v252
        %v1250 = vunpack.c.l.b16 %v253
        %v1251 = vunpack.c.l.b16 %v254
        %v1252 = vunpack.c.h.b16 %v254
        %v1253 = vunpack.c.l.b16 %v255
        %v1254 = vunpack.c.h.b16 %v255
        %v1255 = vunpack.c.l.b16 %v256
        %v1256 = vunpack.c.h.b16 %v256
        %v1257 = vunpack.c.l.b16 %v257
        %v1258 = vunpack.c.h.b16 %v257
        %v1259 = vunpack.c.l.b16 %v258
        %v1260 = vunpack.c.l.b16 %v259
        %v1261 = vunpack.c.h.b16 %v259
        %v1262 = vunpack.c.l.b16 %v260
        %v1263 = vunpack.c.h.b16 %v260
        %v1264 = vunpack.c.l.b16 %v261
        %v1265 = vunpack.c.h.b16 %v261
        %v1266 = vunpack.c.l.b16 %v262
        %v1267 = vunpack.c.h.b16 %v262
        %v1268 = vunpack.c.l.b16 %v263
        %v1269 = vunpack.c.l.b16 %v264
        %v1270 = vunpack.c.h.b16 %v264
        %v1271 = vunpack.c.l.b16 %v265
        %v1272 = vunpack.c.h.b16 %v265
        %v1273 = vunpack.c.l.b16 %v266
        %v1274 = vunpack.c.h.b16 %v266
        %v1275 = vunpack.c.l.b16 %v267
        %v1276 = vunpack.c.h.b16 %v267
        %v1277 = vunpack.c.l.b16 %v268
        %v1278 = vunpack.c.l.b16 %v269
        %v1279 = vunpack.c.h.b16 %v269
        %v1280 = vunpack.c.l.b16 %v270
        %v1281 = vunpack.c.h.b16 %v270
        %v1282 = vunpack.c.l.b16 %v271
        %v1283 = vunpack.c.h.b16 %v271
        %v1284 = vunpack.c.l.b16 %v272
        %v1285 = vunpack.c.h.b16 %v272
        %v1286 = vunpack.c.l.b16 %v273
        %v1287 = vunpack.c.l.b16 %v274
        %v1288 = vunpack.c.h.b16 %v274
        %v1289 = vunpack.c.l.b16 %v275
        %v1290 = vunpack.c.h.b16 %v275
        %v1291 = vunpack.c.l.b16 %v276
        %v1292 = vunpack.c.h.b16 %v276
        %v1293 = vunpack.c.l.b16 %v277
        %v1294 = vunpack.c.h.b16 %v277
        %v1295 = vunpack.c.l.b16 %v278
        %v1296 = vunpack.c.l.b16 %v279
        %v1297 = vunpack.c.h.b16 %v279
        %v1298 = vunpack.c.l.b16 %v280
        %v1299 = vunpack.c.h.b16 %v280
        %v1300 = vunpack.c.l.b16 %v281
        %v1301 = vunpack.c.h.b16 %v281
        %v1302 = vunpack.c.l.b16 %v282
        %v1303 = vunpack.c.h.b16 %v282
        %v1304 = vunpack.c.l.b16 %v283
        %v1305 = vunpack.c.l.b16 %v284
        %v1306 = vunpack.c.h.b16 %v284
        %v1307 = vunpack.c.l.b16 %v285
        %v1308 = vunpack.c.h.b16 %v285
        %v1309 = vunpack.c.l.b16 %v286
        %v1310 = vunpack.c.h.b16 %v286
        %v1311 = vunpack.c.l.b16 %v287
        %v1312 = vunpack.c.h.b16 %v287
        %v1313 = vunpack.c.l.b16 %v288
        %v1314 = vunpack.c.l.b16 %v289
        %v1315 = vunpack.c.h.b16 %v289
        %v1316 = vunpack.c.l.b16 %v290
        %v1317 = vunpack.c.h.b16 %v290
        %v1318 = vunpack.c.l.b16 %v291
        %v1319 = vunpack.c.h.b16 %v291
        %v1320 = vunpack.c.l.b16 %v292
        %v1321 = vunpack.c.h.b16 %v292
        %v1322 = vunpack.c.l.b16 %v293
        %v1323 = vunpack.c.l.b16 %v294
        %v1324 = vunpack.c.h.b16 %v294
        %v1325 = vunpack.c.l.b16 %v295
        %v1326 = vunpack.c.h.b16 %v295
        %v1327 = vunpack.c.l.b16 %v296
        %v1328 = vunpack.c.h.b16 %v296
        %v1329 = vunpack.c.l.b16 %v297
        %v1330 = vunpack.c.h.b16 %v297
        %v1331 = vunpack.c.l.b16 %v298
        %v1332 = vunpack.c.l.b16 %v299
        %v1333 = vunpack.c.h.b16 %v299
        %v1334 = vunpack.c.l.b16 %v300
        %v1335 = vunpack.c.h.b16 %v300
        %v1336 = vunpack.c.l.b16 %v301
        %v1337 = vunpack.c.h.b16 %v301
        %v1338 = vunpack.c.l.b16 %v302
        %v1339 = vunpack.c.h.b16 %v302
        %v1340 = vunpack.c.l.b16 %v303
        %v1341 = vunpack.c.l.b16 %v304
        %v1342 = vunpack.c.h.b16 %v304
        %v1343 = vunpack.c.l.b16 %v305
        %v1344 = vunpack.c.h.b16 %v305
        %v1345 = vunpack.c.l.b16 %v306
        %v1346 = vunpack.c.h.b16 %v306
        %v1347 = vunpack.c.l.b16 %v307
        %v1348 = vunpack.c.h.b16 %v307
        %v1349 = vunpack.c.l.b16 %v308
        %v1350 = vunpack.c.l.b16 %v309
        %v1351 = vunpack.c.h.b16 %v309
        %v1352 = vunpack.c.l.b16 %v310
        %v1353 = vunpack.c.h.b16 %v310
        %v1354 = vunpack.c.l.b16 %v311
        %v1355 = vunpack.c.h.b16 %v311
        %v1356 = vunpack.c.l.b16 %v312
        %v1357 = vunpack.c.h.b16 %v312
        %v1358 = vunpack.c.l.b16 %v313
        %v1359 = vunpack.c.l.b16 %v314
        %v1360 = vunpack.c.h.b16 %v314
        %v1361 = vunpack.c.l.b16 %v315
        %v1362 = vunpack.c.h.b16 %v315
        %v1363 = vunpack.c.l.b16 %v316
        %v1364 = vunpack.c.h.b16 %v316
        %v1365 = vunpack.c.l.b16 %v317
        %v1366 = vunpack.c.h.b16 %v317
        %v1367 = vunpack.c.l.b16 %v318
        %v1368 = vunpack.c.l.b16 %v319
        %v1369 = vunpack.c.h.b16 %v319
        %v1370 = vunpack.c.l.b16 %v320
        %v1371 = vunpack.c.h.b16 %v320
        %v1372 = vunpack.c.l.b16 %v321
        %v1373 = vunpack.c.h.b16 %v321
        %v1374 = vunpack.c.l.b16 %v322
        %v1375 = vunpack.c.h.b16 %v322
        %v1376 = vunpack.c.l.b16 %v323
        %v1377 = vunpack.c.l.b16 %v324
        %v1378 = vunpack.c.h.b16 %v324
        %v1379 = vunpack.c.l.b16 %v325
        %v1380 = vunpack.c.h.b16 %v325
        %v1381 = vunpack.c.l.b16 %v326
        %v1382 = vunpack.c.h.b16 %v326
        %v1383 = vunpack.c.l.b16 %v327
        %v1384 = vunpack.c.h.b16 %v327
        %v1385 = vunpack.c.l.b16 %v328
        %v1386 = vunpack.c.l.b16 %v329
        %v1387 = vunpack.c.h.b16 %v329
        %v1388 = vunpack.c.l.b16 %v330
        %v1389 = vunpack.c.h.b16 %v330
        %v1390 = vunpack.c.l.b16 %v331
        %v1391 = vunpack.c.h.b16 %v331
        %v1392 = vunpack.c.l.b16 %v332
        %v1393 = vunpack.c.h.b16 %v332
        %v1394 = vunpack.c.l.b16 %v333
        %v1395 = vunpack.c.l.b16 %v334
        %v1396 = vunpack.c.h.b16 %v334
        %v1397 = vunpack.c.l.b16 %v335
        %v1398 = vunpack.c.h.b16 %v335
        %v1399 = vunpack.c.l.b16 %v336
        %v1400 = vunpack.c.h.b16 %v336
        %v1401 = vunpack.c.l.b16 %v337
        %v1402 = vunpack.c.h.b16 %v337
        %v1403 = vunpack.c.l.b16 %v338
        %v1404 = vunpack.c.l.b16 %v339
        %v1405 = vunpack.c.h.b16 %v339
        %v1406 = vunpack.c.l.b16 %v340
        %v1407 = vunpack.c.h.b16 %v340
        %v1408 = vunpack.c.l.b16 %v341
        %v1409 = vunpack.c.h.b16 %v341
        %v1410 = vunpack.c.l.b16 %v342
        %v1411 = vunpack.c.h.b16 %v342
        %v1412 = vunpack.c.l.b16 %v343
        %v1413 = vunpack.c.l.b16 %v344
        %v1414 = vunpack.c.h.b16 %v344
        %v1415 = vunpack.c.l.b16 %v345
        %v1416 = vunpack.c.h.b16 %v345
        %v1417 = vunpack.c.l.b16 %v346
        %v1418 = vunpack.c.h.b16 %v346
        %v1419 = vunpack.c.l.b16 %v347
        %v1420 = vunpack.c.h.b16 %v347
        %v1421 = vunpack.c.l.b16 %v348
        %v1422 = vunpack.c.l.b16 %v349
        %v1423 = vunpack.c.h.b16 %v349
        %v1424 = vunpack.c.l.b16 %v350
        %v1425 = vunpack.c.h.b16 %v350
        %v1426 = vunpack.c.l.b16 %v351
        %v1427 = vunpack.c.h.b16 %v351
        %v1428 = vunpack.c.l.b16 %v352
        %v1429 = vunpack.c.h.b16 %v352
        %v1430 = vunpack.c.l.b16 %v353
        %v1431 = vunpack.c.l.b16 %v354
        %v1432 = vunpack.c.h.b16 %v354
        %v1433 = vunpack.c.l.b16 %v355
        %v1434 = vunpack.c.h.b16 %v355
        %v1435 = vunpack.c.l.b16 %v356
        %v1436 = vunpack.c.h.b16 %v356
        %v1437 = vunpack.c.l.b16 %v357
        %v1438 = vunpack.c.h.b16 %v357
        %v1439 = vunpack.c.l.b16 %v358
        %v1440 = vunpack.c.l.b16 %v359
        %v1441 = vunpack.c.h.b16 %v359
        %v1442 = vunpack.c.l.b16 %v360
        %v1443 = vunpack.c.h.b16 %v360
        %v1444 = vunpack.c.l.b16 %v361
        %v1445 = vunpack.c.h.b16 %v361
        %v1446 = vunpack.c.l.b16 %v362
        %v1447 = vunpack.c.h.b16 %v362
        %v1448 = vunpack.c.l.b16 %v363
        %v1449 = vunpack.c.l.b16 %v364
        %v1450 = vunpack.c.h.b16 %v364
        %v1451 = vunpack.c.l.b16 %v365
        %v1452 = vunpack.c.h.b16 %v365
        %v1453 = vunpack.c.l.b16 %v366
        %v1454 = vunpack.c.h.b16 %v366
        %v1455 = vunpack.c.l.b16 %v367
        %v1456 = vunpack.c.h.b16 %v367
        %v1457 = vunpack.c.l.b16 %v368
        %v1458 = vunpack.c.l.b16 %v369
        %v1459 = vunpack.c.h.b16 %v369
        %v1460 = vunpack.c.l.b16 %v370
        %v1461 = vunpack.c.h.b16 %v370
        %v1462 = vunpack.c.l.b16 %v371
        %v1463 = vunpack.c.h.b16 %v371
        %v1464 = vunpack.c.l.b16 %v372
        %v1465 = vunpack.c.h.b16 %v372
        %v1466 = vunpack.c.l.b16 %v373
        %v1467 = vunpack.c.l.b16 %v374
        %v1468 = vunpack.c.h.b16 %v374
        %v1469 = vunpack.c.l.b16 %v375
        %v1470 = vunpack.c.h.b16 %v375
        %v1471 = vunpack.c.l.b16 %v376
        %v1472 = vunpack.c.h.b16 %v376
        %v1473 = vunpack.c.l.b16 %v377
        %v1474 = vunpack.c.h.b16 %v377
        %v1475 = vunpack.c.l.b16 %v378
        %v1476 = vunpack.c.l.b16 %v379
        %v1477 = vunpack.c.h.b16 %v379
        %v1478 = vunpack.c.l.b16 %v380
        %v1479 = vunpack.c.h.b16 %v380
        %v1480 = vunpack.c.l.b16 %v381
        %v1481 = vunpack.c.h.b16 %v381
        %v1482 = vunpack.c.l.b16 %v382
        %v1483 = vunpack.c.h.b16 %v382
        %v1484 = vunpack.c.l.b16 %v383
        %v1485 = vunpack.c.l.b16 %v384
        %v1486 = vunpack.c.h.b16 %v384
        %v1487 = vunpack.c.l.b16 %v385
        %v1488 = vunpack.c.h.b16 %v385
        %v1489 = vunpack.c.l.b16 %v386
        %v1490 = vunpack.c.h.b16 %v386
        %v1491 = vunpack.c.l.b16 %v387
        %v1492 = vunpack.c.h.b16 %v387
        %v1493 = vunpack.c.l.b16 %v388
        %v1494 = vunpack.c.l.b16 %v389
        %v1495 = vunpack.c.h.b16 %v389
        %v1496 = vunpack.c.l.b16 %v390
        %v1497 = vunpack.c.h.b16 %v390
        %v1498 = vunpack.c.l.b16 %v391
        %v1499 = vunpack.c.h.b16 %v391
        %v1500 = vunpack.c.l.b16 %v392
        %v1501 = vunpack.c.h.b16 %v392
        %v1502 = vunpack.c.l.b16 %v393
        %v1503 = vunpack.c.l.b16 %v394
        %v1504 = vunpack.c.h.b16 %v394
        %v1505 = vunpack.c.l.b16 %v395
        %v1506 = vunpack.c.h.b16 %v395
        %v1507 = vunpack.c.l.b16 %v396
        %v1508 = vunpack.c.h.b16 %v396
        %v1509 = vunpack.c.l.b16 %v397
        %v1510 = vunpack.c.h.b16 %v397
        %v1511 = vunpack.c.l.b16 %v398
        %v1512 = vunpack.c.l.b16 %v399
        %v1513 = vunpack.c.h.b16 %v399
        %v1514 = vunpack.c.l.b16 %v400
        %v1515 = vunpack.c.h.b16 %v400
        %v1516 = vunpack.c.l.b16 %v401
        %v1517 = vunpack.c.h.b16 %v401
        %v1518 = vunpack.c.l.b16 %v402
        %v1519 = vunpack.c.h.b16 %v402
        %v1520 = vunpack.c.l.b16 %v403
        %v1521 = vunpack.c.l.b16 %v404
        %v1522 = vunpack.c.h.b16 %v404
        %v1523 = vunpack.c.l.b16 %v405
        %v1524 = vunpack.c.h.b16 %v405
        %v1525 = vunpack.c.l.b16 %v406
        %v1526 = vunpack.c.h.b16 %v406
        %v1527 = vunpack.c.l.b16 %v407
        %v1528 = vunpack.c.h.b16 %v407
        %v1529 = vunpack.c.l.b16 %v408
        %v1530 = vunpack.c.l.b16 %v409
        %v1531 = vunpack.c.h.b16 %v409
        %v1532 = vunpack.c.l.b16 %v410
        %v1533 = vunpack.c.h.b16 %v410
        %v1534 = vunpack.c.l.b16 %v411
        %v1535 = vunpack.c.h.b16 %v411
        %v1536 = vunpack.c.l.b16 %v412
        %v1537 = vunpack.c.h.b16 %v412
        %v1538 = vunpack.c.l.b16 %v413
        %v1539 = vunpack.c.l.b16 %v414
        %v1540 = vunpack.c.h.b16 %v414
        %v1541 = vunpack.c.l.b16 %v415
        %v1542 = vunpack.c.h.b16 %v415
        %v1543 = vunpack.c.l.b16 %v416
        %v1544 = vunpack.c.h.b16 %v416
        %v1545 = vunpack.c.l.b16 %v417
        %v1546 = vunpack.c.h.b16 %v417
        %v1547 = vunpack.c.l.b16 %v418
        %v1548 = vunpack.c.l.b16 %v419
        %v1549 = vunpack.c.h.b16 %v419
        %v1550 = vunpack.c.l.b16 %v420
        %v1551 = vunpack.c.h.b16 %v420
        %v1552 = vunpack.c.l.b16 %v421
        %v1553 = vunpack.c.h.b16 %v421
        %v1554 = vunpack.c.l.b16 %v422
        %v1555 = vunpack.c.h.b16 %v422
        %v1556 = vunpack.c.l.b16 %v423
        %v1557 = vunpack.c.l.b16 %v424
        %v1558 = vunpack.c.h.b16 %v424
        %v1559 = vunpack.c.l.b16 %v425
        %v1560 = vunpack.c.h.b16 %v425
        %v1561 = vunpack.c.l.b16 %v426
        %v1562 = vunpack.c.h.b16 %v426
        %v1563 = vunpack.c.l.b16 %v427
        %v1564 = vunpack.c.h.b16 %v427
        %v1565 = vunpack.c.l.b16 %v428
        %v1566 = vunpack.c.l.b16 %v429
        %v1567 = vunpack.c.h.b16 %v429
        %v1568 = vunpack.c.l.b16 %v430
        %v1569 = vunpack.c.h.b16 %v430
        %v1570 = vunpack.c.l.b16 %v431
        %v1571 = vunpack.c.h.b16 %v431
        %v1572 = vunpack.c.l.b16 %v432
        %v1573 = vunpack.c.h.b16 %v432
        %v1574 = vunpack.c.l.b16 %v433
        %v1575 = vunpack.c.l.b16 %v434
        %v1576 = vunpack.c.h.b16 %v434
        %v1577 = vunpack.c.l.b16 %v435
        %v1578 = vunpack.c.h.b16 %v435
        %v1579 = vunpack.c.l.b16 %v436
        %v1580 = vunpack.c.h.b16 %v436
        %v1581 = vunpack.c.l.b16 %v437
        %v1582 = vunpack.c.h.b16 %v437
        %v1583 = vunpack.c.l.b16 %v438
        %v1584 = vunpack.c.l.b16 %v439
        %v1585 = vunpack.c.h.b16 %v439
        %v1586 = vunpack.c.l.b16 %v440
        %v1587 = vunpack.c.h.b16 %v440
        %v1588 = vunpack.c.l.b16 %v441
        %v1589 = vunpack.c.h.b16 %v441
        %v1590 = vunpack.c.l.b16 %v442
        %v1591 = vunpack.c.h.b16 %v442
        %v1592 = vunpack.c.l.b16 %v443
        %v1593 = vunpack.c.l.b16 %v444
        %v1594 = vunpack.c.h.b16 %v444
        %v1595 = vunpack.c.l.b16 %v445
        %v1596 = vunpack.c.h.b16 %v445
        %v1597 = vunpack.c.l.b16 %v446
        %v1598 = vunpack.c.h.b16 %v446
        %v1599 = vunpack.c.l.b16 %v447
        %v1600 = vunpack.c.h.b16 %v447
        %v1601 = vunpack.c.l.b16 %v448
        %v1602 = vunpack.c.l.b16 %v449
        %v1603 = vunpack.c.h.b16 %v449
        %v1604 = vunpack.c.l.b16 %v450
        %v1605 = vunpack.c.h.b16 %v450
        %v1606 = vunpack.c.l.b16 %v451
        %v1607 = vunpack.c.h.b16 %v451
        %v1608 = vunpack.c.l.b16 %v452
        %v1609 = vunpack.c.h.b16 %v452
        %v1610 = vunpack.c.l.b16 %v453
        %v1611 = vunpack.c.l.b16 %v454
        %v1612 = vunpack.c.h.b16 %v454
        %v1613 = vunpack.c.l.b16 %v455
        %v1614 = vunpack.c.h.b16 %v455
        %v1615 = vunpack.c.l.b16 %v456
        %v1616 = vunpack.c.h.b16 %v456
        %v1617 = vunpack.c.l.b16 %v457
        %v1618 = vunpack.c.h.b16 %v457
        %v1619 = vunpack.c.l.b16 %v458
        %v1620 = vunpack.c.l.b16 %v459
        %v1621 = vunpack.c.h.b16 %v459
        %v1622 = vunpack.c.l.b16 %v460
        %v1623 = vunpack.c.h.b16 %v460
        %v1624 = vunpack.c.l.b16 %v461
        %v1625 = vunpack.c.h.b16 %v461
        %v1626 = vunpack.c.l.b16 %v462
        %v1627 = vunpack.c.h.b16 %v462
        %v1628 = vunpack.c.l.b16 %v463
        %v1629 = vunpack.c.l.b16 %v464
        %v1630 = vunpack.c.h.b16 %v464
        %v1631 = vunpack.c.l.b16 %v465
        %v1632 = vunpack.c.h.b16 %v465
        %v1633 = vunpack.c.l.b16 %v466
        %v1634 = vunpack.c.h.b16 %v466
        %v1635 = vunpack.c.l.b16 %v467
        %v1636 = vunpack.c.h.b16 %v467
        %v1637 = vunpack.c.l.b16 %v468
        %v1638 = vunpack.c.l.b16 %v469
        %v1639 = vunpack.c.h.b16 %v469
        %v1640 = vunpack.c.l.b16 %v470
        %v1641 = vunpack.c.h.b16 %v470
        %v1642 = vunpack.c.l.b16 %v471
        %v1643 = vunpack.c.h.b16 %v471
        %v1644 = vunpack.c.l.b16 %v472
        %v1645 = vunpack.c.h.b16 %v472
        %v1646 = vunpack.c.l.b16 %v473
        %v1647 = vunpack.c.l.b16 %v474
        %v1648 = vunpack.c.h.b16 %v474
        %v1649 = vunpack.c.l.b16 %v475
        %v1650 = vunpack.c.h.b16 %v475
        %v1651 = vunpack.c.l.b16 %v476
        %v1652 = vunpack.c.h.b16 %v476
        %v1653 = vunpack.c.l.b16 %v477
        %v1654 = vunpack.c.h.b16 %v477
        %v1655 = vunpack.c.l.b16 %v478
        %v1656 = vunpack.c.l.b16 %v479
        %v1657 = vunpack.c.h.b16 %v479
        %v1658 = vunpack.c.l.b16 %v480
        %v1659 = vunpack.c.h.b16 %v480
        %v1660 = vunpack.c.l.b16 %v481
        %v1661 = vunpack.c.h.b16 %v481
        %v1662 = vunpack.c.l.b16 %v482
        %v1663 = vunpack.c.h.b16 %v482
        %v1664 = vunpack.c.l.b16 %v483
        %v1665 = vunpack.c.l.b16 %v484
        %v1666 = vunpack.c.h.b16 %v484
        %v1667 = vunpack.c.l.b16 %v485
        %v1668 = vunpack.c.h.b16 %v485
        %v1669 = vunpack.c.l.b16 %v486
        %v1670 = vunpack.c.h.b16 %v486
        %v1671 = vunpack.c.l.b16 %v487
        %v1672 = vunpack.c.h.b16 %v487
        %v1673 = vunpack.c.l.b16 %v488
        %v1674 = vunpack.c.l.b16 %v489
        %v1675 = vunpack.c.h.b16 %v489
        %v1676 = vunpack.c.l.b16 %v490
        %v1677 = vunpack.c.h.b16 %v490
        %v1678 = vunpack.c.l.b16 %v491
        %v1679 = vunpack.c.h.b16 %v491
        %v1680 = vunpack.c.l.b16 %v492
        %v1681 = vunpack.c.h.b16 %v492
        %v1682 = vunpack.c.l.b16 %v493
        %v1683 = vunpack.c.l.b16 %v494
        %v1684 = vunpack.c.h.b16 %v494
        %v1685 = vunpack.c.l.b16 %v495
        %v1686 = vunpack.c.h.b16 %v495
        %v1687 = vunpack.c.l.b16 %v496
        %v1688 = vunpack.c.h.b16 %v496
        %v1689 = vunpack.c.l.b16 %v497
        %v1690 = vunpack.c.h.b16 %v497
        %v1691 = vunpack.c.l.b16 %v498
        %v1692 = vunpack.c.l.b16 %v499
        %v1693 = vunpack.c.h.b16 %v499
        %v1694 = vunpack.c.l.b16 %v500
        %v1695 = vunpack.c.h.b16 %v500
        %v1696 = vunpack.c.l.b16 %v501
        %v1697 = vunpack.c.h.b16 %v501
        %v1698 = vunpack.c.l.b16 %v502
        %v1699 = vunpack.c.h.b16 %v502
        %v1700 = vunpack.c.l.b16 %v503
        %v1701 = vunpack.c.l.b16 %v504
        %v1702 = vunpack.c.h.b16 %v504
        %v1703 = vunpack.c.l.b16 %v505
        %v1704 = vunpack.c.h.b16 %v505
        %v1705 = vunpack.c.l.b16 %v506
        %v1706 = vunpack.c.h.b16 %v506
        %v1707 = vunpack.c.l.b16 %v507
        %v1708 = vunpack.c.h.b16 %v507
        %v1709 = vunpack.c.l.b16 %v508
        %v1710 = vunpack.c.l.b16 %v509
        %v1711 = vunpack.c.h.b16 %v509
        %v1712 = vunpack.c.l.b16 %v510
        %v1713 = vunpack.c.h.b16 %v510
        %v1714 = vunpack.c.l.b16 %v511
        %v1715 = vunpack.c.h.b16 %v511
        %v1716 = vunpack.c.l.b16 %v512
        %v1717 = vunpack.c.h.b16 %v512
        %v1718 = vunpack.c.l.b16 %v513
        %v1719 = vunpack.c.l.b16 %v514
        %v1720 = vunpack.c.h.b16 %v514
        %v1721 = vunpack.c.l.b16 %v515
        %v1722 = vunpack.c.h.b16 %v515
        %v1723 = vunpack.c.l.b16 %v516
        %v1724 = vunpack.c.h.b16 %v516
        %v1725 = vunpack.c.l.b16 %v517
        %v1726 = vunpack.c.h.b16 %v517
        %v1727 = vunpack.c.l.b16 %v518
        %v1728 = vunpack.c.l.b16 %v519
        %v1729 = vunpack.c.h.b16 %v519
        %v1730 = vunpack.c.l.b16 %v520
        %v1731 = vunpack.c.h.b16 %v520
        %v1732 = vunpack.c.l.b16 %v521
        %v1733 = vunpack.c.h.b16 %v521
        %v1734 = vunpack.c.l.b16 %v522
        %v1735 = vunpack.c.h.b16 %v522
        %v1736 = vunpack.c.l.b16 %v523
        %v1737 = vunpack.c.l.b16 %v524
        %v1738 = vunpack.c.h.b16 %v524
        %v1739 = vunpack.c.l.b16 %v525
        %v1740 = vunpack.c.h.b16 %v525
        %v1741 = vunpack.c.l.b16 %v526
        %v1742 = vunpack.c.h.b16 %v526
        %v1743 = vunpack.c.l.b16 %v527
        %v1744 = vunpack.c.h.b16 %v527
        %v1745 = vunpack.c.l.b16 %v528
        %v1746 = vunpack.c.l.b16 %v529
        %v1747 = vunpack.c.h.b16 %v529
        %v1748 = vunpack.c.l.b16 %v530
        %v1749 = vunpack.c.h.b16 %v530
        %v1750 = vunpack.c.l.b16 %v531
        %v1751 = vunpack.c.h.b16 %v531
        %v1752 = vunpack.c.l.b16 %v532
        %v1753 = vunpack.c.h.b16 %v532
        %v1754 = vunpack.c.l.b16 %v533
        %v1755 = vunpack.c.l.b16 %v534
        %v1756 = vunpack.c.h.b16 %v534
        %v1757 = vunpack.c.l.b16 %v535
        %v1758 = vunpack.c.h.b16 %v535
        %v1759 = vunpack.c.l.b16 %v536
        %v1760 = vunpack.c.h.b16 %v536
        %v1761 = vunpack.c.l.b16 %v537
        %v1762 = vunpack.c.h.b16 %v537
        %v1763 = vunpack.c.l.b16 %v538
        %v1764 = vunpack.c.l.b16 %v539
        %v1765 = vunpack.c.h.b16 %v539
        %v1766 = vunpack.c.l.b16 %v540
        %v1767 = vunpack.c.h.b16 %v540
        %v1768 = vunpack.c.l.b16 %v541
        %v1769 = vunpack.c.h.b16 %v541
        %v1770 = vunpack.c.l.b16 %v542
        %v1771 = vunpack.c.h.b16 %v542
        %v1772 = vunpack.c.l.b16 %v543
        %v1773 = vunpack.c.l.b16 %v544
        %v1774 = vunpack.c.h.b16 %v544
        %v1775 = vunpack.c.l.b16 %v545
        %v1776 = vunpack.c.h.b16 %v545
        %v1777 = vunpack.c.l.b16 %v546
        %v1778 = vunpack.c.h.b16 %v546
        %v1779 = vunpack.c.l.b16 %v547
        %v1780 = vunpack.c.h.b16 %v547
        %v1781 = vunpack.c.l.b16 %v548
        %v1782 = vunpack.c.l.b16 %v549
        %v1783 = vunpack.c.h.b16 %v549
        %v1784 = vunpack.c.l.b16 %v550
        %v1785 = vunpack.c.h.b16 %v550
        %v1786 = vunpack.c.l.b16 %v551
        %v1787 = vunpack.c.h.b16 %v551
        %v1788 = vunpack.c.l.b16 %v552
        %v1789 = vunpack.c.h.b16 %v552
        %v1790 = vunpack.c.l.b16 %v553
        %v1791 = vunpack.c.l.b16 %v554
        %v1792 = vunpack.c.h.b16 %v554
        %v1793 = vunpack.c.l.b16 %v555
        %v1794 = vunpack.c.h.b16 %v555
        %v1795 = vunpack.c.l.b16 %v556
        %v1796 = vunpack.c.h.b16 %v556
        %v1797 = vunpack.c.l.b16 %v557
        %v1798 = vunpack.c.h.b16 %v557
        %v1799 = vunpack.c.l.b16 %v558
        %v1800 = vunpack.c.l.b16 %v559
        %v1801 = vunpack.c.h.b16 %v559
        %v1802 = vunpack.c.l.b16 %v560
        %v1803 = vunpack.c.h.b16 %v560
        %v1804 = vunpack.c.l.b16 %v561
        %v1805 = vunpack.c.h.b16 %v561
        %v1806 = vunpack.c.l.b16 %v562
        %v1807 = vunpack.c.h.b16 %v562
        %v1808 = vunpack.c.l.b16 %v563
        %v1809 = vunpack.c.l.b16 %v564
        %v1810 = vunpack.c.h.b16 %v564
        %v1811 = vunpack.c.l.b16 %v565
        %v1812 = vunpack.c.h.b16 %v565
        %v1813 = vunpack.c.l.b16 %v566
        %v1814 = vunpack.c.h.b16 %v566
        %v1815 = vunpack.c.l.b16 %v567
        %v1816 = vunpack.c.h.b16 %v567
        %v1817 = vunpack.c.l.b16 %v568
        %v1818 = vunpack.c.l.b16 %v569
        %v1819 = vunpack.c.h.b16 %v569
        %v1820 = vunpack.c.l.b16 %v570
        %v1821 = vunpack.c.h.b16 %v570
        %v1822 = vunpack.c.l.b16 %v571
        %v1823 = vunpack.c.h.b16 %v571
        %v1824 = vunpack.c.l.b16 %v572
        %v1825 = vunpack.c.h.b16 %v572
        %v1826 = vunpack.c.l.b16 %v573
        %v1827 = vunpack.c.l.b16 %v574
        %v1828 = vunpack.c.h.b16 %v574
        %v1829 = vunpack.c.l.b16 %v575
        %v1830 = vunpack.c.h.b16 %v575
        %v1831 = vunpack.c.l.b16 %v576
        %v1832 = vunpack.c.h.b16 %v576
        %v1833 = vunpack.c.l.b16 %v577
        %v1834 = vunpack.c.h.b16 %v577
        %v1835 = vunpack.c.l.b16 %v578
        %v1836 = vunpack.c.l.b16 %v579
        %v1837 = vunpack.c.h.b16 %v579
        %v1838 = vunpack.c.l.b16 %v580
        %v1839 = vunpack.c.h.b16 %v580
        %v1840 = vunpack.c.l.b16 %v581
        %v1841 = vunpack.c.h.b16 %v581
        %v1842 = vunpack.c.l.b16 %v582
        %v1843 = vunpack.c.h.b16 %v582
        %v1844 = vunpack.c.l.b16 %v583
        %v1845 = vunpack.c.l.b16 %v584
        %v1846 = vunpack.c.h.b16 %v584
        %v1847 = vunpack.c.l.b16 %v585
        %v1848 = vunpack.c.h.b16 %v585
        %v1849 = vunpack.c.l.b16 %v586
        %v1850 = vunpack.c.h.b16 %v586
        %v1851 = vunpack.c.l.b16 %v587
        %v1852 = vunpack.c.h.b16 %v587
        %v1853 = vunpack.c.l.b16 %v588
        %v1854 = vunpack.c.l.b16 %v589
        %v1855 = vunpack.c.h.b16 %v589
        %v1856 = vunpack.c.l.b16 %v590
        %v1857 = vunpack.c.h.b16 %v590
        %v1858 = vunpack.c.l.b16 %v591
        %v1859 = vunpack.c.h.b16 %v591
        %v1860 = vunpack.c.l.b16 %v592
        %v1861 = vunpack.c.h.b16 %v592
        %v1862 = vunpack.c.l.b16 %v593
        %v1863 = vunpack.c.l.b16 %v594
        %v1864 = vunpack.c.h.b16 %v594
        %v1865 = vunpack.c.l.b16 %v595
        %v1866 = vunpack.c.h.b16 %v595
        %v1867 = vunpack.c.l.b16 %v596
        %v1868 = vunpack.c.h.b16 %v596
        %v1869 = vunpack.c.l.b16 %v597
        %v1870 = vunpack.c.h.b16 %v597
        %v1871 = vunpack.c.l.b16 %v598
        %v1872 = vunpack.c.l.b16 %v599
        %v1873 = vunpack.c.h.b16 %v599
        %v1874 = vunpack.c.l.b16 %v600
        %v1875 = vunpack.c.h.b16 %v600
        %v1876 = vunpack.c.l.b16 %v601
        %v1877 = vunpack.c.h.b16 %v601
        %v1878 = vunpack.c.l.b16 %v602
        %v1879 = vunpack.c.h.b16 %v602
        %v1880 = vunpack.c.l.b16 %v603
        %v1881 = vunpack.c.l.b16 %v604
        %v1882 = vunpack.c.h.b16 %v604
        %v1883 = vunpack.c.l.b16 %v605
        %v1884 = vunpack.c.h.b16 %v605
        %v1885 = vunpack.c.l.b16 %v606
        %v1886 = vunpack.c.h.b16 %v606
        %v1887 = vunpack.c.l.b16 %v607
        %v1888 = vunpack.c.h.b16 %v607
        %v1889 = vunpack.c.l.b16 %v608
        %v1890 = vunpack.c.l.b16 %v609
        %v1891 = vunpack.c.h.b16 %v609
        %v1892 = vunpack.c.l.b16 %v610
        %v1893 = vunpack.c.h.b16 %v610
        %v1894 = vunpack.c.l.b16 %v611
        %v1895 = vunpack.c.h.b16 %v611
        %v1896 = vunpack.c.l.b16 %v612
        %v1897 = vunpack.c.h.b16 %v612
        %v1898 = vunpack.c.l.b16 %v613
        %v1899 = vunpack.c.l.b16 %v614
        %v1900 = vunpack.c.h.b16 %v614
        %v1901 = vunpack.c.l.b16 %v615
        %v1902 = vunpack.c.h.b16 %v615
        %v1903 = vunpack.c.l.b16 %v616
        %v1904 = vunpack.c.h.b16 %v616
        %v1905 = vunpack.c.l.b16 %v617
        %v1906 = vunpack.c.h.b16 %v617
        %v1907 = vunpack.c.l.b16 %v618
        %v1908 = vunpack.c.l.b16 %v619
        %v1909 = vunpack.c.h.b16 %v619
        %v1910 = vunpack.c.l.b16 %v620
        %v1911 = vunpack.c.h.b16 %v620
        %v1912 = vunpack.c.l.b16 %v621
        %v1913 = vunpack.c.h.b16 %v621
        %v1914 = vunpack.c.l.b16 %v622
        %v1915 = vunpack.c.h.b16 %v622
        %v1916 = vunpack.c.l.b16 %v623
        %v1917 = vunpack.c.l.b16 %v624
        %v1918 = vunpack.c.h.b16 %v624
        %v1919 = vunpack.c.l.b16 %v625
        %v1920 = vunpack.c.h.b16 %v625
        %v1921 = vunpack.c.l.b16 %v626
        %v1922 = vunpack.c.h.b16 %v626
        %v1923 = vunpack.c.l.b16 %v627
        %v1924 = vunpack.c.h.b16 %v627
        %v1925 = vunpack.c.l.b16 %v628
        %v1926 = vunpack.c.l.b16 %v629
        %v1927 = vunpack.c.h.b16 %v629
        %v1928 = vunpack.c.l.b16 %v630
        %v1929 = vunpack.c.h.b16 %v630
        %v1930 = vunpack.c.l.b16 %v631
        %v1931 = vunpack.c.h.b16 %v631
        %v1932 = vunpack.c.l.b16 %v632
        %v1933 = vunpack.c.h.b16 %v632
        %v1934 = vunpack.c.l.b16 %v633
        %v1935 = vunpack.c.l.b16 %v634
        %v1936 = vunpack.c.h.b16 %v634
        %v1937 = vunpack.c.l.b16 %v635
        %v1938 = vunpack.c.h.b16 %v635
        %v1939 = vunpack.c.l.b16 %v636
        %v1940 = vunpack.c.h.b16 %v636
        %v1941 = vunpack.c.l.b16 %v637
        %v1942 = vunpack.c.h.b16 %v637
        %v1943 = vunpack.c.l.b16 %v638
        %v1944 = vunpack.c.l.b16 %v639
        %v1945 = vunpack.c.h.b16 %v639
        %v1946 = vunpack.c.l.b16 %v640
        %v1947 = vunpack.c.h.b16 %v640
        %v1948 = vunpack.c.l.b16 %v641
        %v1949 = vunpack.c.h.b16 %v641
        %v1950 = vunpack.c.l.b16 %v642
        %v1951 = vunpack.c.h.b16 %v642
        %v1952 = vunpack.c.l.b16 %v643
        %v1953 = vunpack.c.l.b16 %v644
        %v1954 = vunpack.c.h.b16 %v644
        %v1955 = vunpack.c.l.b16 %v645
        %v1956 = vunpack.c.h.b16 %v645
        %v1957 = vunpack.c.l.b16 %v646
        %v1958 = vunpack.c.h.b16 %v646
        %v1959 = vunpack.c.l.b16 %v647
        %v1960 = vunpack.c.h.b16 %v647
        %v1961 = vunpack.c.l.b16 %v648
        %v1962 = vunpack.c.l.b16 %v649
        %v1963 = vunpack.c.h.b16 %v649
        %v1964 = vunpack.c.l.b16 %v650
        %v1965 = vunpack.c.h.b16 %v650
        %v1966 = vunpack.c.l.b16 %v651
        %v1967 = vunpack.c.h.b16 %v651
        %v1968 = vunpack.c.l.b16 %v652
        %v1969 = vunpack.c.h.b16 %v652
        %v1970 = vunpack.c.l.b16 %v653
        %v1971 = vunpack.c.l.b16 %v654
        %v1972 = vunpack.c.h.b16 %v654
        %v1973 = vunpack.c.l.b16 %v655
        %v1974 = vunpack.c.h.b16 %v655
        %v1975 = vunpack.c.l.b16 %v656
        %v1976 = vunpack.c.h.b16 %v656
        %v1977 = vunpack.c.l.b16 %v657
        %v1978 = vunpack.c.h.b16 %v657
        %v1979 = vunpack.c.l.b16 %v658
        %v1980 = vunpack.c.l.b16 %v659
        %v1981 = vunpack.c.h.b16 %v659
        %v1982 = vunpack.c.l.b16 %v660
        %v1983 = vunpack.c.h.b16 %v660
        %v1984 = vunpack.c.l.b16 %v661
        %v1985 = vunpack.c.h.b16 %v661
        %v1986 = vunpack.c.l.b16 %v662
        %v1987 = vunpack.c.h.b16 %v662
        %v1988 = vunpack.c.l.b16 %v663
        %v1989 = vunpack.c.l.b16 %v664
        %v1990 = vunpack.c.h.b16 %v664
        %v1991 = vunpack.c.l.b16 %v665
        %v1992 = vunpack.c.h.b16 %v665
        %v1993 = vunpack.c.l.b16 %v666
        %v1994 = vunpack.c.h.b16 %v666
        %v1995 = vunpack.c.l.b16 %v667
        %v1996 = vunpack.c.h.b16 %v667
        %v1997 = vunpack.c.l.b16 %v668
        %v1998 = vunpack.c.l.b16 %v669
        %v1999 = vunpack.c.h.b16 %v669
        %v2000 = vunpack.c.l.b16 %v670
        %v2001 = vunpack.c.h.b16 %v670
        %v2002 = vunpack.c.l.b16 %v671
        %v2003 = vunpack.c.h.b16 %v671
        %v2004 = vunpack.c.l.b16 %v672
        %v2005 = vunpack.c.h.b16 %v672
        %v2006 = vunpack.c.l.b16 %v673
        %v2007 = vunpack.c.l.b16 %v674
        %v2008 = vunpack.c.h.b16 %v674
        %v2009 = vunpack.c.l.b16 %v675
        %v2010 = vunpack.c.h.b16 %v675
        %v2011 = vunpack.c.l.b16 %v676
        %v2012 = vunpack.c.h.b16 %v676
        %v2013 = vunpack.c.l.b16 %v677
        %v2014 = vunpack.c.h.b16 %v677
        %v2015 = vunpack.c.l.b16 %v678
        %v2016 = vunpack.c.l.b16 %v679
        %v2017 = vunpack.c.h.b16 %v679
        %v2018 = vunpack.c.l.b16 %v680
        %v2019 = vunpack.c.h.b16 %v680
        %v2020 = vunpack.c.l.b16 %v681
        %v2021 = vunpack.c.h.b16 %v681
        %v2022 = vunpack.c.l.b16 %v682
        %v2023 = vunpack.c.h.b16 %v682
        %v2024 = vunpack.c.l.b16 %v683
        %v2025 = vunpack.c.l.b16 %v684
        %v2026 = vunpack.c.h.b16 %v684
        %v2027 = vunpack.c.l.b16 %v685
        %v2028 = vunpack.c.h.b16 %v685
        %v2029 = vunpack.c.l.b16 %v686
        %v2030 = vunpack.c.h.b16 %v686
        %v2031 = vunpack.c.l.b16 %v687
        %v2032 = vunpack.c.h.b16 %v687
        %v2033 = vunpack.c.l.b16 %v688
        %v2034 = vunpack.c.l.b16 %v689
        %v2035 = vunpack.c.h.b16 %v689
        %v2036 = vunpack.c.l.b16 %v690
        %v2037 = vunpack.c.h.b16 %v690
        %v2038 = vunpack.c.l.b16 %v691
        %v2039 = vunpack.c.h.b16 %v691
        %v2040 = vunpack.c.l.b16 %v692
        %v2041 = vunpack.c.h.b16 %v692
        %v2042 = vunpack.c.l.b16 %v693
        %v2043 = vunpack.c.l.b16 %v694
        %v2044 = vunpack.c.h.b16 %v694
        %v2045 = vunpack.c.l.b16 %v695
        %v2046 = vunpack.c.h.b16 %v695
        %v2047 = vunpack.c.l.b16 %v696
        %v2048 = vunpack.c.h.b16 %v696
        %v2049 = vunpack.c.l.b16 %v697
        %v2050 = vunpack.c.h.b16 %v697
        %v2051 = vunpack.c.l.b16 %v698
        %v2052 = vunpack.c.l.b16 %v699
        %v2053 = vunpack.c.h.b16 %v699
        %v2054 = vunpack.c.l.b16 %v700
        %v2055 = vunpack.c.h.b16 %v700
        %v2056 = vunpack.c.l.b16 %v701
        %v2057 = vunpack.c.h.b16 %v701
        %v2058 = vunpack.c.l.b16 %v702
        %v2059 = vunpack.c.h.b16 %v702
        %v2060 = vunpack.c.l.b16 %v703
        %v2061 = vunpack.c.l.b16 %v704
        %v2062 = vunpack.c.h.b16 %v704
        %v2063 = vunpack.c.l.b16 %v705
        %v2064 = vunpack.c.h.b16 %v705
        %v2065 = vunpack.c.l.b16 %v706
        %v2066 = vunpack.c.h.b16 %v706
        %v2067 = vunpack.c.l.b16 %v707
        %v2068 = vunpack.c.h.b16 %v707
        %v2069 = vunpack.c.l.b16 %v708
        %v2070 = vunpack.c.l.b16 %v709
        %v2071 = vunpack.c.h.b16 %v709
        %v2072 = vunpack.c.l.b16 %v710
        %v2073 = vunpack.c.h.b16 %v710
        %v2074 = vunpack.c.l.b16 %v711
        %v2075 = vunpack.c.h.b16 %v711
        %v2076 = vunpack.c.l.b16 %v712
        %v2077 = vunpack.c.h.b16 %v712
        %v2078 = vunpack.c.l.b16 %v713
        %v2079 = vpack.c.b16 %v1224, %v1215
        %v2080 = vpack.c.b16 %v1225, %v1216
        %v2081 = vpack.c.b16 %v1226, %v1217
        %v2082 = vpack.c.b16 %v1227, %v1218
        %v2083 = vpack.c.b16 %v1228, %v1219
        %v2084 = vpack.c.b16 %v1229, %v1220
        %v2085 = vpack.c.b16 %v1230, %v1221
        %v2086 = vpack.c.b16 %v1231, %v1222
        %v2087 = vpack.c.b16 %v1232, %v1223
        %v2088 = vpack.c.b16 %v1242, %v1233
        %v2089 = vpack.c.b16 %v1243, %v1234
        %v2090 = vpack.c.b16 %v1244, %v1235
        %v2091 = vpack.c.b16 %v1245, %v1236
        %v2092 = vpack.c.b16 %v1246, %v1237
        %v2093 = vpack.c.b16 %v1247, %v1238
        %v2094 = vpack.c.b16 %v1248, %v1239
        %v2095 = vpack.c.b16 %v1249, %v1240
        %v2096 = vpack.c.b16 %v1250, %v1241
        %v2097 = vpack.c.b16 %v1260, %v1251
        %v2098 = vpack.c.b16 %v1261, %v1252
        %v2099 = vpack.c.b16 %v1262, %v1253
        %v2100 = vpack.c.b16 %v1263, %v1254
        %v2101 = vpack.c.b16 %v1264, %v1255
        %v2102 = vpack.c.b16 %v1265, %v1256
        %v2103 = vpack.c.b16 %v1266, %v1257
        %v2104 = vpack.c.b16 %v1267, %v1258
        %v2105 = vpack.c.b16 %v1268, %v1259
        %v2106 = vpack.c.b16 %v1278, %v1269
        %v2107 = vpack.c.b16 %v1279, %v1270
        %v2108 = vpack.c.b16 %v1280, %v1271
        %v2109 = vpack.c.b16 %v1281, %v1272
        %v2110 = vpack.c.b16 %v1282, %v1273
        %v2111 = vpack.c.b16 %v1283, %v1274
        %v2112 = vpack.c.b16 %v1284, %v1275
        %v2113 = vpack.c.b16 %v1285, %v1276
        %v2114 = vpack.c.b16 %v1286, %v1277
        %v2115 = vpack.c.b16 %v1296, %v1287
        %v2116 = vpack.c.b16 %v1297, %v1288
        %v2117 = vpack.c.b16 %v1298, %v1289
        %v2118 = vpack.c.b16 %v1299, %v1290
        %v2119 = vpack.c.b16 %v1300, %v1291
        %v2120 = vpack.c.b16 %v1301, %v1292
        %v2121 = vpack.c.b16 %v1302, %v1293
        %v2122 = vpack.c.b16 %v1303, %v1294
        %v2123 = vpack.c.b16 %v1304, %v1295
        %v2124 = vpack.c.b16 %v1314, %v1305
        %v2125 = vpack.c.b16 %v1315, %v1306
        %v2126 = vpack.c.b16 %v1316, %v1307
        %v2127 = vpack.c.b16 %v1317, %v1308
        %v2128 = vpack.c.b16 %v1318, %v1309
        %v2129 = vpack.c.b16 %v1319, %v1310
        %v2130 = vpack.c.b16 %v1320, %v1311
        %v2131 = vpack.c.b16 %v1321, %v1312
        %v2132 = vpack.c.b16 %v1322, %v1313
        %v2133 = vpack.c.b16 %v1332, %v1323
        %v2134 = vpack.c.b16 %v1333, %v1324
        %v2135 = vpack.c.b16 %v1334, %v1325
        %v2136 = vpack.c.b16 %v1335, %v1326
        %v2137 = vpack.c.b16 %v1336, %v1327
        %v2138 = vpack.c.b16 %v1337, %v1328
        %v2139 = vpack.c.b16 %v1338, %v1329
        %v2140 = vpack.c.b16 %v1339, %v1330
        %v2141 = vpack.c.b16 %v1340, %v1331
        %v2142 = vpack.c.b16 %v1350, %v1341
        %v2143 = vpack.c.b16 %v1351, %v1342
        %v2144 = vpack.c.b16 %v1352, %v1343
        %v2145 = vpack.c.b16 %v1353, %v1344
        %v2146 = vpack.c.b16 %v1354, %v1345
        %v2147 = vpack.c.b16 %v1355, %v1346
        %v2148 = vpack.c.b16 %v1356, %v1347
        %v2149 = vpack.c.b16 %v1357, %v1348
        %v2150 = vpack.c.b16 %v1358, %v1349
        %v2151 = vpack.c.b16 %v1368, %v1359
        %v2152 = vpack.c.b16 %v1369, %v1360
        %v2153 = vpack.c.b16 %v1370, %v1361
        %v2154 = vpack.c.b16 %v1371, %v1362
        %v2155 = vpack.c.b16 %v1372, %v1363
        %v2156 = vpack.c.b16 %v1373, %v1364
        %v2157 = vpack.c.b16 %v1374, %v1365
        %v2158 = vpack.c.b16 %v1375, %v1366
        %v2159 = vpack.c.b16 %v1376, %v1367
        %v2160 = vpack.c.b16 %v1386, %v1377
        %v2161 = vpack.c.b16 %v1387, %v1378
        %v2162 = vpack.c.b16 %v1388, %v1379
        %v2163 = vpack.c.b16 %v1389, %v1380
        %v2164 = vpack.c.b16 %v1390, %v1381
        %v2165 = vpack.c.b16 %v1391, %v1382
        %v2166 = vpack.c.b16 %v1392, %v1383
        %v2167 = vpack.c.b16 %v1393, %v1384
        %v2168 = vpack.c.b16 %v1394, %v1385
        %v2169 = vpack.c.b16 %v1404, %v1395
        %v2170 = vpack.c.b16 %v1405, %v1396
        %v2171 = vpack.c.b16 %v1406, %v1397
        %v2172 = vpack.c.b16 %v1407, %v1398
        %v2173 = vpack.c.b16 %v1408, %v1399
        %v2174 = vpack.c.b16 %v1409, %v1400
        %v2175 = vpack.c.b16 %v1410, %v1401
        %v2176 = vpack.c.b16 %v1411, %v1402
        %v2177 = vpack.c.b16 %v1412, %v1403
        %v2178 = vpack.c.b16 %v1422, %v1413
        %v2179 = vpack.c.b16 %v1423, %v1414
        %v2180 = vpack.c.b16 %v1424, %v1415
        %v2181 = vpack.c.b16 %v1425, %v1416
        %v2182 = vpack.c.b16 %v1426, %v1417
        %v2183 = vpack.c.b16 %v1427, %v1418
        %v2184 = vpack.c.b16 %v1428, %v1419
        %v2185 = vpack.c.b16 %v1429, %v1420
        %v2186 = vpack.c.b16 %v1430, %v1421
        %v2187 = vpack.c.b16 %v1440, %v1431
        %v2188 = vpack.c.b16 %v1441, %v1432
        %v2189 = vpack.c.b16 %v1442, %v1433
        %v2190 = vpack.c.b16 %v1443, %v1434
        %v2191 = vpack.c.b16 %v1444, %v1435
        %v2192 = vpack.c.b16 %v1445, %v1436
        %v2193 = vpack.c.b16 %v1446, %v1437
        %v2194 = vpack.c.b16 %v1447, %v1438
        %v2195 = vpack.c.b16 %v1448, %v1439
        %v2196 = vpack.c.b16 %v1458, %v1449
        %v2197 = vpack.c.b16 %v1459, %v1450
        %v2198 = vpack.c.b16 %v1460, %v1451
        %v2199 = vpack.c.b16 %v1461, %v1452
        %v2200 = vpack.c.b16 %v1462, %v1453
        %v2201 = vpack.c.b16 %v1463, %v1454
        %v2202 = vpack.c.b16 %v1464, %v1455
        %v2203 = vpack.c.b16 %v1465, %v1456
        %v2204 = vpack.c.b16 %v1466, %v1457
        %v2205 = vpack.c.b16 %v1476, %v1467
        %v2206 = vpack.c.b16 %v1477, %v1468
        %v2207 = vpack.c.b16 %v1478, %v1469
        %v2208 = vpack.c.b16 %v1479, %v1470
        %v2209 = vpack.c.b16 %v1480, %v1471
        %v2210 = vpack.c.b16 %v1481, %v1472
        %v2211 = vpack.c.b16 %v1482, %v1473
        %v2212 = vpack.c.b16 %v1483, %v1474
        %v2213 = vpack.c.b16 %v1484, %v1475
        %v2214 = vpack.c.b16 %v1494, %v1485
        %v2215 = vpack.c.b16 %v1495, %v1486
        %v2216 = vpack.c.b16 %v1496, %v1487
        %v2217 = vpack.c.b16 %v1497, %v1488
        %v2218 = vpack.c.b16 %v1498, %v1489
        %v2219 = vpack.c.b16 %v1499, %v1490
        %v2220 = vpack.c.b16 %v1500, %v1491
        %v2221 = vpack.c.b16 %v1501, %v1492
        %v2222 = vpack.c.b16 %v1502, %v1493
        %v2223 = vpack.c.b16 %v1512, %v1503
        %v2224 = vpack.c.b16 %v1513, %v1504
        %v2225 = vpack.c.b16 %v1514, %v1505
        %v2226 = vpack.c.b16 %v1515, %v1506
        %v2227 = vpack.c.b16 %v1516, %v1507
        %v2228 = vpack.c.b16 %v1517, %v1508
        %v2229 = vpack.c.b16 %v1518, %v1509
        %v2230 = vpack.c.b16 %v1519, %v1510
        %v2231 = vpack.c.b16 %v1520, %v1511
        %v2232 = vpack.c.b16 %v1530, %v1521
        %v2233 = vpack.c.b16 %v1531, %v1522
        %v2234 = vpack.c.b16 %v1532, %v1523
        %v2235 = vpack.c.b16 %v1533, %v1524
        %v2236 = vpack.c.b16 %v1534, %v1525
        %v2237 = vpack.c.b16 %v1535, %v1526
        %v2238 = vpack.c.b16 %v1536, %v1527
        %v2239 = vpack.c.b16 %v1537, %v1528
        %v2240 = vpack.c.b16 %v1538, %v1529
        %v2241 = vpack.c.b16 %v1548, %v1539
        %v2242 = vpack.c.b16 %v1549, %v1540
        %v2243 = vpack.c.b16 %v1550, %v1541
        %v2244 = vpack.c.b16 %v1551, %v1542
        %v2245 = vpack.c.b16 %v1552, %v1543
        %v2246 = vpack.c.b16 %v1553, %v1544
        %v2247 = vpack.c.b16 %v1554, %v1545
        %v2248 = vpack.c.b16 %v1555, %v1546
        %v2249 = vpack.c.b16 %v1556, %v1547
        %v2250 = vpack.c.b16 %v1566, %v1557
        %v2251 = vpack.c.b16 %v1567, %v1558
        %v2252 = vpack.c.b16 %v1568, %v1559
        %v2253 = vpack.c.b16 %v1569, %v1560
        %v2254 = vpack.c.b16 %v1570, %v1561
        %v2255 = vpack.c.b16 %v1571, %v1562
        %v2256 = vpack.c.b16 %v1572, %v1563
        %v2257 = vpack.c.b16 %v1573, %v1564
        %v2258 = vpack.c.b16 %v1574, %v1565
        %v2259 = vpack.c.b16 %v1584, %v1575
        %v2260 = vpack.c.b16 %v1585, %v1576
        %v2261 = vpack.c.b16 %v1586, %v1577
        %v2262 = vpack.c.b16 %v1587, %v1578
        %v2263 = vpack.c.b16 %v1588, %v1579
        %v2264 = vpack.c.b16 %v1589, %v1580
        %v2265 = vpack.c.b16 %v1590, %v1581
        %v2266 = vpack.c.b16 %v1591, %v1582
        %v2267 = vpack.c.b16 %v1592, %v1583
        %v2268 = vpack.c.b16 %v1602, %v1593
        %v2269 = vpack.c.b16 %v1603, %v1594
        %v2270 = vpack.c.b16 %v1604, %v1595
        %v2271 = vpack.c.b16 %v1605, %v1596
        %v2272 = vpack.c.b16 %v1606, %v1597
        %v2273 = vpack.c.b16 %v1607, %v1598
        %v2274 = vpack.c.b16 %v1608, %v1599
        %v2275 = vpack.c.b16 %v1609, %v1600
        %v2276 = vpack.c.b16 %v1610, %v1601
        %v2277 = vpack.c.b16 %v1620, %v1611
        %v2278 = vpack.c.b16 %v1621, %v1612
        %v2279 = vpack.c.b16 %v1622, %v1613
        %v2280 = vpack.c.b16 %v1623, %v1614
        %v2281 = vpack.c.b16 %v1624, %v1615
        %v2282 = vpack.c.b16 %v1625, %v1616
        %v2283 = vpack.c.b16 %v1626, %v1617
        %v2284 = vpack.c.b16 %v1627, %v1618
        %v2285 = vpack.c.b16 %v1628, %v1619
        %v2286 = vpack.c.b16 %v1638, %v1629
        %v2287 = vpack.c.b16 %v1639, %v1630
        %v2288 = vpack.c.b16 %v1640, %v1631
        %v2289 = vpack.c.b16 %v1641, %v1632
        %v2290 = vpack.c.b16 %v1642, %v1633
        %v2291 = vpack.c.b16 %v1643, %v1634
        %v2292 = vpack.c.b16 %v1644, %v1635
        %v2293 = vpack.c.b16 %v1645, %v1636
        %v2294 = vpack.c.b16 %v1646, %v1637
        %v2295 = vpack.c.b16 %v1656, %v1647
        %v2296 = vpack.c.b16 %v1657, %v1648
        %v2297 = vpack.c.b16 %v1658, %v1649
        %v2298 = vpack.c.b16 %v1659, %v1650
        %v2299 = vpack.c.b16 %v1660, %v1651
        %v2300 = vpack.c.b16 %v1661, %v1652
        %v2301 = vpack.c.b16 %v1662, %v1653
        %v2302 = vpack.c.b16 %v1663, %v1654
        %v2303 = vpack.c.b16 %v1664, %v1655
        %v2304 = vpack.c.b16 %v1674, %v1665
        %v2305 = vpack.c.b16 %v1675, %v1666
        %v2306 = vpack.c.b16 %v1676, %v1667
        %v2307 = vpack.c.b16 %v1677, %v1668
        %v2308 = vpack.c.b16 %v1678, %v1669
        %v2309 = vpack.c.b16 %v1679, %v1670
        %v2310 = vpack.c.b16 %v1680, %v1671
        %v2311 = vpack.c.b16 %v1681, %v1672
        %v2312 = vpack.c.b16 %v1682, %v1673
        %v2313 = vpack.c.b16 %v1692, %v1683
        %v2314 = vpack.c.b16 %v1693, %v1684
        %v2315 = vpack.c.b16 %v1694, %v1685
        %v2316 = vpack.c.b16 %v1695, %v1686
        %v2317 = vpack.c.b16 %v1696, %v1687
        %v2318 = vpack.c.b16 %v1697, %v1688
        %v2319 = vpack.c.b16 %v1698, %v1689
        %v2320 = vpack.c.b16 %v1699, %v1690
        %v2321 = vpack.c.b16 %v1700, %v1691
        %v2322 = vpack.c.b16 %v1710, %v1701
        %v2323 = vpack.c.b16 %v1711, %v1702
        %v2324 = vpack.c.b16 %v1712, %v1703
        %v2325 = vpack.c.b16 %v1713, %v1704
        %v2326 = vpack.c.b16 %v1714, %v1705
        %v2327 = vpack.c.b16 %v1715, %v1706
        %v2328 = vpack.c.b16 %v1716, %v1707
        %v2329 = vpack.c.b16 %v1717, %v1708
        %v2330 = vpack.c.b16 %v1718, %v1709
        %v2331 = vpack.c.b16 %v1728, %v1719
        %v2332 = vpack.c.b16 %v1729, %v1720
        %v2333 = vpack.c.b16 %v1730, %v1721
        %v2334 = vpack.c.b16 %v1731, %v1722
        %v2335 = vpack.c.b16 %v1732, %v1723
        %v2336 = vpack.c.b16 %v1733, %v1724
        %v2337 = vpack.c.b16 %v1734, %v1725
        %v2338 = vpack.c.b16 %v1735, %v1726
        %v2339 = vpack.c.b16 %v1736, %v1727
        %v2340 = vpack.c.b16 %v1746, %v1737
        %v2341 = vpack.c.b16 %v1747, %v1738
        %v2342 = vpack.c.b16 %v1748, %v1739
        %v2343 = vpack.c.b16 %v1749, %v1740
        %v2344 = vpack.c.b16 %v1750, %v1741
        %v2345 = vpack.c.b16 %v1751, %v1742
        %v2346 = vpack.c.b16 %v1752, %v1743
        %v2347 = vpack.c.b16 %v1753, %v1744
        %v2348 = vpack.c.b16 %v1754, %v1745
        %v2349 = vpack.c.b16 %v1764, %v1755
        %v2350 = vpack.c.b16 %v1765, %v1756
        %v2351 = vpack.c.b16 %v1766, %v1757
        %v2352 = vpack.c.b16 %v1767, %v1758
        %v2353 = vpack.c.b16 %v1768, %v1759
        %v2354 = vpack.c.b16 %v1769, %v1760
        %v2355 = vpack.c.b16 %v1770, %v1761
        %v2356 = vpack.c.b16 %v1771, %v1762
        %v2357 = vpack.c.b16 %v1772, %v1763
        %v2358 = vpack.c.b16 %v1782, %v1773
        %v2359 = vpack.c.b16 %v1783, %v1774
        %v2360 = vpack.c.b16 %v1784, %v1775
        %v2361 = vpack.c.b16 %v1785, %v1776
        %v2362 = vpack.c.b16 %v1786, %v1777
        %v2363 = vpack.c.b16 %v1787, %v1778
        %v2364 = vpack.c.b16 %v1788, %v1779
        %v2365 = vpack.c.b16 %v1789, %v1780
        %v2366 = vpack.c.b16 %v1790, %v1781
        %v2367 = vpack.c.b16 %v1800, %v1791
        %v2368 = vpack.c.b16 %v1801, %v1792
        %v2369 = vpack.c.b16 %v1802, %v1793
        %v2370 = vpack.c.b16 %v1803, %v1794
        %v2371 = vpack.c.b16 %v1804, %v1795
        %v2372 = vpack.c.b16 %v1805, %v1796
        %v2373 = vpack.c.b16 %v1806, %v1797
        %v2374 = vpack.c.b16 %v1807, %v1798
        %v2375 = vpack.c.b16 %v1808, %v1799
        %v2376 = vpack.c.b16 %v1818, %v1809
        %v2377 = vpack.c.b16 %v1819, %v1810
        %v2378 = vpack.c.b16 %v1820, %v1811
        %v2379 = vpack.c.b16 %v1821, %v1812
        %v2380 = vpack.c.b16 %v1822, %v1813
        %v2381 = vpack.c.b16 %v1823, %v1814
        %v2382 = vpack.c.b16 %v1824, %v1815
        %v2383 = vpack.c.b16 %v1825, %v1816
        %v2384 = vpack.c.b16 %v1826, %v1817
        %v2385 = vpack.c.b16 %v1836, %v1827
        %v2386 = vpack.c.b16 %v1837, %v1828
        %v2387 = vpack.c.b16 %v1838, %v1829
        %v2388 = vpack.c.b16 %v1839, %v1830
        %v2389 = vpack.c.b16 %v1840, %v1831
        %v2390 = vpack.c.b16 %v1841, %v1832
        %v2391 = vpack.c.b16 %v1842, %v1833
        %v2392 = vpack.c.b16 %v1843, %v1834
        %v2393 = vpack.c.b16 %v1844, %v1835
        %v2394 = vpack.c.b16 %v1854, %v1845
        %v2395 = vpack.c.b16 %v1855, %v1846
        %v2396 = vpack.c.b16 %v1856, %v1847
        %v2397 = vpack.c.b16 %v1857, %v1848
        %v2398 = vpack.c.b16 %v1858, %v1849
        %v2399 = vpack.c.b16 %v1859, %v1850
        %v2400 = vpack.c.b16 %v1860, %v1851
        %v2401 = vpack.c.b16 %v1861, %v1852
        %v2402 = vpack.c.b16 %v1862, %v1853
        %v2403 = vpack.c.b16 %v1872, %v1863
        %v2404 = vpack.c.b16 %v1873, %v1864
        %v2405 = vpack.c.b16 %v1874, %v1865
        %v2406 = vpack.c.b16 %v1875, %v1866
        %v2407 = vpack.c.b16 %v1876, %v1867
        %v2408 = vpack.c.b16 %v1877, %v1868
        %v2409 = vpack.c.b16 %v1878, %v1869
        %v2410 = vpack.c.b16 %v1879, %v1870
        %v2411 = vpack.c.b16 %v1880, %v1871
        %v2412 = vpack.c.b16 %v1890, %v1881
        %v2413 = vpack.c.b16 %v1891, %v1882
        %v2414 = vpack.c.b16 %v1892, %v1883
        %v2415 = vpack.c.b16 %v1893, %v1884
        %v2416 = vpack.c.b16 %v1894, %v1885
        %v2417 = vpack.c.b16 %v1895, %v1886
        %v2418 = vpack.c.b16 %v1896, %v1887
        %v2419 = vpack.c.b16 %v1897, %v1888
        %v2420 = vpack.c.b16 %v1898, %v1889
        %v2421 = vpack.c.b16 %v1908, %v1899
        %v2422 = vpack.c.b16 %v1909, %v1900
        %v2423 = vpack.c.b16 %v1910, %v1901
        %v2424 = vpack.c.b16 %v1911, %v1902
        %v2425 = vpack.c.b16 %v1912, %v1903
        %v2426 = vpack.c.b16 %v1913, %v1904
        %v2427 = vpack.c.b16 %v1914, %v1905
        %v2428 = vpack.c.b16 %v1915, %v1906
        %v2429 = vpack.c.b16 %v1916, %v1907
        %v2430 = vpack.c.b16 %v1926, %v1917
        %v2431 = vpack.c.b16 %v1927, %v1918
        %v2432 = vpack.c.b16 %v1928, %v1919
        %v2433 = vpack.c.b16 %v1929, %v1920
        %v2434 = vpack.c.b16 %v1930, %v1921
        %v2435 = vpack.c.b16 %v1931, %v1922
        %v2436 = vpack.c.b16 %v1932, %v1923
        %v2437 = vpack.c.b16 %v1933, %v1924
        %v2438 = vpack.c.b16 %v1934, %v1925
        %v2439 = vpack.c.b16 %v1944, %v1935
        %v2440 = vpack.c.b16 %v1945, %v1936
        %v2441 = vpack.c.b16 %v1946, %v1937
        %v2442 = vpack.c.b16 %v1947, %v1938
        %v2443 = vpack.c.b16 %v1948, %v1939
        %v2444 = vpack.c.b16 %v1949, %v1940
        %v2445 = vpack.c.b16 %v1950, %v1941
        %v2446 = vpack.c.b16 %v1951, %v1942
        %v2447 = vpack.c.b16 %v1952, %v1943
        %v2448 = vpack.c.b16 %v1962, %v1953
        %v2449 = vpack.c.b16 %v1963, %v1954
        %v2450 = vpack.c.b16 %v1964, %v1955
        %v2451 = vpack.c.b16 %v1965, %v1956
        %v2452 = vpack.c.b16 %v1966, %v1957
        %v2453 = vpack.c.b16 %v1967, %v1958
        %v2454 = vpack.c.b16 %v1968, %v1959
        %v2455 = vpack.c.b16 %v1969, %v1960
        %v2456 = vpack.c.b16 %v1970, %v1961
        %v2457 = vpack.c.b16 %v1980, %v1971
        %v2458 = vpack.c.b16 %v1981, %v1972
        %v2459 = vpack.c.b16 %v1982, %v1973
        %v2460 = vpack.c.b16 %v1983, %v1974
        %v2461 = vpack.c.b16 %v1984, %v1975
        %v2462 = vpack.c.b16 %v1985, %v1976
        %v2463 = vpack.c.b16 %v1986, %v1977
        %v2464 = vpack.c.b16 %v1987, %v1978
        %v2465 = vpack.c.b16 %v1988, %v1979
        %v2466 = vpack.c.b16 %v1998, %v1989
        %v2467 = vpack.c.b16 %v1999, %v1990
        %v2468 = vpack.c.b16 %v2000, %v1991
        %v2469 = vpack.c.b16 %v2001, %v1992
        %v2470 = vpack.c.b16 %v2002, %v1993
        %v2471 = vpack.c.b16 %v2003, %v1994
        %v2472 = vpack.c.b16 %v2004, %v1995
        %v2473 = vpack.c.b16 %v2005, %v1996
        %v2474 = vpack.c.b16 %v2006, %v1997
        %v2475 = vpack.c.b16 %v2016, %v2007
        %v2476 = vpack.c.b16 %v2017, %v2008
        %v2477 = vpack.c.b16 %v2018, %v2009
        %v2478 = vpack.c.b16 %v2019, %v2010
        %v2479 = vpack.c.b16 %v2020, %v2011
        %v2480 = vpack.c.b16 %v2021, %v2012
        %v2481 = vpack.c.b16 %v2022, %v2013
        %v2482 = vpack.c.b16 %v2023, %v2014
        %v2483 = vpack.c.b16 %v2024, %v2015
        %v2484 = vpack.c.b16 %v2034, %v2025
        %v2485 = vpack.c.b16 %v2035, %v2026
        %v2486 = vpack.c.b16 %v2036, %v2027
        %v2487 = vpack.c.b16 %v2037, %v2028
        %v2488 = vpack.c.b16 %v2038, %v2029
        %v2489 = vpack.c.b16 %v2039, %v2030
        %v2490 = vpack.c.b16 %v2040, %v2031
        %v2491 = vpack.c.b16 %v2041, %v2032
        %v2492 = vpack.c.b16 %v2042, %v2033
        %v2493 = vpack.c.b16 %v2052, %v2043
        %v2494 = vpack.c.b16 %v2053, %v2044
        %v2495 = vpack.c.b16 %v2054, %v2045
        %v2496 = vpack.c.b16 %v2055, %v2046
        %v2497 = vpack.c.b16 %v2056, %v2047
        %v2498 = vpack.c.b16 %v2057, %v2048
        %v2499 = vpack.c.b16 %v2058, %v2049
        %v2500 = vpack.c.b16 %v2059, %v2050
        %v2501 = vpack.c.b16 %v2060, %v2051
        %v2502 = vpack.c.b16 %v2070, %v2061
        %v2503 = vpack.c.b16 %v2071, %v2062
        %v2504 = vpack.c.b16 %v2072, %v2063
        %v2505 = vpack.c.b16 %v2073, %v2064
        %v2506 = vpack.c.b16 %v2074, %v2065
        %v2507 = vpack.c.b16 %v2075, %v2066
        %v2508 = vpack.c.b16 %v2076, %v2067
        %v2509 = vpack.c.b16 %v2077, %v2068
        %v2510 = vpack.c.b16 %v2078, %v2069
        %2943 = vmatprep.subr.bf16.mxu0 %v2143
        %2944 = vmatpush1.bf16.msra.mxu0 %v2142
        %2945 = vmatprep.subr.bf16.mxu0 %v2134
        %2946 = vmatpush1.bf16.msra.mxu0 %v2133
        %2947 = vmatprep.subr.bf16.mxu0 %v2125
        %2948 = vmatpush1.bf16.msra.mxu0 %v2124
        %2949 = vmatprep.subr.bf16.mxu0 %v2116
        %2950 = vmatpush1.bf16.msra.mxu0 %v2115
        %2951 = vmatprep.subr.bf16.mxu0 %v2107
        %2952 = vmatpush1.bf16.msra.mxu0 %v2106
        %2953 = vmatprep.subr.bf16.mxu0 %v2098
        %2954 = vmatpush1.bf16.msra.mxu0 %v2097
        %2955 = vmatprep.subr.bf16.mxu0 %v2089
        %2956 = vmatpush1.bf16.msra.mxu0 %v2088
        %2957 = vmatprep.subr.bf16.mxu0 %v2080
        %2958 = vmatpush1.bf16.msra.mxu0 %v2079
        %2959 = vmatprep.subr.bf16.mxu0 %v2215
        %2960 = vmatpush2.bf16.msra.mxu0 %v2214
        %2961 = vmatprep.subr.bf16.mxu0 %v2206
        %2962 = vmatpush2.bf16.msra.mxu0 %v2205
        %2963 = vmatprep.subr.bf16.mxu0 %v2197
        %2964 = vmatpush2.bf16.msra.mxu0 %v2196
        %2965 = vmatprep.subr.bf16.mxu0 %v2188
        %2966 = vmatpush2.bf16.msra.mxu0 %v2187
        %2967 = vmatprep.subr.bf16.mxu0 %v2179
        %2968 = vmatpush2.bf16.msra.mxu0 %v2178
        %2969 = vmatprep.subr.bf16.mxu0 %v2170
        %2970 = vmatpush2.bf16.msra.mxu0 %v2169
        %2971 = vmatprep.subr.bf16.mxu0 %v2161
        %2972 = vmatpush2.bf16.msra.mxu0 %v2160
        %2973 = vmatprep.subr.bf16.mxu0 %v2152
        %2974 = vmatpush2.bf16.msra.mxu0 %v2151
        %2975 = vmatprep.mubr.bf16.mxu0 %v724
        %2976 = vmatmul.mubr.bf16.gmra.mxu0 %v723
        %v2977 = vpop.f32.mrf.mxu0
        %v2978 = vadd.f32 0.0, %v2977
        %v2979 = vpop.f32.mrf.mxu0
        %v2980 = vadd.f32 0.0, %v2979
        %v2981 = vpop.f32.mrf.mxu0
        %v2982 = vpop.f32.mrf.mxu0
        %2983 = vdwg.mxu0
        %2984 = vmatprep.subr.bf16.mxu0 %v2287
        %2985 = vmatpush1.bf16.msra.mxu0 %v2286
        %2986 = vmatprep.subr.bf16.mxu0 %v2278
        %2987 = vmatpush1.bf16.msra.mxu0 %v2277
        %2988 = vmatprep.subr.bf16.mxu0 %v2269
        %2989 = vmatpush1.bf16.msra.mxu0 %v2268
        %2990 = vmatprep.subr.bf16.mxu0 %v2260
        %2991 = vmatpush1.bf16.msra.mxu0 %v2259
        %2992 = vmatprep.subr.bf16.mxu0 %v2251
        %2993 = vmatpush1.bf16.msra.mxu0 %v2250
        %2994 = vmatprep.subr.bf16.mxu0 %v2242
        %2995 = vmatpush1.bf16.msra.mxu0 %v2241
        %2996 = vmatprep.subr.bf16.mxu0 %v2233
        %2997 = vmatpush1.bf16.msra.mxu0 %v2232
        %2998 = vmatprep.subr.bf16.mxu0 %v2224
        %2999 = vmatpush1.bf16.msra.mxu0 %v2223
        %3000 = vmatprep.subr.bf16.mxu0 %v2359
        %3001 = vmatpush2.bf16.msra.mxu0 %v2358
        %3002 = vmatprep.subr.bf16.mxu0 %v2350
        %3003 = vmatpush2.bf16.msra.mxu0 %v2349
        %3004 = vmatprep.subr.bf16.mxu0 %v2341
        %3005 = vmatpush2.bf16.msra.mxu0 %v2340
        %3006 = vmatprep.subr.bf16.mxu0 %v2332
        %3007 = vmatpush2.bf16.msra.mxu0 %v2331
        %3008 = vmatprep.subr.bf16.mxu0 %v2323
        %3009 = vmatpush2.bf16.msra.mxu0 %v2322
        %3010 = vmatprep.subr.bf16.mxu0 %v2314
        %3011 = vmatpush2.bf16.msra.mxu0 %v2313
        %3012 = vmatprep.subr.bf16.mxu0 %v2305
        %3013 = vmatpush2.bf16.msra.mxu0 %v2304
        %3014 = vmatprep.subr.bf16.mxu0 %v2296
        %3015 = vmatpush2.bf16.msra.mxu0 %v2295
        %3016 = vmatprep.mubr.bf16.mxu0 %v726
        %3017 = vmatmul.mubr.bf16.gmra.mxu0 %v725
        %v3018 = vpop.f32.mrf.mxu0
        %v3019 = vadd.f32 %v2978, %v3018
        %v3020 = vpop.f32.mrf.mxu0
        %v3021 = vadd.f32 %v2980, %v3020
        %v3022 = vpop.f32.mrf.mxu0
        %v3023 = vpop.f32.mrf.mxu0
        %3024 = vdwg.mxu0
        %3025 = vmatprep.subr.bf16.mxu0 %v2431
        %3026 = vmatpush1.bf16.msra.mxu0 %v2430
        %3027 = vmatprep.subr.bf16.mxu0 %v2422
        %3028 = vmatpush1.bf16.msra.mxu0 %v2421
        %3029 = vmatprep.subr.bf16.mxu0 %v2413
        %3030 = vmatpush1.bf16.msra.mxu0 %v2412
        %3031 = vmatprep.subr.bf16.mxu0 %v2404
        %3032 = vmatpush1.bf16.msra.mxu0 %v2403
        %3033 = vmatprep.subr.bf16.mxu0 %v2395
        %3034 = vmatpush1.bf16.msra.mxu0 %v2394
        %3035 = vmatprep.subr.bf16.mxu0 %v2386
        %3036 = vmatpush1.bf16.msra.mxu0 %v2385
        %3037 = vmatprep.subr.bf16.mxu0 %v2377
        %3038 = vmatpush1.bf16.msra.mxu0 %v2376
        %3039 = vmatprep.subr.bf16.mxu0 %v2368
        %3040 = vmatpush1.bf16.msra.mxu0 %v2367
        %3041 = vmatprep.subr.bf16.mxu0 %v2503
        %3042 = vmatpush2.bf16.msra.mxu0 %v2502
        %3043 = vmatprep.subr.bf16.mxu0 %v2494
        %3044 = vmatpush2.bf16.msra.mxu0 %v2493
        %3045 = vmatprep.subr.bf16.mxu0 %v2485
        %3046 = vmatpush2.bf16.msra.mxu0 %v2484
        %3047 = vmatprep.subr.bf16.mxu0 %v2476
        %3048 = vmatpush2.bf16.msra.mxu0 %v2475
        %3049 = vmatprep.subr.bf16.mxu0 %v2467
        %3050 = vmatpush2.bf16.msra.mxu0 %v2466
        %3051 = vmatprep.subr.bf16.mxu0 %v2458
        %3052 = vmatpush2.bf16.msra.mxu0 %v2457
        %3053 = vmatprep.subr.bf16.mxu0 %v2449
        %3054 = vmatpush2.bf16.msra.mxu0 %v2448
        %3055 = vmatprep.subr.bf16.mxu0 %v2440
        %3056 = vmatpush2.bf16.msra.mxu0 %v2439
        %3057 = vmatprep.mubr.bf16.mxu0 %v728
        %3058 = vmatmul.mubr.bf16.gmra.mxu0 %v727
        %v3059 = vpop.f32.mrf.mxu0
        %v3060 = vadd.f32 %v3019, %v3059
        %v3061 = vpop.f32.mrf.mxu0
        %v3062 = vadd.f32 %v3021, %v3061
        %v3063 = vpop.f32.mrf.mxu0
        %v3064 = vpop.f32.mrf.mxu0
        %3065 = vdwg.mxu0
        %3066 = vmatprep.subr.bf16.mxu0 %v2145
        %3067 = vmatpush1.bf16.msra.mxu0 %v2144
        %3068 = vmatprep.subr.bf16.mxu0 %v2136
        %3069 = vmatpush1.bf16.msra.mxu0 %v2135
        %3070 = vmatprep.subr.bf16.mxu0 %v2127
        %3071 = vmatpush1.bf16.msra.mxu0 %v2126
        %3072 = vmatprep.subr.bf16.mxu0 %v2118
        %3073 = vmatpush1.bf16.msra.mxu0 %v2117
        %3074 = vmatprep.subr.bf16.mxu0 %v2109
        %3075 = vmatpush1.bf16.msra.mxu0 %v2108
        %3076 = vmatprep.subr.bf16.mxu0 %v2100
        %3077 = vmatpush1.bf16.msra.mxu0 %v2099
        %3078 = vmatprep.subr.bf16.mxu0 %v2091
        %3079 = vmatpush1.bf16.msra.mxu0 %v2090
        %3080 = vmatprep.subr.bf16.mxu0 %v2082
        %3081 = vmatpush1.bf16.msra.mxu0 %v2081
        %3082 = vmatprep.subr.bf16.mxu0 %v2217
        %3083 = vmatpush2.bf16.msra.mxu0 %v2216
        %3084 = vmatprep.subr.bf16.mxu0 %v2208
        %3085 = vmatpush2.bf16.msra.mxu0 %v2207
        %3086 = vmatprep.subr.bf16.mxu0 %v2199
        %3087 = vmatpush2.bf16.msra.mxu0 %v2198
        %3088 = vmatprep.subr.bf16.mxu0 %v2190
        %3089 = vmatpush2.bf16.msra.mxu0 %v2189
        %3090 = vmatprep.subr.bf16.mxu0 %v2181
        %3091 = vmatpush2.bf16.msra.mxu0 %v2180
        %3092 = vmatprep.subr.bf16.mxu0 %v2172
        %3093 = vmatpush2.bf16.msra.mxu0 %v2171
        %3094 = vmatprep.subr.bf16.mxu0 %v2163
        %3095 = vmatpush2.bf16.msra.mxu0 %v2162
        %3096 = vmatprep.subr.bf16.mxu0 %v2154
        %3097 = vmatpush2.bf16.msra.mxu0 %v2153
        %3098 = vmatprep.mubr.bf16.mxu0 %v724
        %3099 = vmatmul.mubr.bf16.gmra.mxu0 %v723
        %v3100 = vpop.f32.mrf.mxu0
        %v3101 = vadd.f32 0.0, %v3100
        %v3102 = vpop.f32.mrf.mxu0
        %v3103 = vadd.f32 0.0, %v3102
        %v3104 = vpop.f32.mrf.mxu0
        %v3105 = vpop.f32.mrf.mxu0
        %3106 = vdwg.mxu0
        %3107 = vmatprep.subr.bf16.mxu0 %v2289
        %3108 = vmatpush1.bf16.msra.mxu0 %v2288
        %3109 = vmatprep.subr.bf16.mxu0 %v2280
        %3110 = vmatpush1.bf16.msra.mxu0 %v2279
        %3111 = vmatprep.subr.bf16.mxu0 %v2271
        %3112 = vmatpush1.bf16.msra.mxu0 %v2270
        %3113 = vmatprep.subr.bf16.mxu0 %v2262
        %3114 = vmatpush1.bf16.msra.mxu0 %v2261
        %3115 = vmatprep.subr.bf16.mxu0 %v2253
        %3116 = vmatpush1.bf16.msra.mxu0 %v2252
        %3117 = vmatprep.subr.bf16.mxu0 %v2244
        %3118 = vmatpush1.bf16.msra.mxu0 %v2243
        %3119 = vmatprep.subr.bf16.mxu0 %v2235
        %3120 = vmatpush1.bf16.msra.mxu0 %v2234
        %3121 = vmatprep.subr.bf16.mxu0 %v2226
        %3122 = vmatpush1.bf16.msra.mxu0 %v2225
        %3123 = vmatprep.subr.bf16.mxu0 %v2361
        %3124 = vmatpush2.bf16.msra.mxu0 %v2360
        %3125 = vmatprep.subr.bf16.mxu0 %v2352
        %3126 = vmatpush2.bf16.msra.mxu0 %v2351
        %3127 = vmatprep.subr.bf16.mxu0 %v2343
        %3128 = vmatpush2.bf16.msra.mxu0 %v2342
        %3129 = vmatprep.subr.bf16.mxu0 %v2334
        %3130 = vmatpush2.bf16.msra.mxu0 %v2333
        %3131 = vmatprep.subr.bf16.mxu0 %v2325
        %3132 = vmatpush2.bf16.msra.mxu0 %v2324
        %3133 = vmatprep.subr.bf16.mxu0 %v2316
        %3134 = vmatpush2.bf16.msra.mxu0 %v2315
        %3135 = vmatprep.subr.bf16.mxu0 %v2307
        %3136 = vmatpush2.bf16.msra.mxu0 %v2306
        %3137 = vmatprep.subr.bf16.mxu0 %v2298
        %3138 = vmatpush2.bf16.msra.mxu0 %v2297
        %3139 = vmatprep.mubr.bf16.mxu0 %v726
        %3140 = vmatmul.mubr.bf16.gmra.mxu0 %v725
        %v3141 = vpop.f32.mrf.mxu0
        %v3142 = vadd.f32 %v3101, %v3141
        %v3143 = vpop.f32.mrf.mxu0
        %v3144 = vadd.f32 %v3103, %v3143
        %v3145 = vpop.f32.mrf.mxu0
        %v3146 = vpop.f32.mrf.mxu0
        %3147 = vdwg.mxu0
        %3148 = vmatprep.subr.bf16.mxu0 %v2433
        %3149 = vmatpush1.bf16.msra.mxu0 %v2432
        %3150 = vmatprep.subr.bf16.mxu0 %v2424
        %3151 = vmatpush1.bf16.msra.mxu0 %v2423
        %3152 = vmatprep.subr.bf16.mxu0 %v2415
        %3153 = vmatpush1.bf16.msra.mxu0 %v2414
        %3154 = vmatprep.subr.bf16.mxu0 %v2406
        %3155 = vmatpush1.bf16.msra.mxu0 %v2405
        %3156 = vmatprep.subr.bf16.mxu0 %v2397
        %3157 = vmatpush1.bf16.msra.mxu0 %v2396
        %3158 = vmatprep.subr.bf16.mxu0 %v2388
        %3159 = vmatpush1.bf16.msra.mxu0 %v2387
        %3160 = vmatprep.subr.bf16.mxu0 %v2379
        %3161 = vmatpush1.bf16.msra.mxu0 %v2378
        %3162 = vmatprep.subr.bf16.mxu0 %v2370
        %3163 = vmatpush1.bf16.msra.mxu0 %v2369
        %3164 = vmatprep.subr.bf16.mxu0 %v2505
        %3165 = vmatpush2.bf16.msra.mxu0 %v2504
        %3166 = vmatprep.subr.bf16.mxu0 %v2496
        %3167 = vmatpush2.bf16.msra.mxu0 %v2495
        %3168 = vmatprep.subr.bf16.mxu0 %v2487
        %3169 = vmatpush2.bf16.msra.mxu0 %v2486
        %3170 = vmatprep.subr.bf16.mxu0 %v2478
        %3171 = vmatpush2.bf16.msra.mxu0 %v2477
        %3172 = vmatprep.subr.bf16.mxu0 %v2469
        %3173 = vmatpush2.bf16.msra.mxu0 %v2468
        %3174 = vmatprep.subr.bf16.mxu0 %v2460
        %3175 = vmatpush2.bf16.msra.mxu0 %v2459
        %3176 = vmatprep.subr.bf16.mxu0 %v2451
        %3177 = vmatpush2.bf16.msra.mxu0 %v2450
        %3178 = vmatprep.subr.bf16.mxu0 %v2442
        %3179 = vmatpush2.bf16.msra.mxu0 %v2441
        %3180 = vmatprep.mubr.bf16.mxu0 %v728
        %3181 = vmatmul.mubr.bf16.gmra.mxu0 %v727
        %v3182 = vpop.f32.mrf.mxu0
        %v3183 = vadd.f32 %v3142, %v3182
        %v3184 = vpop.f32.mrf.mxu0
        %v3185 = vadd.f32 %v3144, %v3184
        %v3186 = vpop.f32.mrf.mxu0
        %v3187 = vpop.f32.mrf.mxu0
        %3188 = vdwg.mxu0
        %3189 = vmatprep.subr.bf16.mxu0 %v2147
        %3190 = vmatpush1.bf16.msra.mxu0 %v2146
        %3191 = vmatprep.subr.bf16.mxu0 %v2138
        %3192 = vmatpush1.bf16.msra.mxu0 %v2137
        %3193 = vmatprep.subr.bf16.mxu0 %v2129
        %3194 = vmatpush1.bf16.msra.mxu0 %v2128
        %3195 = vmatprep.subr.bf16.mxu0 %v2120
        %3196 = vmatpush1.bf16.msra.mxu0 %v2119
        %3197 = vmatprep.subr.bf16.mxu0 %v2111
        %3198 = vmatpush1.bf16.msra.mxu0 %v2110
        %3199 = vmatprep.subr.bf16.mxu0 %v2102
        %3200 = vmatpush1.bf16.msra.mxu0 %v2101
        %3201 = vmatprep.subr.bf16.mxu0 %v2093
        %3202 = vmatpush1.bf16.msra.mxu0 %v2092
        %3203 = vmatprep.subr.bf16.mxu0 %v2084
        %3204 = vmatpush1.bf16.msra.mxu0 %v2083
        %3205 = vmatprep.subr.bf16.mxu0 %v2219
        %3206 = vmatpush2.bf16.msra.mxu0 %v2218
        %3207 = vmatprep.subr.bf16.mxu0 %v2210
        %3208 = vmatpush2.bf16.msra.mxu0 %v2209
        %3209 = vmatprep.subr.bf16.mxu0 %v2201
        %3210 = vmatpush2.bf16.msra.mxu0 %v2200
        %3211 = vmatprep.subr.bf16.mxu0 %v2192
        %3212 = vmatpush2.bf16.msra.mxu0 %v2191
        %3213 = vmatprep.subr.bf16.mxu0 %v2183
        %3214 = vmatpush2.bf16.msra.mxu0 %v2182
        %3215 = vmatprep.subr.bf16.mxu0 %v2174
        %3216 = vmatpush2.bf16.msra.mxu0 %v2173
        %3217 = vmatprep.subr.bf16.mxu0 %v2165
        %3218 = vmatpush2.bf16.msra.mxu0 %v2164
        %3219 = vmatprep.subr.bf16.mxu0 %v2156
        %3220 = vmatpush2.bf16.msra.mxu0 %v2155
        %3221 = vmatprep.mubr.bf16.mxu0 %v724
        %3222 = vmatmul.mubr.bf16.gmra.mxu0 %v723
        %v3223 = vpop.f32.mrf.mxu0
        %v3224 = vadd.f32 0.0, %v3223
        %v3225 = vpop.f32.mrf.mxu0
        %v3226 = vadd.f32 0.0, %v3225
        %v3227 = vpop.f32.mrf.mxu0
        %v3228 = vpop.f32.mrf.mxu0
        %3229 = vdwg.mxu0
        %3230 = vmatprep.subr.bf16.mxu0 %v2291
        %3231 = vmatpush1.bf16.msra.mxu0 %v2290
        %3232 = vmatprep.subr.bf16.mxu0 %v2282
        %3233 = vmatpush1.bf16.msra.mxu0 %v2281
        %3234 = vmatprep.subr.bf16.mxu0 %v2273
        %3235 = vmatpush1.bf16.msra.mxu0 %v2272
        %3236 = vmatprep.subr.bf16.mxu0 %v2264
        %3237 = vmatpush1.bf16.msra.mxu0 %v2263
        %3238 = vmatprep.subr.bf16.mxu0 %v2255
        %3239 = vmatpush1.bf16.msra.mxu0 %v2254
        %3240 = vmatprep.subr.bf16.mxu0 %v2246
        %3241 = vmatpush1.bf16.msra.mxu0 %v2245
        %3242 = vmatprep.subr.bf16.mxu0 %v2237
        %3243 = vmatpush1.bf16.msra.mxu0 %v2236
        %3244 = vmatprep.subr.bf16.mxu0 %v2228
        %3245 = vmatpush1.bf16.msra.mxu0 %v2227
        %3246 = vmatprep.subr.bf16.mxu0 %v2363
        %3247 = vmatpush2.bf16.msra.mxu0 %v2362
        %3248 = vmatprep.subr.bf16.mxu0 %v2354
        %3249 = vmatpush2.bf16.msra.mxu0 %v2353
        %3250 = vmatprep.subr.bf16.mxu0 %v2345
        %3251 = vmatpush2.bf16.msra.mxu0 %v2344
        %3252 = vmatprep.subr.bf16.mxu0 %v2336
        %3253 = vmatpush2.bf16.msra.mxu0 %v2335
        %3254 = vmatprep.subr.bf16.mxu0 %v2327
        %3255 = vmatpush2.bf16.msra.mxu0 %v2326
        %3256 = vmatprep.subr.bf16.mxu0 %v2318
        %3257 = vmatpush2.bf16.msra.mxu0 %v2317
        %3258 = vmatprep.subr.bf16.mxu0 %v2309
        %3259 = vmatpush2.bf16.msra.mxu0 %v2308
        %3260 = vmatprep.subr.bf16.mxu0 %v2300
        %3261 = vmatpush2.bf16.msra.mxu0 %v2299
        %3262 = vmatprep.mubr.bf16.mxu0 %v726
        %3263 = vmatmul.mubr.bf16.gmra.mxu0 %v725
        %v3264 = vpop.f32.mrf.mxu0
        %v3265 = vadd.f32 %v3224, %v3264
        %v3266 = vpop.f32.mrf.mxu0
        %v3267 = vadd.f32 %v3226, %v3266
        %v3268 = vpop.f32.mrf.mxu0
        %v3269 = vpop.f32.mrf.mxu0
        %3270 = vdwg.mxu0
        %3271 = vmatprep.subr.bf16.mxu0 %v2435
        %3272 = vmatpush1.bf16.msra.mxu0 %v2434
        %3273 = vmatprep.subr.bf16.mxu0 %v2426
        %3274 = vmatpush1.bf16.msra.mxu0 %v2425
        %3275 = vmatprep.subr.bf16.mxu0 %v2417
        %3276 = vmatpush1.bf16.msra.mxu0 %v2416
        %3277 = vmatprep.subr.bf16.mxu0 %v2408
        %3278 = vmatpush1.bf16.msra.mxu0 %v2407
        %3279 = vmatprep.subr.bf16.mxu0 %v2399
        %3280 = vmatpush1.bf16.msra.mxu0 %v2398
        %3281 = vmatprep.subr.bf16.mxu0 %v2390
        %3282 = vmatpush1.bf16.msra.mxu0 %v2389
        %3283 = vmatprep.subr.bf16.mxu0 %v2381
        %3284 = vmatpush1.bf16.msra.mxu0 %v2380
        %3285 = vmatprep.subr.bf16.mxu0 %v2372
        %3286 = vmatpush1.bf16.msra.mxu0 %v2371
        %3287 = vmatprep.subr.bf16.mxu0 %v2507
        %3288 = vmatpush2.bf16.msra.mxu0 %v2506
        %3289 = vmatprep.subr.bf16.mxu0 %v2498
        %3290 = vmatpush2.bf16.msra.mxu0 %v2497
        %3291 = vmatprep.subr.bf16.mxu0 %v2489
        %3292 = vmatpush2.bf16.msra.mxu0 %v2488
        %3293 = vmatprep.subr.bf16.mxu0 %v2480
        %3294 = vmatpush2.bf16.msra.mxu0 %v2479
        %3295 = vmatprep.subr.bf16.mxu0 %v2471
        %3296 = vmatpush2.bf16.msra.mxu0 %v2470
        %3297 = vmatprep.subr.bf16.mxu0 %v2462
        %3298 = vmatpush2.bf16.msra.mxu0 %v2461
        %3299 = vmatprep.subr.bf16.mxu0 %v2453
        %3300 = vmatpush2.bf16.msra.mxu0 %v2452
        %3301 = vmatprep.subr.bf16.mxu0 %v2444
        %3302 = vmatpush2.bf16.msra.mxu0 %v2443
        %3303 = vmatprep.mubr.bf16.mxu0 %v728
        %3304 = vmatmul.mubr.bf16.gmra.mxu0 %v727
        %v3305 = vpop.f32.mrf.mxu0
        %v3306 = vadd.f32 %v3265, %v3305
        %v3307 = vpop.f32.mrf.mxu0
        %v3308 = vadd.f32 %v3267, %v3307
        %v3309 = vpop.f32.mrf.mxu0
        %v3310 = vpop.f32.mrf.mxu0
        %3311 = vdwg.mxu0
        %3312 = vmatprep.subr.bf16.mxu0 %v2149
        %3313 = vmatpush1.bf16.msra.mxu0 %v2148
        %3314 = vmatprep.subr.bf16.mxu0 %v2140
        %3315 = vmatpush1.bf16.msra.mxu0 %v2139
        %3316 = vmatprep.subr.bf16.mxu0 %v2131
        %3317 = vmatpush1.bf16.msra.mxu0 %v2130
        %3318 = vmatprep.subr.bf16.mxu0 %v2122
        %3319 = vmatpush1.bf16.msra.mxu0 %v2121
        %3320 = vmatprep.subr.bf16.mxu0 %v2113
        %3321 = vmatpush1.bf16.msra.mxu0 %v2112
        %3322 = vmatprep.subr.bf16.mxu0 %v2104
        %3323 = vmatpush1.bf16.msra.mxu0 %v2103
        %3324 = vmatprep.subr.bf16.mxu0 %v2095
        %3325 = vmatpush1.bf16.msra.mxu0 %v2094
        %3326 = vmatprep.subr.bf16.mxu0 %v2086
        %3327 = vmatpush1.bf16.msra.mxu0 %v2085
        %3328 = vmatprep.subr.bf16.mxu0 %v2221
        %3329 = vmatpush2.bf16.msra.mxu0 %v2220
        %3330 = vmatprep.subr.bf16.mxu0 %v2212
        %3331 = vmatpush2.bf16.msra.mxu0 %v2211
        %3332 = vmatprep.subr.bf16.mxu0 %v2203
        %3333 = vmatpush2.bf16.msra.mxu0 %v2202
        %3334 = vmatprep.subr.bf16.mxu0 %v2194
        %3335 = vmatpush2.bf16.msra.mxu0 %v2193
        %3336 = vmatprep.subr.bf16.mxu0 %v2185
        %3337 = vmatpush2.bf16.msra.mxu0 %v2184
        %3338 = vmatprep.subr.bf16.mxu0 %v2176
        %3339 = vmatpush2.bf16.msra.mxu0 %v2175
        %3340 = vmatprep.subr.bf16.mxu0 %v2167
        %3341 = vmatpush2.bf16.msra.mxu0 %v2166
        %3342 = vmatprep.subr.bf16.mxu0 %v2158
        %3343 = vmatpush2.bf16.msra.mxu0 %v2157
        %3344 = vmatprep.mubr.bf16.mxu0 %v724
        %3345 = vmatmul.mubr.bf16.gmra.mxu0 %v723
        %v3346 = vpop.f32.mrf.mxu0
        %v3347 = vadd.f32 0.0, %v3346
        %v3348 = vpop.f32.mrf.mxu0
        %v3349 = vadd.f32 0.0, %v3348
        %v3350 = vpop.f32.mrf.mxu0
        %v3351 = vpop.f32.mrf.mxu0
        %3352 = vdwg.mxu0
        %3353 = vmatprep.subr.bf16.mxu0 %v2293
        %3354 = vmatpush1.bf16.msra.mxu0 %v2292
        %3355 = vmatprep.subr.bf16.mxu0 %v2284
        %3356 = vmatpush1.bf16.msra.mxu0 %v2283
        %3357 = vmatprep.subr.bf16.mxu0 %v2275
        %3358 = vmatpush1.bf16.msra.mxu0 %v2274
        %3359 = vmatprep.subr.bf16.mxu0 %v2266
        %3360 = vmatpush1.bf16.msra.mxu0 %v2265
        %3361 = vmatprep.subr.bf16.mxu0 %v2257
        %3362 = vmatpush1.bf16.msra.mxu0 %v2256
        %3363 = vmatprep.subr.bf16.mxu0 %v2248
        %3364 = vmatpush1.bf16.msra.mxu0 %v2247
        %3365 = vmatprep.subr.bf16.mxu0 %v2239
        %3366 = vmatpush1.bf16.msra.mxu0 %v2238
        %3367 = vmatprep.subr.bf16.mxu0 %v2230
        %3368 = vmatpush1.bf16.msra.mxu0 %v2229
        %3369 = vmatprep.subr.bf16.mxu0 %v2365
        %3370 = vmatpush2.bf16.msra.mxu0 %v2364
        %3371 = vmatprep.subr.bf16.mxu0 %v2356
        %3372 = vmatpush2.bf16.msra.mxu0 %v2355
        %3373 = vmatprep.subr.bf16.mxu0 %v2347
        %3374 = vmatpush2.bf16.msra.mxu0 %v2346
        %3375 = vmatprep.subr.bf16.mxu0 %v2338
        %3376 = vmatpush2.bf16.msra.mxu0 %v2337
        %3377 = vmatprep.subr.bf16.mxu0 %v2329
        %3378 = vmatpush2.bf16.msra.mxu0 %v2328
        %3379 = vmatprep.subr.bf16.mxu0 %v2320
        %3380 = vmatpush2.bf16.msra.mxu0 %v2319
        %3381 = vmatprep.subr.bf16.mxu0 %v2311
        %3382 = vmatpush2.bf16.msra.mxu0 %v2310
        %3383 = vmatprep.subr.bf16.mxu0 %v2302
        %3384 = vmatpush2.bf16.msra.mxu0 %v2301
        %3385 = vmatprep.mubr.bf16.mxu0 %v726
        %3386 = vmatmul.mubr.bf16.gmra.mxu0 %v725
        %v3387 = vpop.f32.mrf.mxu0
        %v3388 = vadd.f32 %v3347, %v3387
        %v3389 = vpop.f32.mrf.mxu0
        %v3390 = vadd.f32 %v3349, %v3389
        %v3391 = vpop.f32.mrf.mxu0
        %v3392 = vpop.f32.mrf.mxu0
        %3393 = vdwg.mxu0
        %3394 = vmatprep.subr.bf16.mxu0 %v2437
        %3395 = vmatpush1.bf16.msra.mxu0 %v2436
        %3396 = vmatprep.subr.bf16.mxu0 %v2428
        %3397 = vmatpush1.bf16.msra.mxu0 %v2427
        %3398 = vmatprep.subr.bf16.mxu0 %v2419
        %3399 = vmatpush1.bf16.msra.mxu0 %v2418
        %3400 = vmatprep.subr.bf16.mxu0 %v2410
        %3401 = vmatpush1.bf16.msra.mxu0 %v2409
        %3402 = vmatprep.subr.bf16.mxu0 %v2401
        %3403 = vmatpush1.bf16.msra.mxu0 %v2400
        %3404 = vmatprep.subr.bf16.mxu0 %v2392
        %3405 = vmatpush1.bf16.msra.mxu0 %v2391
        %3406 = vmatprep.subr.bf16.mxu0 %v2383
        %3407 = vmatpush1.bf16.msra.mxu0 %v2382
        %3408 = vmatprep.subr.bf16.mxu0 %v2374
        %3409 = vmatpush1.bf16.msra.mxu0 %v2373
        %3410 = vmatprep.subr.bf16.mxu0 %v2509
        %3411 = vmatpush2.bf16.msra.mxu0 %v2508
        %3412 = vmatprep.subr.bf16.mxu0 %v2500
        %3413 = vmatpush2.bf16.msra.mxu0 %v2499
        %3414 = vmatprep.subr.bf16.mxu0 %v2491
        %3415 = vmatpush2.bf16.msra.mxu0 %v2490
        %3416 = vmatprep.subr.bf16.mxu0 %v2482
        %3417 = vmatpush2.bf16.msra.mxu0 %v2481
        %3418 = vmatprep.subr.bf16.mxu0 %v2473
        %3419 = vmatpush2.bf16.msra.mxu0 %v2472
        %3420 = vmatprep.subr.bf16.mxu0 %v2464
        %3421 = vmatpush2.bf16.msra.mxu0 %v2463
        %3422 = vmatprep.subr.bf16.mxu0 %v2455
        %3423 = vmatpush2.bf16.msra.mxu0 %v2454
        %3424 = vmatprep.subr.bf16.mxu0 %v2446
        %3425 = vmatpush2.bf16.msra.mxu0 %v2445
        %3426 = vmatprep.mubr.bf16.mxu0 %v728
        %3427 = vmatmul.mubr.bf16.gmra.mxu0 %v727
        %v3428 = vpop.f32.mrf.mxu0
        %v3429 = vadd.f32 %v3388, %v3428
        %v3430 = vpop.f32.mrf.mxu0
        %v3431 = vadd.f32 %v3390, %v3430
        %v3432 = vpop.f32.mrf.mxu0
        %v3433 = vpop.f32.mrf.mxu0
        %3434 = vdwg.mxu0
        %3435 = vmatprep.subr.bf16.mxu0 0
        %3436 = vmatpush1.bf16.msra.mxu0 %v2150
        %3437 = vmatprep.subr.bf16.mxu0 0
        %3438 = vmatpush1.bf16.msra.mxu0 %v2141
        %3439 = vmatprep.subr.bf16.mxu0 0
        %3440 = vmatpush1.bf16.msra.mxu0 %v2132
        %3441 = vmatprep.subr.bf16.mxu0 0
        %3442 = vmatpush1.bf16.msra.mxu0 %v2123
        %3443 = vmatprep.subr.bf16.mxu0 0
        %3444 = vmatpush1.bf16.msra.mxu0 %v2114
        %3445 = vmatprep.subr.bf16.mxu0 0
        %3446 = vmatpush1.bf16.msra.mxu0 %v2105
        %3447 = vmatprep.subr.bf16.mxu0 0
        %3448 = vmatpush1.bf16.msra.mxu0 %v2096
        %3449 = vmatprep.subr.bf16.mxu0 0
        %3450 = vmatpush1.bf16.msra.mxu0 %v2087
        %3451 = vmatprep.subr.bf16.mxu0 0
        %3452 = vmatpush2.bf16.msra.mxu0 %v2222
        %3453 = vmatprep.subr.bf16.mxu0 0
        %3454 = vmatpush2.bf16.msra.mxu0 %v2213
        %3455 = vmatprep.subr.bf16.mxu0 0
        %3456 = vmatpush2.bf16.msra.mxu0 %v2204
        %3457 = vmatprep.subr.bf16.mxu0 0
        %3458 = vmatpush2.bf16.msra.mxu0 %v2195
        %3459 = vmatprep.subr.bf16.mxu0 0
        %3460 = vmatpush2.bf16.msra.mxu0 %v2186
        %3461 = vmatprep.subr.bf16.mxu0 0
        %3462 = vmatpush2.bf16.msra.mxu0 %v2177
        %3463 = vmatprep.subr.bf16.mxu0 0
        %3464 = vmatpush2.bf16.msra.mxu0 %v2168
        %3465 = vmatprep.subr.bf16.mxu0 0
        %3466 = vmatpush2.bf16.msra.mxu0 %v2159
        %3467 = vmatprep.mubr.bf16.mxu0 %v724
        %3468 = vmatmul.mubr.bf16.gmra.mxu0 %v723
        %v3469 = vpop.f32.mrf.mxu0
        %v3470 = vadd.f32 0.0, %v3469
        %v3471 = vpop.f32.mrf.mxu0
        %v3472 = vpop.f32.mrf.mxu0
        %v3473 = vpop.f32.mrf.mxu0
        %3474 = vdwg.mxu0
        %3475 = vmatprep.subr.bf16.mxu0 0
        %3476 = vmatpush1.bf16.msra.mxu0 %v2294
        %3477 = vmatprep.subr.bf16.mxu0 0
        %3478 = vmatpush1.bf16.msra.mxu0 %v2285
        %3479 = vmatprep.subr.bf16.mxu0 0
        %3480 = vmatpush1.bf16.msra.mxu0 %v2276
        %3481 = vmatprep.subr.bf16.mxu0 0
        %3482 = vmatpush1.bf16.msra.mxu0 %v2267
        %3483 = vmatprep.subr.bf16.mxu0 0
        %3484 = vmatpush1.bf16.msra.mxu0 %v2258
        %3485 = vmatprep.subr.bf16.mxu0 0
        %3486 = vmatpush1.bf16.msra.mxu0 %v2249
        %3487 = vmatprep.subr.bf16.mxu0 0
        %3488 = vmatpush1.bf16.msra.mxu0 %v2240
        %3489 = vmatprep.subr.bf16.mxu0 0
        %3490 = vmatpush1.bf16.msra.mxu0 %v2231
        %3491 = vmatprep.subr.bf16.mxu0 0
        %3492 = vmatpush2.bf16.msra.mxu0 %v2366
        %3493 = vmatprep.subr.bf16.mxu0 0
        %3494 = vmatpush2.bf16.msra.mxu0 %v2357
        %3495 = vmatprep.subr.bf16.mxu0 0
        %3496 = vmatpush2.bf16.msra.mxu0 %v2348
        %3497 = vmatprep.subr.bf16.mxu0 0
        %3498 = vmatpush2.bf16.msra.mxu0 %v2339
        %3499 = vmatprep.subr.bf16.mxu0 0
        %3500 = vmatpush2.bf16.msra.mxu0 %v2330
        %3501 = vmatprep.subr.bf16.mxu0 0
        %3502 = vmatpush2.bf16.msra.mxu0 %v2321
        %3503 = vmatprep.subr.bf16.mxu0 0
        %3504 = vmatpush2.bf16.msra.mxu0 %v2312
        %3505 = vmatprep.subr.bf16.mxu0 0
        %3506 = vmatpush2.bf16.msra.mxu0 %v2303
        %3507 = vmatprep.mubr.bf16.mxu0 %v726
        %3508 = vmatmul.mubr.bf16.gmra.mxu0 %v725
        %v3509 = vpop.f32.mrf.mxu0
        %v3510 = vadd.f32 %v3470, %v3509
        %v3511 = vpop.f32.mrf.mxu0
        %v3512 = vpop.f32.mrf.mxu0
        %v3513 = vpop.f32.mrf.mxu0
        %3514 = vdwg.mxu0
        %3515 = vmatprep.subr.bf16.mxu0 0
        %3516 = vmatpush1.bf16.msra.mxu0 %v2438
        %3517 = vmatprep.subr.bf16.mxu0 0
        %3518 = vmatpush1.bf16.msra.mxu0 %v2429
        %3519 = vmatprep.subr.bf16.mxu0 0
        %3520 = vmatpush1.bf16.msra.mxu0 %v2420
        %3521 = vmatprep.subr.bf16.mxu0 0
        %3522 = vmatpush1.bf16.msra.mxu0 %v2411
        %3523 = vmatprep.subr.bf16.mxu0 0
        %3524 = vmatpush1.bf16.msra.mxu0 %v2402
        %3525 = vmatprep.subr.bf16.mxu0 0
        %3526 = vmatpush1.bf16.msra.mxu0 %v2393
        %3527 = vmatprep.subr.bf16.mxu0 0
        %3528 = vmatpush1.bf16.msra.mxu0 %v2384
        %3529 = vmatprep.subr.bf16.mxu0 0
        %3530 = vmatpush1.bf16.msra.mxu0 %v2375
        %3531 = vmatprep.subr.bf16.mxu0 0
        %3532 = vmatpush2.bf16.msra.mxu0 %v2510
        %3533 = vmatprep.subr.bf16.mxu0 0
        %3534 = vmatpush2.bf16.msra.mxu0 %v2501
        %3535 = vmatprep.subr.bf16.mxu0 0
        %3536 = vmatpush2.bf16.msra.mxu0 %v2492
        %3537 = vmatprep.subr.bf16.mxu0 0
        %3538 = vmatpush2.bf16.msra.mxu0 %v2483
        %3539 = vmatprep.subr.bf16.mxu0 0
        %3540 = vmatpush2.bf16.msra.mxu0 %v2474
        %3541 = vmatprep.subr.bf16.mxu0 0
        %3542 = vmatpush2.bf16.msra.mxu0 %v2465
        %3543 = vmatprep.subr.bf16.mxu0 0
        %3544 = vmatpush2.bf16.msra.mxu0 %v2456
        %3545 = vmatprep.subr.bf16.mxu0 0
        %3546 = vmatpush2.bf16.msra.mxu0 %v2447
        %3547 = vmatprep.mubr.bf16.mxu0 %v728
        %3548 = vmatmul.mubr.bf16.gmra.mxu0 %v727
        %v3549 = vpop.f32.mrf.mxu0
        %v3550 = vadd.f32 %v3510, %v3549
        %v3551 = vpop.f32.mrf.mxu0
        %v3552 = vpop.f32.mrf.mxu0
        %v3553 = vpop.f32.mrf.mxu0
        %3554 = vdwg.mxu0
        %v3555 = vmul.f32 %v3060, 0.5
        %v3556 = vmul.f32 %v3062, 0.5
        %v3557 = vmul.f32 %v3183, 0.5
        %v3558 = vmul.f32 %v3185, 0.5
        %v3559 = vmul.f32 %v3306, 0.5
        %v3560 = vmul.f32 %v3308, 0.5
        %v3561 = vmul.f32 %v3429, 0.5
        %v3562 = vmul.f32 %v3431, 0.5
        %v3563 = vmul.f32 %v3550, 0.5
        %v3564 = vmul.f32 %v3060, 0.70710677
        %v3565 = vmul.f32 %v3062, 0.70710677
        %v3566 = vmul.f32 %v3183, 0.70710677
        %v3567 = vmul.f32 %v3185, 0.70710677
        %v3568 = vmul.f32 %v3306, 0.70710677
        %v3569 = vmul.f32 %v3308, 0.70710677
        %v3570 = vmul.f32 %v3429, 0.70710677
        %v3571 = vmul.f32 %v3431, 0.70710677
        %v3572 = vmul.f32 %v3550, 0.70710677
        %v3573 = verf.f32.pop %v3564
        %v3574 = verf.f32.pop %v3565
        %v3575 = verf.f32.pop %v3566
        %v3576 = verf.f32.pop %v3567
        %v3577 = verf.f32.pop %v3568
        %v3578 = verf.f32.pop %v3569
        %v3579 = verf.f32.pop %v3570
        %v3580 = verf.f32.pop %v3571
        %v3581 = verf.f32.pop %v3572
        %v3582 = vadd.f32 %v3573, 1.0
        %v3583 = vadd.f32 %v3574, 1.0
        %v3584 = vadd.f32 %v3575, 1.0
        %v3585 = vadd.f32 %v3576, 1.0
        %v3586 = vadd.f32 %v3577, 1.0
        %v3587 = vadd.f32 %v3578, 1.0
        %v3588 = vadd.f32 %v3579, 1.0
        %v3589 = vadd.f32 %v3580, 1.0
        %v3590 = vadd.f32 %v3581, 1.0
        %v3591 = vmul.f32 %v3555, %v3582
        %v3592 = vmul.f32 %v3556, %v3583
        %v3593 = vmul.f32 %v3557, %v3584
        %v3594 = vmul.f32 %v3558, %v3585
        %v3595 = vmul.f32 %v3559, %v3586
        %v3596 = vmul.f32 %v3560, %v3587
        %v3597 = vmul.f32 %v3561, %v3588
        %v3598 = vmul.f32 %v3562, %v3589
        %v3599 = vmul.f32 %v3563, %v3590
        %v3600 = vld [vmem:[#allocation7] sm:$0xff]
        %v3601 = vld [vmem:[#allocation7 + $0x8] sm:$0xff]
        %v3602 = vld [vmem:[#allocation7 + $0x10] sm:$0xff]
        %v3603 = vld [vmem:[#allocation7 + $0x18] sm:$0xff]
        %v3604 = vld [vmem:[#allocation7 + $0x20] sm:$0xff]
        %v3605 = vld [vmem:[#allocation7 + $0x28] sm:$0xff]
        %v3606 = vpack.c.bf16 %v3591, %v3591
        %v3607 = vpack.c.bf16 %v3592, %v3592
        %v3608 = vpack.c.bf16 %v3593, %v3593
        %v3609 = vpack.c.bf16 %v3594, %v3594
        %v3610 = vpack.c.bf16 %v3595, %v3595
        %v3611 = vpack.c.bf16 %v3596, %v3596
        %v3612 = vpack.c.bf16 %v3597, %v3597
        %v3613 = vpack.c.bf16 %v3598, %v3598
        %v3614 = vpack.c.bf16 %v3599, %v3599
        %v3615 = vld [vmem:[%s195] sm:$0xff]
        %v3616 = vld [vmem:[%s195 + $0x8] sm:$0xff]
        %v3617 = vld [vmem:[%s195 + $0x10] sm:$0xff]
        %v3618 = vld [vmem:[%s195 + $0x18] sm:$0xff]
        %v3619 = vld [vmem:[%s195 + $0x20] sm:$0xff]
        %v3620 = vld [vmem:[%s195 + $0x28] sm:$0xff]
        %v3621 = vld [vmem:[%s195 + $0x30] sm:$0xff]
        %v3622 = vld [vmem:[%s195 + $0x38] sm:$0xff]
        %v3623 = vld [vmem:[%s195 + $0x40] sm:$0xff]
        %v3624 = vld [vmem:[%s195 + $0x48] sm:$0xff]
        %v3625 = vld [vmem:[%s195 + $0x50] sm:$0xff]
        %v3626 = vld [vmem:[%s195 + $0x58] sm:$0xff]
        %v3627 = vld [vmem:[%s195 + $0x60] sm:$0xff]
        %v3628 = vld [vmem:[%s195 + $0x68] sm:$0xff]
        %v3629 = vld [vmem:[%s195 + $0x70] sm:$0xff]
        %v3630 = vld [vmem:[%s195 + $0x78] sm:$0xff]
        %v3631 = vld [vmem:[%s195 + $0x80] sm:$0xff]
        %v3632 = vld [vmem:[%s195 + $0x88] sm:$0xff]
        %v3633 = vld [vmem:[%s195 + $0x90] sm:$0xff]
        %v3634 = vld [vmem:[%s195 + $0x98] sm:$0xff]
        %v3635 = vld [vmem:[%s195 + $0xa0] sm:$0xff]
        %v3636 = vld [vmem:[%s195 + $0xa8] sm:$0xff]
        %v3637 = vld [vmem:[%s195 + $0xb0] sm:$0xff]
        %v3638 = vld [vmem:[%s195 + $0xb8] sm:$0xff]
        %v3639 = vld [vmem:[%s195 + $0xc0] sm:$0xff]
        %v3640 = vld [vmem:[%s195 + $0xc8] sm:$0xff]
        %v3641 = vld [vmem:[%s195 + $0xd0] sm:$0xff]
        %v3642 = vld [vmem:[%s195 + $0xd8] sm:$0xff]
        %v3643 = vld [vmem:[%s195 + $0xe0] sm:$0xff]
        %v3644 = vld [vmem:[%s195 + $0xe8] sm:$0xff]
        %v3645 = vld [vmem:[%s195 + $0xf0] sm:$0xff]
        %v3646 = vld [vmem:[%s195 + $0xf8] sm:$0xff]
        %v3647 = vld [vmem:[%s195 + $0x100] sm:$0xff]
        %v3648 = vld [vmem:[%s195 + $0x108] sm:$0xff]
        %v3649 = vld [vmem:[%s195 + $0x110] sm:$0xff]
        %v3650 = vld [vmem:[%s195 + $0x118] sm:$0xff]
        %v3651 = vld [vmem:[%s195 + $0x120] sm:$0xff]
        %v3652 = vld [vmem:[%s195 + $0x128] sm:$0xff]
        %v3653 = vld [vmem:[%s195 + $0x130] sm:$0xff]
        %v3654 = vld [vmem:[%s195 + $0x138] sm:$0xff]
        %v3655 = vld [vmem:[%s195 + $0x140] sm:$0xff]
        %v3656 = vld [vmem:[%s195 + $0x148] sm:$0xff]
        %v3657 = vld [vmem:[%s195 + $0x150] sm:$0xff]
        %v3658 = vld [vmem:[%s195 + $0x158] sm:$0xff]
        %v3659 = vld [vmem:[%s195 + $0x160] sm:$0xff]
        %v3660 = vld [vmem:[%s195 + $0x168] sm:$0xff]
        %v3661 = vld [vmem:[%s195 + $0x170] sm:$0xff]
        %v3662 = vld [vmem:[%s195 + $0x178] sm:$0xff]
        %v3663 = vld [vmem:[%s195 + $0x180] sm:$0xff]
        %v3664 = vld [vmem:[%s195 + $0x188] sm:$0xff]
        %v3665 = vld [vmem:[%s195 + $0x190] sm:$0xff]
        %v3666 = vld [vmem:[%s195 + $0x198] sm:$0xff]
        %v3667 = vld [vmem:[%s195 + $0x1a0] sm:$0xff]
        %v3668 = vld [vmem:[%s195 + $0x1a8] sm:$0xff]
        %v3669 = vld [vmem:[%s195 + $0x1b0] sm:$0xff]
        %v3670 = vld [vmem:[%s195 + $0x1b8] sm:$0xff]
        %v3671 = vld [vmem:[%s195 + $0x1c0] sm:$0xff]
        %v3672 = vld [vmem:[%s195 + $0x1c8] sm:$0xff]
        %v3673 = vld [vmem:[%s195 + $0x1d0] sm:$0xff]
        %v3674 = vld [vmem:[%s195 + $0x1d8] sm:$0xff]
        %v3675 = vld [vmem:[%s195 + $0x1e0] sm:$0xff]
        %v3676 = vld [vmem:[%s195 + $0x1e8] sm:$0xff]
        %v3677 = vld [vmem:[%s195 + $0x1f0] sm:$0xff]
        %v3678 = vld [vmem:[%s195 + $0x1f8] sm:$0xff]
        %v3679 = vld [vmem:[%s195 + $0x200] sm:$0xff]
        %v3680 = vld [vmem:[%s195 + $0x208] sm:$0xff]
        %v3681 = vld [vmem:[%s195 + $0x210] sm:$0xff]
        %v3682 = vld [vmem:[%s195 + $0x218] sm:$0xff]
        %v3683 = vld [vmem:[%s195 + $0x220] sm:$0xff]
        %v3684 = vld [vmem:[%s195 + $0x228] sm:$0xff]
        %v3685 = vld [vmem:[%s195 + $0x230] sm:$0xff]
        %v3686 = vld [vmem:[%s195 + $0x238] sm:$0xff]
        %v3687 = vld [vmem:[%s195 + $0x240] sm:$0xff]
        %v3688 = vld [vmem:[%s195 + $0x248] sm:$0xff]
        %v3689 = vld [vmem:[%s195 + $0x250] sm:$0xff]
        %v3690 = vld [vmem:[%s195 + $0x258] sm:$0xff]
        %v3691 = vld [vmem:[%s195 + $0x260] sm:$0xff]
        %v3692 = vld [vmem:[%s195 + $0x268] sm:$0xff]
        %v3693 = vld [vmem:[%s195 + $0x270] sm:$0xff]
        %v3694 = vld [vmem:[%s195 + $0x278] sm:$0xff]
        %v3695 = vld [vmem:[%s195 + $0x280] sm:$0xff]
        %v3696 = vld [vmem:[%s195 + $0x288] sm:$0xff]
        %v3697 = vld [vmem:[%s195 + $0x290] sm:$0xff]
        %v3698 = vld [vmem:[%s195 + $0x298] sm:$0xff]
        %v3699 = vld [vmem:[%s195 + $0x2a0] sm:$0xff]
        %v3700 = vld [vmem:[%s195 + $0x2a8] sm:$0xff]
        %v3701 = vld [vmem:[%s195 + $0x2b0] sm:$0xff]
        %v3702 = vld [vmem:[%s195 + $0x2b8] sm:$0xff]
        %v3703 = vld [vmem:[%s195 + $0x2c0] sm:$0xff]
        %v3704 = vld [vmem:[%s195 + $0x2c8] sm:$0xff]
        %v3705 = vld [vmem:[%s195 + $0x2d0] sm:$0xff]
        %v3706 = vld [vmem:[%s195 + $0x2d8] sm:$0xff]
        %v3707 = vld [vmem:[%s195 + $0x2e0] sm:$0xff]
        %v3708 = vld [vmem:[%s195 + $0x2e8] sm:$0xff]
        %v3709 = vld [vmem:[%s195 + $0x2f0] sm:$0xff]
        %v3710 = vld [vmem:[%s195 + $0x2f8] sm:$0xff]
        %v3711 = vld [vmem:[%s195 + $0x300] sm:$0xff]
        %v3712 = vld [vmem:[%s195 + $0x308] sm:$0xff]
        %v3713 = vld [vmem:[%s195 + $0x310] sm:$0xff]
        %v3714 = vld [vmem:[%s195 + $0x318] sm:$0xff]
        %v3715 = vld [vmem:[%s195 + $0x320] sm:$0xff]
        %v3716 = vld [vmem:[%s195 + $0x328] sm:$0xff]
        %v3717 = vld [vmem:[%s195 + $0x330] sm:$0xff]
        %v3718 = vld [vmem:[%s195 + $0x338] sm:$0xff]
        %v3719 = vld [vmem:[%s195 + $0x340] sm:$0xff]
        %v3720 = vld [vmem:[%s195 + $0x348] sm:$0xff]
        %v3721 = vld [vmem:[%s195 + $0x350] sm:$0xff]
        %v3722 = vld [vmem:[%s195 + $0x358] sm:$0xff]
        %v3723 = vld [vmem:[%s195 + $0x360] sm:$0xff]
        %v3724 = vld [vmem:[%s195 + $0x368] sm:$0xff]
        %v3725 = vld [vmem:[%s195 + $0x370] sm:$0xff]
        %v3726 = vld [vmem:[%s195 + $0x378] sm:$0xff]
        %v3727 = vld [vmem:[%s195 + $0x380] sm:$0xff]
        %v3728 = vld [vmem:[%s195 + $0x388] sm:$0xff]
        %v3729 = vld [vmem:[%s195 + $0x390] sm:$0xff]
        %v3730 = vld [vmem:[%s195 + $0x398] sm:$0xff]
        %v3731 = vld [vmem:[%s195 + $0x3a0] sm:$0xff]
        %v3732 = vld [vmem:[%s195 + $0x3a8] sm:$0xff]
        %v3733 = vld [vmem:[%s195 + $0x3b0] sm:$0xff]
        %v3734 = vld [vmem:[%s195 + $0x3b8] sm:$0xff]
        %v3735 = vld [vmem:[%s195 + $0x3c0] sm:$0xff]
        %v3736 = vld [vmem:[%s195 + $0x3c8] sm:$0xff]
        %v3737 = vld [vmem:[%s195 + $0x3d0] sm:$0xff]
        %v3738 = vld [vmem:[%s195 + $0x3d8] sm:$0xff]
        %v3739 = vld [vmem:[%s195 + $0x3e0] sm:$0xff]
        %v3740 = vld [vmem:[%s195 + $0x3e8] sm:$0xff]
        %v3741 = vld [vmem:[%s195 + $0x3f0] sm:$0xff]
        %v3742 = vld [vmem:[%s195 + $0x3f8] sm:$0xff]
        %v3743 = vld [vmem:[%s195 + $0x400] sm:$0xff]
        %v3744 = vld [vmem:[%s195 + $0x408] sm:$0xff]
        %v3745 = vld [vmem:[%s195 + $0x410] sm:$0xff]
        %v3746 = vld [vmem:[%s195 + $0x418] sm:$0xff]
        %v3747 = vld [vmem:[%s195 + $0x420] sm:$0xff]
        %v3748 = vld [vmem:[%s195 + $0x428] sm:$0xff]
        %v3749 = vld [vmem:[%s195 + $0x430] sm:$0xff]
        %v3750 = vld [vmem:[%s195 + $0x438] sm:$0xff]
        %v3751 = vld [vmem:[%s195 + $0x440] sm:$0xff]
        %v3752 = vld [vmem:[%s195 + $0x448] sm:$0xff]
        %v3753 = vld [vmem:[%s195 + $0x450] sm:$0xff]
        %v3754 = vld [vmem:[%s195 + $0x458] sm:$0xff]
        %v3755 = vld [vmem:[%s195 + $0x460] sm:$0xff]
        %v3756 = vld [vmem:[%s195 + $0x468] sm:$0xff]
        %v3757 = vld [vmem:[%s195 + $0x470] sm:$0xff]
        %v3758 = vld [vmem:[%s195 + $0x478] sm:$0xff]
        %v3759 = vld [vmem:[%s195 + $0x480] sm:$0xff]
        %v3760 = vld [vmem:[%s195 + $0x488] sm:$0xff]
        %v3761 = vld [vmem:[%s195 + $0x490] sm:$0xff]
        %v3762 = vld [vmem:[%s195 + $0x498] sm:$0xff]
        %v3763 = vld [vmem:[%s195 + $0x4a0] sm:$0xff]
        %v3764 = vld [vmem:[%s195 + $0x4a8] sm:$0xff]
        %v3765 = vld [vmem:[%s195 + $0x4b0] sm:$0xff]
        %v3766 = vld [vmem:[%s195 + $0x4b8] sm:$0xff]
        %v3767 = vld [vmem:[%s195 + $0x4c0] sm:$0xff]
        %v3768 = vld [vmem:[%s195 + $0x4c8] sm:$0xff]
        %v3769 = vld [vmem:[%s195 + $0x4d0] sm:$0xff]
        %v3770 = vld [vmem:[%s195 + $0x4d8] sm:$0xff]
        %v3771 = vld [vmem:[%s195 + $0x4e0] sm:$0xff]
        %v3772 = vld [vmem:[%s195 + $0x4e8] sm:$0xff]
        %v3773 = vld [vmem:[%s195 + $0x4f0] sm:$0xff]
        %v3774 = vld [vmem:[%s195 + $0x4f8] sm:$0xff]
        %v3775 = vld [vmem:[%s195 + $0x500] sm:$0xff]
        %v3776 = vld [vmem:[%s195 + $0x508] sm:$0xff]
        %v3777 = vld [vmem:[%s195 + $0x510] sm:$0xff]
        %v3778 = vld [vmem:[%s195 + $0x518] sm:$0xff]
        %v3779 = vld [vmem:[%s195 + $0x520] sm:$0xff]
        %v3780 = vld [vmem:[%s195 + $0x528] sm:$0xff]
        %v3781 = vld [vmem:[%s195 + $0x530] sm:$0xff]
        %v3782 = vld [vmem:[%s195 + $0x538] sm:$0xff]
        %v3783 = vld [vmem:[%s195 + $0x540] sm:$0xff]
        %v3784 = vld [vmem:[%s195 + $0x548] sm:$0xff]
        %v3785 = vld [vmem:[%s195 + $0x550] sm:$0xff]
        %v3786 = vld [vmem:[%s195 + $0x558] sm:$0xff]
        %v3787 = vld [vmem:[%s195 + $0x560] sm:$0xff]
        %v3788 = vld [vmem:[%s195 + $0x568] sm:$0xff]
        %v3789 = vld [vmem:[%s195 + $0x570] sm:$0xff]
        %v3790 = vld [vmem:[%s195 + $0x578] sm:$0xff]
        %v3791 = vld [vmem:[%s195 + $0x580] sm:$0xff]
        %v3792 = vld [vmem:[%s195 + $0x588] sm:$0xff]
        %v3793 = vld [vmem:[%s195 + $0x590] sm:$0xff]
        %v3794 = vld [vmem:[%s195 + $0x598] sm:$0xff]
        %v3795 = vld [vmem:[%s195 + $0x5a0] sm:$0xff]
        %v3796 = vld [vmem:[%s195 + $0x5a8] sm:$0xff]
        %v3797 = vld [vmem:[%s195 + $0x5b0] sm:$0xff]
        %v3798 = vld [vmem:[%s195 + $0x5b8] sm:$0xff]
        %v3799 = vld [vmem:[%s195 + $0x5c0] sm:$0xff]
        %v3800 = vld [vmem:[%s195 + $0x5c8] sm:$0xff]
        %v3801 = vld [vmem:[%s195 + $0x5d0] sm:$0xff]
        %v3802 = vld [vmem:[%s195 + $0x5d8] sm:$0xff]
        %v3803 = vld [vmem:[%s195 + $0x5e0] sm:$0xff]
        %v3804 = vld [vmem:[%s195 + $0x5e8] sm:$0xff]
        %v3805 = vld [vmem:[%s195 + $0x5f0] sm:$0xff]
        %v3806 = vld [vmem:[%s195 + $0x5f8] sm:$0xff]
        %v3807 = vld [vmem:[%s195 + $0x600] sm:$0xff]
        %v3808 = vld [vmem:[%s195 + $0x608] sm:$0xff]
        %v3809 = vld [vmem:[%s195 + $0x610] sm:$0xff]
        %v3810 = vld [vmem:[%s195 + $0x618] sm:$0xff]
        %v3811 = vld [vmem:[%s195 + $0x620] sm:$0xff]
        %v3812 = vld [vmem:[%s195 + $0x628] sm:$0xff]
        %v3813 = vld [vmem:[%s195 + $0x630] sm:$0xff]
        %v3814 = vld [vmem:[%s195 + $0x638] sm:$0xff]
        %v3815 = vld [vmem:[%s195 + $0x640] sm:$0xff]
        %v3816 = vld [vmem:[%s195 + $0x648] sm:$0xff]
        %v3817 = vld [vmem:[%s195 + $0x650] sm:$0xff]
        %v3818 = vld [vmem:[%s195 + $0x658] sm:$0xff]
        %v3819 = vld [vmem:[%s195 + $0x660] sm:$0xff]
        %v3820 = vld [vmem:[%s195 + $0x668] sm:$0xff]
        %v3821 = vld [vmem:[%s195 + $0x670] sm:$0xff]
        %v3822 = vld [vmem:[%s195 + $0x678] sm:$0xff]
        %v3823 = vld [vmem:[%s195 + $0x680] sm:$0xff]
        %v3824 = vld [vmem:[%s195 + $0x688] sm:$0xff]
        %v3825 = vld [vmem:[%s195 + $0x690] sm:$0xff]
        %v3826 = vld [vmem:[%s195 + $0x698] sm:$0xff]
        %v3827 = vld [vmem:[%s195 + $0x6a0] sm:$0xff]
        %v3828 = vld [vmem:[%s195 + $0x6a8] sm:$0xff]
        %v3829 = vld [vmem:[%s195 + $0x6b0] sm:$0xff]
        %v3830 = vld [vmem:[%s195 + $0x6b8] sm:$0xff]
        %v3831 = vld [vmem:[%s195 + $0x6c0] sm:$0xff]
        %v3832 = vld [vmem:[%s195 + $0x6c8] sm:$0xff]
        %v3833 = vld [vmem:[%s195 + $0x6d0] sm:$0xff]
        %v3834 = vld [vmem:[%s195 + $0x6d8] sm:$0xff]
        %v3835 = vld [vmem:[%s195 + $0x6e0] sm:$0xff]
        %v3836 = vld [vmem:[%s195 + $0x6e8] sm:$0xff]
        %v3837 = vld [vmem:[%s195 + $0x6f0] sm:$0xff]
        %v3838 = vld [vmem:[%s195 + $0x6f8] sm:$0xff]
        %v3839 = vld [vmem:[%s195 + $0x700] sm:$0xff]
        %v3840 = vld [vmem:[%s195 + $0x708] sm:$0xff]
        %v3841 = vld [vmem:[%s195 + $0x710] sm:$0xff]
        %v3842 = vld [vmem:[%s195 + $0x718] sm:$0xff]
        %v3843 = vld [vmem:[%s195 + $0x720] sm:$0xff]
        %v3844 = vld [vmem:[%s195 + $0x728] sm:$0xff]
        %v3845 = vld [vmem:[%s195 + $0x730] sm:$0xff]
        %v3846 = vld [vmem:[%s195 + $0x738] sm:$0xff]
        %v3847 = vld [vmem:[%s195 + $0x740] sm:$0xff]
        %v3848 = vld [vmem:[%s195 + $0x748] sm:$0xff]
        %v3849 = vld [vmem:[%s195 + $0x750] sm:$0xff]
        %v3850 = vld [vmem:[%s195 + $0x758] sm:$0xff]
        %v3851 = vld [vmem:[%s195 + $0x760] sm:$0xff]
        %v3852 = vld [vmem:[%s195 + $0x768] sm:$0xff]
        %v3853 = vld [vmem:[%s195 + $0x770] sm:$0xff]
        %v3854 = vld [vmem:[%s195 + $0x778] sm:$0xff]
        %v3855 = vld [vmem:[%s195 + $0x780] sm:$0xff]
        %v3856 = vld [vmem:[%s195 + $0x788] sm:$0xff]
        %v3857 = vld [vmem:[%s195 + $0x790] sm:$0xff]
        %v3858 = vld [vmem:[%s195 + $0x798] sm:$0xff]
        %v3859 = vld [vmem:[%s195 + $0x7a0] sm:$0xff]
        %v3860 = vld [vmem:[%s195 + $0x7a8] sm:$0xff]
        %v3861 = vld [vmem:[%s195 + $0x7b0] sm:$0xff]
        %v3862 = vld [vmem:[%s195 + $0x7b8] sm:$0xff]
        %v3863 = vld [vmem:[%s195 + $0x7c0] sm:$0xff]
        %v3864 = vld [vmem:[%s195 + $0x7c8] sm:$0xff]
        %v3865 = vld [vmem:[%s195 + $0x7d0] sm:$0xff]
        %v3866 = vld [vmem:[%s195 + $0x7d8] sm:$0xff]
        %v3867 = vld [vmem:[%s195 + $0x7e0] sm:$0xff]
        %v3868 = vld [vmem:[%s195 + $0x7e8] sm:$0xff]
        %v3869 = vld [vmem:[%s195 + $0x7f0] sm:$0xff]
        %v3870 = vld [vmem:[%s195 + $0x7f8] sm:$0xff]
        %v3871 = vld [vmem:[%s195 + $0x800] sm:$0xff]
        %v3872 = vld [vmem:[%s195 + $0x808] sm:$0xff]
        %v3873 = vld [vmem:[%s195 + $0x810] sm:$0xff]
        %v3874 = vld [vmem:[%s195 + $0x818] sm:$0xff]
        %v3875 = vld [vmem:[%s195 + $0x820] sm:$0xff]
        %v3876 = vld [vmem:[%s195 + $0x828] sm:$0xff]
        %v3877 = vld [vmem:[%s195 + $0x830] sm:$0xff]
        %v3878 = vld [vmem:[%s195 + $0x838] sm:$0xff]
        %v3879 = vld [vmem:[%s195 + $0x840] sm:$0xff]
        %v3880 = vld [vmem:[%s195 + $0x848] sm:$0xff]
        %v3881 = vld [vmem:[%s195 + $0x850] sm:$0xff]
        %v3882 = vld [vmem:[%s195 + $0x858] sm:$0xff]
        %v3883 = vld [vmem:[%s195 + $0x860] sm:$0xff]
        %v3884 = vld [vmem:[%s195 + $0x868] sm:$0xff]
        %v3885 = vld [vmem:[%s195 + $0x870] sm:$0xff]
        %v3886 = vld [vmem:[%s195 + $0x878] sm:$0xff]
        %v3887 = vld [vmem:[%s195 + $0x880] sm:$0xff]
        %v3888 = vld [vmem:[%s195 + $0x888] sm:$0xff]
        %v3889 = vld [vmem:[%s195 + $0x890] sm:$0xff]
        %v3890 = vld [vmem:[%s195 + $0x898] sm:$0xff]
        %v3891 = vld [vmem:[%s195 + $0x8a0] sm:$0xff]
        %v3892 = vld [vmem:[%s195 + $0x8a8] sm:$0xff]
        %v3893 = vld [vmem:[%s195 + $0x8b0] sm:$0xff]
        %v3894 = vld [vmem:[%s195 + $0x8b8] sm:$0xff]
        %v3895 = vld [vmem:[%s195 + $0x8c0] sm:$0xff]
        %v3896 = vld [vmem:[%s195 + $0x8c8] sm:$0xff]
        %v3897 = vld [vmem:[%s195 + $0x8d0] sm:$0xff]
        %v3898 = vld [vmem:[%s195 + $0x8d8] sm:$0xff]
        %v3899 = vld [vmem:[%s195 + $0x8e0] sm:$0xff]
        %v3900 = vld [vmem:[%s195 + $0x8e8] sm:$0xff]
        %v3901 = vld [vmem:[%s195 + $0x8f0] sm:$0xff]
        %v3902 = vld [vmem:[%s195 + $0x8f8] sm:$0xff]
        %v3903 = vld [vmem:[%s195 + $0x900] sm:$0xff]
        %v3904 = vld [vmem:[%s195 + $0x908] sm:$0xff]
        %v3905 = vld [vmem:[%s195 + $0x910] sm:$0xff]
        %v3906 = vld [vmem:[%s195 + $0x918] sm:$0xff]
        %v3907 = vld [vmem:[%s195 + $0x920] sm:$0xff]
        %v3908 = vld [vmem:[%s195 + $0x928] sm:$0xff]
        %v3909 = vld [vmem:[%s195 + $0x930] sm:$0xff]
        %v3910 = vld [vmem:[%s195 + $0x938] sm:$0xff]
        %v3911 = vld [vmem:[%s195 + $0x940] sm:$0xff]
        %v3912 = vld [vmem:[%s195 + $0x948] sm:$0xff]
        %v3913 = vld [vmem:[%s195 + $0x950] sm:$0xff]
        %v3914 = vld [vmem:[%s195 + $0x958] sm:$0xff]
        %v3915 = vld [vmem:[%s195 + $0x960] sm:$0xff]
        %v3916 = vld [vmem:[%s195 + $0x968] sm:$0xff]
        %v3917 = vld [vmem:[%s195 + $0x970] sm:$0xff]
        %v3918 = vld [vmem:[%s195 + $0x978] sm:$0xff]
        %v3919 = vld [vmem:[%s195 + $0x980] sm:$0xff]
        %v3920 = vld [vmem:[%s195 + $0x988] sm:$0xff]
        %v3921 = vld [vmem:[%s195 + $0x990] sm:$0xff]
        %v3922 = vld [vmem:[%s195 + $0x998] sm:$0xff]
        %v3923 = vld [vmem:[%s195 + $0x9a0] sm:$0xff]
        %v3924 = vld [vmem:[%s195 + $0x9a8] sm:$0xff]
        %v3925 = vld [vmem:[%s195 + $0x9b0] sm:$0xff]
        %v3926 = vld [vmem:[%s195 + $0x9b8] sm:$0xff]
        %v3927 = vld [vmem:[%s195 + $0x9c0] sm:$0xff]
        %v3928 = vld [vmem:[%s195 + $0x9c8] sm:$0xff]
        %v3929 = vld [vmem:[%s195 + $0x9d0] sm:$0xff]
        %v3930 = vld [vmem:[%s195 + $0x9d8] sm:$0xff]
        %v3931 = vld [vmem:[%s195 + $0x9e0] sm:$0xff]
        %v3932 = vld [vmem:[%s195 + $0x9e8] sm:$0xff]
        %v3933 = vld [vmem:[%s195 + $0x9f0] sm:$0xff]
        %v3934 = vld [vmem:[%s195 + $0x9f8] sm:$0xff]
        %v3935 = vld [vmem:[%s195 + $0xa00] sm:$0xff]
        %v3936 = vld [vmem:[%s195 + $0xa08] sm:$0xff]
        %v3937 = vld [vmem:[%s195 + $0xa10] sm:$0xff]
        %v3938 = vld [vmem:[%s195 + $0xa18] sm:$0xff]
        %v3939 = vld [vmem:[%s195 + $0xa20] sm:$0xff]
        %v3940 = vld [vmem:[%s195 + $0xa28] sm:$0xff]
        %v3941 = vld [vmem:[%s195 + $0xa30] sm:$0xff]
        %v3942 = vld [vmem:[%s195 + $0xa38] sm:$0xff]
        %v3943 = vld [vmem:[%s195 + $0xa40] sm:$0xff]
        %v3944 = vld [vmem:[%s195 + $0xa48] sm:$0xff]
        %v3945 = vld [vmem:[%s195 + $0xa50] sm:$0xff]
        %v3946 = vld [vmem:[%s195 + $0xa58] sm:$0xff]
        %v3947 = vld [vmem:[%s195 + $0xa60] sm:$0xff]
        %v3948 = vld [vmem:[%s195 + $0xa68] sm:$0xff]
        %v3949 = vld [vmem:[%s195 + $0xa70] sm:$0xff]
        %v3950 = vld [vmem:[%s195 + $0xa78] sm:$0xff]
        %v3951 = vld [vmem:[%s195 + $0xa80] sm:$0xff]
        %v3952 = vld [vmem:[%s195 + $0xa88] sm:$0xff]
        %v3953 = vld [vmem:[%s195 + $0xa90] sm:$0xff]
        %v3954 = vld [vmem:[%s195 + $0xa98] sm:$0xff]
        %v3955 = vld [vmem:[%s195 + $0xaa0] sm:$0xff]
        %v3956 = vld [vmem:[%s195 + $0xaa8] sm:$0xff]
        %v3957 = vld [vmem:[%s195 + $0xab0] sm:$0xff]
        %v3958 = vld [vmem:[%s195 + $0xab8] sm:$0xff]
        %v3959 = vld [vmem:[%s195 + $0xac0] sm:$0xff]
        %v3960 = vld [vmem:[%s195 + $0xac8] sm:$0xff]
        %v3961 = vld [vmem:[%s195 + $0xad0] sm:$0xff]
        %v3962 = vld [vmem:[%s195 + $0xad8] sm:$0xff]
        %v3963 = vld [vmem:[%s195 + $0xae0] sm:$0xff]
        %v3964 = vld [vmem:[%s195 + $0xae8] sm:$0xff]
        %v3965 = vld [vmem:[%s195 + $0xaf0] sm:$0xff]
        %v3966 = vld [vmem:[%s195 + $0xaf8] sm:$0xff]
        %v3967 = vld [vmem:[%s195 + $0xb00] sm:$0xff]
        %v3968 = vld [vmem:[%s195 + $0xb08] sm:$0xff]
        %v3969 = vld [vmem:[%s195 + $0xb10] sm:$0xff]
        %v3970 = vld [vmem:[%s195 + $0xb18] sm:$0xff]
        %v3971 = vld [vmem:[%s195 + $0xb20] sm:$0xff]
        %v3972 = vld [vmem:[%s195 + $0xb28] sm:$0xff]
        %v3973 = vld [vmem:[%s195 + $0xb30] sm:$0xff]
        %v3974 = vld [vmem:[%s195 + $0xb38] sm:$0xff]
        %v3975 = vld [vmem:[%s195 + $0xb40] sm:$0xff]
        %v3976 = vld [vmem:[%s195 + $0xb48] sm:$0xff]
        %v3977 = vld [vmem:[%s195 + $0xb50] sm:$0xff]
        %v3978 = vld [vmem:[%s195 + $0xb58] sm:$0xff]
        %v3979 = vld [vmem:[%s195 + $0xb60] sm:$0xff]
        %v3980 = vld [vmem:[%s195 + $0xb68] sm:$0xff]
        %v3981 = vld [vmem:[%s195 + $0xb70] sm:$0xff]
        %v3982 = vld [vmem:[%s195 + $0xb78] sm:$0xff]
        %v3983 = vld [vmem:[%s195 + $0xb80] sm:$0xff]
        %v3984 = vld [vmem:[%s195 + $0xb88] sm:$0xff]
        %v3985 = vld [vmem:[%s195 + $0xb90] sm:$0xff]
        %v3986 = vld [vmem:[%s195 + $0xb98] sm:$0xff]
        %v3987 = vld [vmem:[%s195 + $0xba0] sm:$0xff]
        %v3988 = vld [vmem:[%s195 + $0xba8] sm:$0xff]
        %v3989 = vld [vmem:[%s195 + $0xbb0] sm:$0xff]
        %v3990 = vld [vmem:[%s195 + $0xbb8] sm:$0xff]
        %v3991 = vld [vmem:[%s195 + $0xbc0] sm:$0xff]
        %v3992 = vld [vmem:[%s195 + $0xbc8] sm:$0xff]
        %v3993 = vld [vmem:[%s195 + $0xbd0] sm:$0xff]
        %v3994 = vld [vmem:[%s195 + $0xbd8] sm:$0xff]
        %v3995 = vld [vmem:[%s195 + $0xbe0] sm:$0xff]
        %v3996 = vld [vmem:[%s195 + $0xbe8] sm:$0xff]
        %v3997 = vld [vmem:[%s195 + $0xbf0] sm:$0xff]
        %v3998 = vld [vmem:[%s195 + $0xbf8] sm:$0xff]
        %v3999 = vld [vmem:[%s195 + $0xc00] sm:$0xff]
        %v4000 = vld [vmem:[%s195 + $0xc08] sm:$0xff]
        %v4001 = vld [vmem:[%s195 + $0xc10] sm:$0xff]
        %v4002 = vld [vmem:[%s195 + $0xc18] sm:$0xff]
        %v4003 = vld [vmem:[%s195 + $0xc20] sm:$0xff]
        %v4004 = vld [vmem:[%s195 + $0xc28] sm:$0xff]
        %v4005 = vld [vmem:[%s195 + $0xc30] sm:$0xff]
        %v4006 = vld [vmem:[%s195 + $0xc38] sm:$0xff]
        %v4007 = vld [vmem:[%s195 + $0xc40] sm:$0xff]
        %v4008 = vld [vmem:[%s195 + $0xc48] sm:$0xff]
        %v4009 = vld [vmem:[%s195 + $0xc50] sm:$0xff]
        %v4010 = vld [vmem:[%s195 + $0xc58] sm:$0xff]
        %v4011 = vld [vmem:[%s195 + $0xc60] sm:$0xff]
        %v4012 = vld [vmem:[%s195 + $0xc68] sm:$0xff]
        %v4013 = vld [vmem:[%s195 + $0xc70] sm:$0xff]
        %v4014 = vld [vmem:[%s195 + $0xc78] sm:$0xff]
        %v4015 = vld [vmem:[%s195 + $0xc80] sm:$0xff]
        %v4016 = vld [vmem:[%s195 + $0xc88] sm:$0xff]
        %v4017 = vld [vmem:[%s195 + $0xc90] sm:$0xff]
        %v4018 = vld [vmem:[%s195 + $0xc98] sm:$0xff]
        %v4019 = vld [vmem:[%s195 + $0xca0] sm:$0xff]
        %v4020 = vld [vmem:[%s195 + $0xca8] sm:$0xff]
        %v4021 = vld [vmem:[%s195 + $0xcb0] sm:$0xff]
        %v4022 = vld [vmem:[%s195 + $0xcb8] sm:$0xff]
        %v4023 = vld [vmem:[%s195 + $0xcc0] sm:$0xff]
        %v4024 = vld [vmem:[%s195 + $0xcc8] sm:$0xff]
        %v4025 = vld [vmem:[%s195 + $0xcd0] sm:$0xff]
        %v4026 = vld [vmem:[%s195 + $0xcd8] sm:$0xff]
        %v4027 = vld [vmem:[%s195 + $0xce0] sm:$0xff]
        %v4028 = vld [vmem:[%s195 + $0xce8] sm:$0xff]
        %v4029 = vld [vmem:[%s195 + $0xcf0] sm:$0xff]
        %v4030 = vld [vmem:[%s195 + $0xcf8] sm:$0xff]
        %v4031 = vld [vmem:[%s195 + $0xd00] sm:$0xff]
        %v4032 = vld [vmem:[%s195 + $0xd08] sm:$0xff]
        %v4033 = vld [vmem:[%s195 + $0xd10] sm:$0xff]
        %v4034 = vld [vmem:[%s195 + $0xd18] sm:$0xff]
        %v4035 = vld [vmem:[%s195 + $0xd20] sm:$0xff]
        %v4036 = vld [vmem:[%s195 + $0xd28] sm:$0xff]
        %v4037 = vld [vmem:[%s195 + $0xd30] sm:$0xff]
        %v4038 = vld [vmem:[%s195 + $0xd38] sm:$0xff]
        %v4039 = vld [vmem:[%s195 + $0xd40] sm:$0xff]
        %v4040 = vld [vmem:[%s195 + $0xd48] sm:$0xff]
        %v4041 = vld [vmem:[%s195 + $0xd50] sm:$0xff]
        %v4042 = vld [vmem:[%s195 + $0xd58] sm:$0xff]
        %v4043 = vld [vmem:[%s195 + $0xd60] sm:$0xff]
        %v4044 = vld [vmem:[%s195 + $0xd68] sm:$0xff]
        %v4045 = vld [vmem:[%s195 + $0xd70] sm:$0xff]
        %v4046 = vld [vmem:[%s195 + $0xd78] sm:$0xff]
        %v4479 = vunpack.c.l.b16 %v3615
        %v4480 = vunpack.c.h.b16 %v3615
        %v4481 = vunpack.c.l.b16 %v3616
        %v4482 = vunpack.c.h.b16 %v3616
        %v4483 = vunpack.c.l.b16 %v3617
        %v4484 = vunpack.c.h.b16 %v3617
        %v4485 = vunpack.c.l.b16 %v3618
        %v4486 = vunpack.c.h.b16 %v3618
        %v4487 = vunpack.c.l.b16 %v3619
        %v4488 = vunpack.c.h.b16 %v3619
        %v4489 = vunpack.c.l.b16 %v3620
        %v4490 = vunpack.c.h.b16 %v3620
        %v4491 = vunpack.c.l.b16 %v3621
        %v4492 = vunpack.c.h.b16 %v3621
        %v4493 = vunpack.c.l.b16 %v3622
        %v4494 = vunpack.c.h.b16 %v3622
        %v4495 = vunpack.c.l.b16 %v3623
        %v4496 = vunpack.c.h.b16 %v3623
        %v4497 = vunpack.c.l.b16 %v3624
        %v4498 = vunpack.c.h.b16 %v3624
        %v4499 = vunpack.c.l.b16 %v3625
        %v4500 = vunpack.c.h.b16 %v3625
        %v4501 = vunpack.c.l.b16 %v3626
        %v4502 = vunpack.c.h.b16 %v3626
        %v4503 = vunpack.c.l.b16 %v3627
        %v4504 = vunpack.c.h.b16 %v3627
        %v4505 = vunpack.c.l.b16 %v3628
        %v4506 = vunpack.c.h.b16 %v3628
        %v4507 = vunpack.c.l.b16 %v3629
        %v4508 = vunpack.c.h.b16 %v3629
        %v4509 = vunpack.c.l.b16 %v3630
        %v4510 = vunpack.c.h.b16 %v3630
        %v4511 = vunpack.c.l.b16 %v3631
        %v4512 = vunpack.c.h.b16 %v3631
        %v4513 = vunpack.c.l.b16 %v3632
        %v4514 = vunpack.c.h.b16 %v3632
        %v4515 = vunpack.c.l.b16 %v3633
        %v4516 = vunpack.c.h.b16 %v3633
        %v4517 = vunpack.c.l.b16 %v3634
        %v4518 = vunpack.c.h.b16 %v3634
        %v4519 = vunpack.c.l.b16 %v3635
        %v4520 = vunpack.c.h.b16 %v3635
        %v4521 = vunpack.c.l.b16 %v3636
        %v4522 = vunpack.c.h.b16 %v3636
        %v4523 = vunpack.c.l.b16 %v3637
        %v4524 = vunpack.c.h.b16 %v3637
        %v4525 = vunpack.c.l.b16 %v3638
        %v4526 = vunpack.c.h.b16 %v3638
        %v4527 = vunpack.c.l.b16 %v3639
        %v4528 = vunpack.c.h.b16 %v3639
        %v4529 = vunpack.c.l.b16 %v3640
        %v4530 = vunpack.c.h.b16 %v3640
        %v4531 = vunpack.c.l.b16 %v3641
        %v4532 = vunpack.c.h.b16 %v3641
        %v4533 = vunpack.c.l.b16 %v3642
        %v4534 = vunpack.c.h.b16 %v3642
        %v4535 = vunpack.c.l.b16 %v3643
        %v4536 = vunpack.c.h.b16 %v3643
        %v4537 = vunpack.c.l.b16 %v3644
        %v4538 = vunpack.c.h.b16 %v3644
        %v4539 = vunpack.c.l.b16 %v3645
        %v4540 = vunpack.c.h.b16 %v3645
        %v4541 = vunpack.c.l.b16 %v3646
        %v4542 = vunpack.c.h.b16 %v3646
        %v4543 = vunpack.c.l.b16 %v3647
        %v4544 = vunpack.c.h.b16 %v3647
        %v4545 = vunpack.c.l.b16 %v3648
        %v4546 = vunpack.c.h.b16 %v3648
        %v4547 = vunpack.c.l.b16 %v3649
        %v4548 = vunpack.c.h.b16 %v3649
        %v4549 = vunpack.c.l.b16 %v3650
        %v4550 = vunpack.c.h.b16 %v3650
        %v4551 = vunpack.c.l.b16 %v3651
        %v4552 = vunpack.c.h.b16 %v3651
        %v4553 = vunpack.c.l.b16 %v3652
        %v4554 = vunpack.c.h.b16 %v3652
        %v4555 = vunpack.c.l.b16 %v3653
        %v4556 = vunpack.c.h.b16 %v3653
        %v4557 = vunpack.c.l.b16 %v3654
        %v4558 = vunpack.c.h.b16 %v3654
        %v4559 = vunpack.c.l.b16 %v3655
        %v4560 = vunpack.c.h.b16 %v3655
        %v4561 = vunpack.c.l.b16 %v3656
        %v4562 = vunpack.c.h.b16 %v3656
        %v4563 = vunpack.c.l.b16 %v3657
        %v4564 = vunpack.c.h.b16 %v3657
        %v4565 = vunpack.c.l.b16 %v3658
        %v4566 = vunpack.c.h.b16 %v3658
        %v4567 = vunpack.c.l.b16 %v3659
        %v4568 = vunpack.c.h.b16 %v3659
        %v4569 = vunpack.c.l.b16 %v3660
        %v4570 = vunpack.c.h.b16 %v3660
        %v4571 = vunpack.c.l.b16 %v3661
        %v4572 = vunpack.c.h.b16 %v3661
        %v4573 = vunpack.c.l.b16 %v3662
        %v4574 = vunpack.c.h.b16 %v3662
        %v4575 = vunpack.c.l.b16 %v3663
        %v4576 = vunpack.c.h.b16 %v3663
        %v4577 = vunpack.c.l.b16 %v3664
        %v4578 = vunpack.c.h.b16 %v3664
        %v4579 = vunpack.c.l.b16 %v3665
        %v4580 = vunpack.c.h.b16 %v3665
        %v4581 = vunpack.c.l.b16 %v3666
        %v4582 = vunpack.c.h.b16 %v3666
        %v4583 = vunpack.c.l.b16 %v3667
        %v4584 = vunpack.c.h.b16 %v3667
        %v4585 = vunpack.c.l.b16 %v3668
        %v4586 = vunpack.c.h.b16 %v3668
        %v4587 = vunpack.c.l.b16 %v3669
        %v4588 = vunpack.c.h.b16 %v3669
        %v4589 = vunpack.c.l.b16 %v3670
        %v4590 = vunpack.c.h.b16 %v3670
        %v4591 = vunpack.c.l.b16 %v3671
        %v4592 = vunpack.c.h.b16 %v3671
        %v4593 = vunpack.c.l.b16 %v3672
        %v4594 = vunpack.c.h.b16 %v3672
        %v4595 = vunpack.c.l.b16 %v3673
        %v4596 = vunpack.c.h.b16 %v3673
        %v4597 = vunpack.c.l.b16 %v3674
        %v4598 = vunpack.c.h.b16 %v3674
        %v4599 = vunpack.c.l.b16 %v3675
        %v4600 = vunpack.c.h.b16 %v3675
        %v4601 = vunpack.c.l.b16 %v3676
        %v4602 = vunpack.c.h.b16 %v3676
        %v4603 = vunpack.c.l.b16 %v3677
        %v4604 = vunpack.c.h.b16 %v3677
        %v4605 = vunpack.c.l.b16 %v3678
        %v4606 = vunpack.c.h.b16 %v3678
        %v4607 = vunpack.c.l.b16 %v3679
        %v4608 = vunpack.c.h.b16 %v3679
        %v4609 = vunpack.c.l.b16 %v3680
        %v4610 = vunpack.c.h.b16 %v3680
        %v4611 = vunpack.c.l.b16 %v3681
        %v4612 = vunpack.c.h.b16 %v3681
        %v4613 = vunpack.c.l.b16 %v3682
        %v4614 = vunpack.c.h.b16 %v3682
        %v4615 = vunpack.c.l.b16 %v3683
        %v4616 = vunpack.c.h.b16 %v3683
        %v4617 = vunpack.c.l.b16 %v3684
        %v4618 = vunpack.c.h.b16 %v3684
        %v4619 = vunpack.c.l.b16 %v3685
        %v4620 = vunpack.c.h.b16 %v3685
        %v4621 = vunpack.c.l.b16 %v3686
        %v4622 = vunpack.c.h.b16 %v3686
        %v4623 = vunpack.c.l.b16 %v3687
        %v4624 = vunpack.c.h.b16 %v3687
        %v4625 = vunpack.c.l.b16 %v3688
        %v4626 = vunpack.c.h.b16 %v3688
        %v4627 = vunpack.c.l.b16 %v3689
        %v4628 = vunpack.c.h.b16 %v3689
        %v4629 = vunpack.c.l.b16 %v3690
        %v4630 = vunpack.c.h.b16 %v3690
        %v4631 = vunpack.c.l.b16 %v3691
        %v4632 = vunpack.c.h.b16 %v3691
        %v4633 = vunpack.c.l.b16 %v3692
        %v4634 = vunpack.c.h.b16 %v3692
        %v4635 = vunpack.c.l.b16 %v3693
        %v4636 = vunpack.c.h.b16 %v3693
        %v4637 = vunpack.c.l.b16 %v3694
        %v4638 = vunpack.c.h.b16 %v3694
        %v4639 = vunpack.c.l.b16 %v3695
        %v4640 = vunpack.c.h.b16 %v3695
        %v4641 = vunpack.c.l.b16 %v3696
        %v4642 = vunpack.c.h.b16 %v3696
        %v4643 = vunpack.c.l.b16 %v3697
        %v4644 = vunpack.c.h.b16 %v3697
        %v4645 = vunpack.c.l.b16 %v3698
        %v4646 = vunpack.c.h.b16 %v3698
        %v4647 = vunpack.c.l.b16 %v3699
        %v4648 = vunpack.c.h.b16 %v3699
        %v4649 = vunpack.c.l.b16 %v3700
        %v4650 = vunpack.c.h.b16 %v3700
        %v4651 = vunpack.c.l.b16 %v3701
        %v4652 = vunpack.c.h.b16 %v3701
        %v4653 = vunpack.c.l.b16 %v3702
        %v4654 = vunpack.c.h.b16 %v3702
        %v4655 = vunpack.c.l.b16 %v3703
        %v4656 = vunpack.c.h.b16 %v3703
        %v4657 = vunpack.c.l.b16 %v3704
        %v4658 = vunpack.c.h.b16 %v3704
        %v4659 = vunpack.c.l.b16 %v3705
        %v4660 = vunpack.c.h.b16 %v3705
        %v4661 = vunpack.c.l.b16 %v3706
        %v4662 = vunpack.c.h.b16 %v3706
        %v4663 = vunpack.c.l.b16 %v3707
        %v4664 = vunpack.c.h.b16 %v3707
        %v4665 = vunpack.c.l.b16 %v3708
        %v4666 = vunpack.c.h.b16 %v3708
        %v4667 = vunpack.c.l.b16 %v3709
        %v4668 = vunpack.c.h.b16 %v3709
        %v4669 = vunpack.c.l.b16 %v3710
        %v4670 = vunpack.c.h.b16 %v3710
        %v4671 = vunpack.c.l.b16 %v3711
        %v4672 = vunpack.c.h.b16 %v3711
        %v4673 = vunpack.c.l.b16 %v3712
        %v4674 = vunpack.c.h.b16 %v3712
        %v4675 = vunpack.c.l.b16 %v3713
        %v4676 = vunpack.c.h.b16 %v3713
        %v4677 = vunpack.c.l.b16 %v3714
        %v4678 = vunpack.c.h.b16 %v3714
        %v4679 = vunpack.c.l.b16 %v3715
        %v4680 = vunpack.c.h.b16 %v3715
        %v4681 = vunpack.c.l.b16 %v3716
        %v4682 = vunpack.c.h.b16 %v3716
        %v4683 = vunpack.c.l.b16 %v3717
        %v4684 = vunpack.c.h.b16 %v3717
        %v4685 = vunpack.c.l.b16 %v3718
        %v4686 = vunpack.c.h.b16 %v3718
        %v4687 = vunpack.c.l.b16 %v3719
        %v4688 = vunpack.c.h.b16 %v3719
        %v4689 = vunpack.c.l.b16 %v3720
        %v4690 = vunpack.c.h.b16 %v3720
        %v4691 = vunpack.c.l.b16 %v3721
        %v4692 = vunpack.c.h.b16 %v3721
        %v4693 = vunpack.c.l.b16 %v3722
        %v4694 = vunpack.c.h.b16 %v3722
        %v4695 = vunpack.c.l.b16 %v3723
        %v4696 = vunpack.c.h.b16 %v3723
        %v4697 = vunpack.c.l.b16 %v3724
        %v4698 = vunpack.c.h.b16 %v3724
        %v4699 = vunpack.c.l.b16 %v3725
        %v4700 = vunpack.c.h.b16 %v3725
        %v4701 = vunpack.c.l.b16 %v3726
        %v4702 = vunpack.c.h.b16 %v3726
        %v4703 = vunpack.c.l.b16 %v3727
        %v4704 = vunpack.c.h.b16 %v3727
        %v4705 = vunpack.c.l.b16 %v3728
        %v4706 = vunpack.c.h.b16 %v3728
        %v4707 = vunpack.c.l.b16 %v3729
        %v4708 = vunpack.c.h.b16 %v3729
        %v4709 = vunpack.c.l.b16 %v3730
        %v4710 = vunpack.c.h.b16 %v3730
        %v4711 = vunpack.c.l.b16 %v3731
        %v4712 = vunpack.c.h.b16 %v3731
        %v4713 = vunpack.c.l.b16 %v3732
        %v4714 = vunpack.c.h.b16 %v3732
        %v4715 = vunpack.c.l.b16 %v3733
        %v4716 = vunpack.c.h.b16 %v3733
        %v4717 = vunpack.c.l.b16 %v3734
        %v4718 = vunpack.c.h.b16 %v3734
        %v4719 = vunpack.c.l.b16 %v3735
        %v4720 = vunpack.c.h.b16 %v3735
        %v4721 = vunpack.c.l.b16 %v3736
        %v4722 = vunpack.c.h.b16 %v3736
        %v4723 = vunpack.c.l.b16 %v3737
        %v4724 = vunpack.c.h.b16 %v3737
        %v4725 = vunpack.c.l.b16 %v3738
        %v4726 = vunpack.c.h.b16 %v3738
        %v4727 = vunpack.c.l.b16 %v3739
        %v4728 = vunpack.c.h.b16 %v3739
        %v4729 = vunpack.c.l.b16 %v3740
        %v4730 = vunpack.c.h.b16 %v3740
        %v4731 = vunpack.c.l.b16 %v3741
        %v4732 = vunpack.c.h.b16 %v3741
        %v4733 = vunpack.c.l.b16 %v3742
        %v4734 = vunpack.c.h.b16 %v3742
        %v4735 = vunpack.c.l.b16 %v3743
        %v4736 = vunpack.c.h.b16 %v3743
        %v4737 = vunpack.c.l.b16 %v3744
        %v4738 = vunpack.c.h.b16 %v3744
        %v4739 = vunpack.c.l.b16 %v3745
        %v4740 = vunpack.c.h.b16 %v3745
        %v4741 = vunpack.c.l.b16 %v3746
        %v4742 = vunpack.c.h.b16 %v3746
        %v4743 = vunpack.c.l.b16 %v3747
        %v4744 = vunpack.c.h.b16 %v3747
        %v4745 = vunpack.c.l.b16 %v3748
        %v4746 = vunpack.c.h.b16 %v3748
        %v4747 = vunpack.c.l.b16 %v3749
        %v4748 = vunpack.c.h.b16 %v3749
        %v4749 = vunpack.c.l.b16 %v3750
        %v4750 = vunpack.c.h.b16 %v3750
        %v4751 = vunpack.c.l.b16 %v3751
        %v4752 = vunpack.c.h.b16 %v3751
        %v4753 = vunpack.c.l.b16 %v3752
        %v4754 = vunpack.c.h.b16 %v3752
        %v4755 = vunpack.c.l.b16 %v3753
        %v4756 = vunpack.c.h.b16 %v3753
        %v4757 = vunpack.c.l.b16 %v3754
        %v4758 = vunpack.c.h.b16 %v3754
        %v4759 = vunpack.c.l.b16 %v3755
        %v4760 = vunpack.c.h.b16 %v3755
        %v4761 = vunpack.c.l.b16 %v3756
        %v4762 = vunpack.c.h.b16 %v3756
        %v4763 = vunpack.c.l.b16 %v3757
        %v4764 = vunpack.c.h.b16 %v3757
        %v4765 = vunpack.c.l.b16 %v3758
        %v4766 = vunpack.c.h.b16 %v3758
        %v4767 = vunpack.c.l.b16 %v3759
        %v4768 = vunpack.c.h.b16 %v3759
        %v4769 = vunpack.c.l.b16 %v3760
        %v4770 = vunpack.c.h.b16 %v3760
        %v4771 = vunpack.c.l.b16 %v3761
        %v4772 = vunpack.c.h.b16 %v3761
        %v4773 = vunpack.c.l.b16 %v3762
        %v4774 = vunpack.c.h.b16 %v3762
        %v4775 = vunpack.c.l.b16 %v3763
        %v4776 = vunpack.c.h.b16 %v3763
        %v4777 = vunpack.c.l.b16 %v3764
        %v4778 = vunpack.c.h.b16 %v3764
        %v4779 = vunpack.c.l.b16 %v3765
        %v4780 = vunpack.c.h.b16 %v3765
        %v4781 = vunpack.c.l.b16 %v3766
        %v4782 = vunpack.c.h.b16 %v3766
        %v4783 = vunpack.c.l.b16 %v3767
        %v4784 = vunpack.c.h.b16 %v3767
        %v4785 = vunpack.c.l.b16 %v3768
        %v4786 = vunpack.c.h.b16 %v3768
        %v4787 = vunpack.c.l.b16 %v3769
        %v4788 = vunpack.c.h.b16 %v3769
        %v4789 = vunpack.c.l.b16 %v3770
        %v4790 = vunpack.c.h.b16 %v3770
        %v4791 = vunpack.c.l.b16 %v3771
        %v4792 = vunpack.c.h.b16 %v3771
        %v4793 = vunpack.c.l.b16 %v3772
        %v4794 = vunpack.c.h.b16 %v3772
        %v4795 = vunpack.c.l.b16 %v3773
        %v4796 = vunpack.c.h.b16 %v3773
        %v4797 = vunpack.c.l.b16 %v3774
        %v4798 = vunpack.c.h.b16 %v3774
        %v4799 = vunpack.c.l.b16 %v3775
        %v4800 = vunpack.c.h.b16 %v3775
        %v4801 = vunpack.c.l.b16 %v3776
        %v4802 = vunpack.c.h.b16 %v3776
        %v4803 = vunpack.c.l.b16 %v3777
        %v4804 = vunpack.c.h.b16 %v3777
        %v4805 = vunpack.c.l.b16 %v3778
        %v4806 = vunpack.c.h.b16 %v3778
        %v4807 = vunpack.c.l.b16 %v3779
        %v4808 = vunpack.c.h.b16 %v3779
        %v4809 = vunpack.c.l.b16 %v3780
        %v4810 = vunpack.c.h.b16 %v3780
        %v4811 = vunpack.c.l.b16 %v3781
        %v4812 = vunpack.c.h.b16 %v3781
        %v4813 = vunpack.c.l.b16 %v3782
        %v4814 = vunpack.c.h.b16 %v3782
        %v4815 = vunpack.c.l.b16 %v3783
        %v4816 = vunpack.c.h.b16 %v3783
        %v4817 = vunpack.c.l.b16 %v3784
        %v4818 = vunpack.c.h.b16 %v3784
        %v4819 = vunpack.c.l.b16 %v3785
        %v4820 = vunpack.c.h.b16 %v3785
        %v4821 = vunpack.c.l.b16 %v3786
        %v4822 = vunpack.c.h.b16 %v3786
        %v4823 = vunpack.c.l.b16 %v3787
        %v4824 = vunpack.c.h.b16 %v3787
        %v4825 = vunpack.c.l.b16 %v3788
        %v4826 = vunpack.c.h.b16 %v3788
        %v4827 = vunpack.c.l.b16 %v3789
        %v4828 = vunpack.c.h.b16 %v3789
        %v4829 = vunpack.c.l.b16 %v3790
        %v4830 = vunpack.c.h.b16 %v3790
        %v4831 = vunpack.c.l.b16 %v3791
        %v4832 = vunpack.c.h.b16 %v3791
        %v4833 = vunpack.c.l.b16 %v3792
        %v4834 = vunpack.c.h.b16 %v3792
        %v4835 = vunpack.c.l.b16 %v3793
        %v4836 = vunpack.c.h.b16 %v3793
        %v4837 = vunpack.c.l.b16 %v3794
        %v4838 = vunpack.c.h.b16 %v3794
        %v4839 = vunpack.c.l.b16 %v3795
        %v4840 = vunpack.c.h.b16 %v3795
        %v4841 = vunpack.c.l.b16 %v3796
        %v4842 = vunpack.c.h.b16 %v3796
        %v4843 = vunpack.c.l.b16 %v3797
        %v4844 = vunpack.c.h.b16 %v3797
        %v4845 = vunpack.c.l.b16 %v3798
        %v4846 = vunpack.c.h.b16 %v3798
        %v4847 = vunpack.c.l.b16 %v3799
        %v4848 = vunpack.c.h.b16 %v3799
        %v4849 = vunpack.c.l.b16 %v3800
        %v4850 = vunpack.c.h.b16 %v3800
        %v4851 = vunpack.c.l.b16 %v3801
        %v4852 = vunpack.c.h.b16 %v3801
        %v4853 = vunpack.c.l.b16 %v3802
        %v4854 = vunpack.c.h.b16 %v3802
        %v4855 = vunpack.c.l.b16 %v3803
        %v4856 = vunpack.c.h.b16 %v3803
        %v4857 = vunpack.c.l.b16 %v3804
        %v4858 = vunpack.c.h.b16 %v3804
        %v4859 = vunpack.c.l.b16 %v3805
        %v4860 = vunpack.c.h.b16 %v3805
        %v4861 = vunpack.c.l.b16 %v3806
        %v4862 = vunpack.c.h.b16 %v3806
        %v4863 = vunpack.c.l.b16 %v3807
        %v4864 = vunpack.c.h.b16 %v3807
        %v4865 = vunpack.c.l.b16 %v3808
        %v4866 = vunpack.c.h.b16 %v3808
        %v4867 = vunpack.c.l.b16 %v3809
        %v4868 = vunpack.c.h.b16 %v3809
        %v4869 = vunpack.c.l.b16 %v3810
        %v4870 = vunpack.c.h.b16 %v3810
        %v4871 = vunpack.c.l.b16 %v3811
        %v4872 = vunpack.c.h.b16 %v3811
        %v4873 = vunpack.c.l.b16 %v3812
        %v4874 = vunpack.c.h.b16 %v3812
        %v4875 = vunpack.c.l.b16 %v3813
        %v4876 = vunpack.c.h.b16 %v3813
        %v4877 = vunpack.c.l.b16 %v3814
        %v4878 = vunpack.c.h.b16 %v3814
        %v4879 = vunpack.c.l.b16 %v3815
        %v4880 = vunpack.c.h.b16 %v3815
        %v4881 = vunpack.c.l.b16 %v3816
        %v4882 = vunpack.c.h.b16 %v3816
        %v4883 = vunpack.c.l.b16 %v3817
        %v4884 = vunpack.c.h.b16 %v3817
        %v4885 = vunpack.c.l.b16 %v3818
        %v4886 = vunpack.c.h.b16 %v3818
        %v4887 = vunpack.c.l.b16 %v3819
        %v4888 = vunpack.c.h.b16 %v3819
        %v4889 = vunpack.c.l.b16 %v3820
        %v4890 = vunpack.c.h.b16 %v3820
        %v4891 = vunpack.c.l.b16 %v3821
        %v4892 = vunpack.c.h.b16 %v3821
        %v4893 = vunpack.c.l.b16 %v3822
        %v4894 = vunpack.c.h.b16 %v3822
        %v4895 = vunpack.c.l.b16 %v3823
        %v4896 = vunpack.c.h.b16 %v3823
        %v4897 = vunpack.c.l.b16 %v3824
        %v4898 = vunpack.c.h.b16 %v3824
        %v4899 = vunpack.c.l.b16 %v3825
        %v4900 = vunpack.c.h.b16 %v3825
        %v4901 = vunpack.c.l.b16 %v3826
        %v4902 = vunpack.c.h.b16 %v3826
        %v4903 = vunpack.c.l.b16 %v3827
        %v4904 = vunpack.c.h.b16 %v3827
        %v4905 = vunpack.c.l.b16 %v3828
        %v4906 = vunpack.c.h.b16 %v3828
        %v4907 = vunpack.c.l.b16 %v3829
        %v4908 = vunpack.c.h.b16 %v3829
        %v4909 = vunpack.c.l.b16 %v3830
        %v4910 = vunpack.c.h.b16 %v3830
        %v4911 = vunpack.c.l.b16 %v3831
        %v4912 = vunpack.c.h.b16 %v3831
        %v4913 = vunpack.c.l.b16 %v3832
        %v4914 = vunpack.c.h.b16 %v3832
        %v4915 = vunpack.c.l.b16 %v3833
        %v4916 = vunpack.c.h.b16 %v3833
        %v4917 = vunpack.c.l.b16 %v3834
        %v4918 = vunpack.c.h.b16 %v3834
        %v4919 = vunpack.c.l.b16 %v3835
        %v4920 = vunpack.c.h.b16 %v3835
        %v4921 = vunpack.c.l.b16 %v3836
        %v4922 = vunpack.c.h.b16 %v3836
        %v4923 = vunpack.c.l.b16 %v3837
        %v4924 = vunpack.c.h.b16 %v3837
        %v4925 = vunpack.c.l.b16 %v3838
        %v4926 = vunpack.c.h.b16 %v3838
        %v4927 = vunpack.c.l.b16 %v3839
        %v4928 = vunpack.c.h.b16 %v3839
        %v4929 = vunpack.c.l.b16 %v3840
        %v4930 = vunpack.c.h.b16 %v3840
        %v4931 = vunpack.c.l.b16 %v3841
        %v4932 = vunpack.c.h.b16 %v3841
        %v4933 = vunpack.c.l.b16 %v3842
        %v4934 = vunpack.c.h.b16 %v3842
        %v4935 = vunpack.c.l.b16 %v3843
        %v4936 = vunpack.c.h.b16 %v3843
        %v4937 = vunpack.c.l.b16 %v3844
        %v4938 = vunpack.c.h.b16 %v3844
        %v4939 = vunpack.c.l.b16 %v3845
        %v4940 = vunpack.c.h.b16 %v3845
        %v4941 = vunpack.c.l.b16 %v3846
        %v4942 = vunpack.c.h.b16 %v3846
        %v4943 = vunpack.c.l.b16 %v3847
        %v4944 = vunpack.c.h.b16 %v3847
        %v4945 = vunpack.c.l.b16 %v3848
        %v4946 = vunpack.c.h.b16 %v3848
        %v4947 = vunpack.c.l.b16 %v3849
        %v4948 = vunpack.c.h.b16 %v3849
        %v4949 = vunpack.c.l.b16 %v3850
        %v4950 = vunpack.c.h.b16 %v3850
        %v4951 = vunpack.c.l.b16 %v3851
        %v4952 = vunpack.c.h.b16 %v3851
        %v4953 = vunpack.c.l.b16 %v3852
        %v4954 = vunpack.c.h.b16 %v3852
        %v4955 = vunpack.c.l.b16 %v3853
        %v4956 = vunpack.c.h.b16 %v3853
        %v4957 = vunpack.c.l.b16 %v3854
        %v4958 = vunpack.c.h.b16 %v3854
        %v4959 = vunpack.c.l.b16 %v3855
        %v4960 = vunpack.c.h.b16 %v3855
        %v4961 = vunpack.c.l.b16 %v3856
        %v4962 = vunpack.c.h.b16 %v3856
        %v4963 = vunpack.c.l.b16 %v3857
        %v4964 = vunpack.c.h.b16 %v3857
        %v4965 = vunpack.c.l.b16 %v3858
        %v4966 = vunpack.c.h.b16 %v3858
        %v4967 = vunpack.c.l.b16 %v3859
        %v4968 = vunpack.c.h.b16 %v3859
        %v4969 = vunpack.c.l.b16 %v3860
        %v4970 = vunpack.c.h.b16 %v3860
        %v4971 = vunpack.c.l.b16 %v3861
        %v4972 = vunpack.c.h.b16 %v3861
        %v4973 = vunpack.c.l.b16 %v3862
        %v4974 = vunpack.c.h.b16 %v3862
        %v4975 = vunpack.c.l.b16 %v3863
        %v4976 = vunpack.c.h.b16 %v3863
        %v4977 = vunpack.c.l.b16 %v3864
        %v4978 = vunpack.c.h.b16 %v3864
        %v4979 = vunpack.c.l.b16 %v3865
        %v4980 = vunpack.c.h.b16 %v3865
        %v4981 = vunpack.c.l.b16 %v3866
        %v4982 = vunpack.c.h.b16 %v3866
        %v4983 = vunpack.c.l.b16 %v3867
        %v4984 = vunpack.c.h.b16 %v3867
        %v4985 = vunpack.c.l.b16 %v3868
        %v4986 = vunpack.c.h.b16 %v3868
        %v4987 = vunpack.c.l.b16 %v3869
        %v4988 = vunpack.c.h.b16 %v3869
        %v4989 = vunpack.c.l.b16 %v3870
        %v4990 = vunpack.c.h.b16 %v3870
        %v4991 = vunpack.c.l.b16 %v3871
        %v4992 = vunpack.c.h.b16 %v3871
        %v4993 = vunpack.c.l.b16 %v3872
        %v4994 = vunpack.c.h.b16 %v3872
        %v4995 = vunpack.c.l.b16 %v3873
        %v4996 = vunpack.c.h.b16 %v3873
        %v4997 = vunpack.c.l.b16 %v3874
        %v4998 = vunpack.c.h.b16 %v3874
        %v4999 = vunpack.c.l.b16 %v3875
        %v5000 = vunpack.c.h.b16 %v3875
        %v5001 = vunpack.c.l.b16 %v3876
        %v5002 = vunpack.c.h.b16 %v3876
        %v5003 = vunpack.c.l.b16 %v3877
        %v5004 = vunpack.c.h.b16 %v3877
        %v5005 = vunpack.c.l.b16 %v3878
        %v5006 = vunpack.c.h.b16 %v3878
        %v5007 = vunpack.c.l.b16 %v3879
        %v5008 = vunpack.c.h.b16 %v3879
        %v5009 = vunpack.c.l.b16 %v3880
        %v5010 = vunpack.c.h.b16 %v3880
        %v5011 = vunpack.c.l.b16 %v3881
        %v5012 = vunpack.c.h.b16 %v3881
        %v5013 = vunpack.c.l.b16 %v3882
        %v5014 = vunpack.c.h.b16 %v3882
        %v5015 = vunpack.c.l.b16 %v3883
        %v5016 = vunpack.c.h.b16 %v3883
        %v5017 = vunpack.c.l.b16 %v3884
        %v5018 = vunpack.c.h.b16 %v3884
        %v5019 = vunpack.c.l.b16 %v3885
        %v5020 = vunpack.c.h.b16 %v3885
        %v5021 = vunpack.c.l.b16 %v3886
        %v5022 = vunpack.c.h.b16 %v3886
        %v5023 = vunpack.c.l.b16 %v3887
        %v5024 = vunpack.c.h.b16 %v3887
        %v5025 = vunpack.c.l.b16 %v3888
        %v5026 = vunpack.c.h.b16 %v3888
        %v5027 = vunpack.c.l.b16 %v3889
        %v5028 = vunpack.c.h.b16 %v3889
        %v5029 = vunpack.c.l.b16 %v3890
        %v5030 = vunpack.c.h.b16 %v3890
        %v5031 = vunpack.c.l.b16 %v3891
        %v5032 = vunpack.c.h.b16 %v3891
        %v5033 = vunpack.c.l.b16 %v3892
        %v5034 = vunpack.c.h.b16 %v3892
        %v5035 = vunpack.c.l.b16 %v3893
        %v5036 = vunpack.c.h.b16 %v3893
        %v5037 = vunpack.c.l.b16 %v3894
        %v5038 = vunpack.c.h.b16 %v3894
        %v5039 = vunpack.c.l.b16 %v3895
        %v5040 = vunpack.c.h.b16 %v3895
        %v5041 = vunpack.c.l.b16 %v3896
        %v5042 = vunpack.c.h.b16 %v3896
        %v5043 = vunpack.c.l.b16 %v3897
        %v5044 = vunpack.c.h.b16 %v3897
        %v5045 = vunpack.c.l.b16 %v3898
        %v5046 = vunpack.c.h.b16 %v3898
        %v5047 = vunpack.c.l.b16 %v3899
        %v5048 = vunpack.c.h.b16 %v3899
        %v5049 = vunpack.c.l.b16 %v3900
        %v5050 = vunpack.c.h.b16 %v3900
        %v5051 = vunpack.c.l.b16 %v3901
        %v5052 = vunpack.c.h.b16 %v3901
        %v5053 = vunpack.c.l.b16 %v3902
        %v5054 = vunpack.c.h.b16 %v3902
        %v5055 = vunpack.c.l.b16 %v3903
        %v5056 = vunpack.c.h.b16 %v3903
        %v5057 = vunpack.c.l.b16 %v3904
        %v5058 = vunpack.c.h.b16 %v3904
        %v5059 = vunpack.c.l.b16 %v3905
        %v5060 = vunpack.c.h.b16 %v3905
        %v5061 = vunpack.c.l.b16 %v3906
        %v5062 = vunpack.c.h.b16 %v3906
        %v5063 = vunpack.c.l.b16 %v3907
        %v5064 = vunpack.c.h.b16 %v3907
        %v5065 = vunpack.c.l.b16 %v3908
        %v5066 = vunpack.c.h.b16 %v3908
        %v5067 = vunpack.c.l.b16 %v3909
        %v5068 = vunpack.c.h.b16 %v3909
        %v5069 = vunpack.c.l.b16 %v3910
        %v5070 = vunpack.c.h.b16 %v3910
        %v5071 = vunpack.c.l.b16 %v3911
        %v5072 = vunpack.c.h.b16 %v3911
        %v5073 = vunpack.c.l.b16 %v3912
        %v5074 = vunpack.c.h.b16 %v3912
        %v5075 = vunpack.c.l.b16 %v3913
        %v5076 = vunpack.c.h.b16 %v3913
        %v5077 = vunpack.c.l.b16 %v3914
        %v5078 = vunpack.c.h.b16 %v3914
        %v5079 = vunpack.c.l.b16 %v3915
        %v5080 = vunpack.c.h.b16 %v3915
        %v5081 = vunpack.c.l.b16 %v3916
        %v5082 = vunpack.c.h.b16 %v3916
        %v5083 = vunpack.c.l.b16 %v3917
        %v5084 = vunpack.c.h.b16 %v3917
        %v5085 = vunpack.c.l.b16 %v3918
        %v5086 = vunpack.c.h.b16 %v3918
        %v5087 = vunpack.c.l.b16 %v3919
        %v5088 = vunpack.c.h.b16 %v3919
        %v5089 = vunpack.c.l.b16 %v3920
        %v5090 = vunpack.c.h.b16 %v3920
        %v5091 = vunpack.c.l.b16 %v3921
        %v5092 = vunpack.c.h.b16 %v3921
        %v5093 = vunpack.c.l.b16 %v3922
        %v5094 = vunpack.c.h.b16 %v3922
        %v5095 = vunpack.c.l.b16 %v3923
        %v5096 = vunpack.c.h.b16 %v3923
        %v5097 = vunpack.c.l.b16 %v3924
        %v5098 = vunpack.c.h.b16 %v3924
        %v5099 = vunpack.c.l.b16 %v3925
        %v5100 = vunpack.c.h.b16 %v3925
        %v5101 = vunpack.c.l.b16 %v3926
        %v5102 = vunpack.c.h.b16 %v3926
        %v5103 = vunpack.c.l.b16 %v3927
        %v5104 = vunpack.c.h.b16 %v3927
        %v5105 = vunpack.c.l.b16 %v3928
        %v5106 = vunpack.c.h.b16 %v3928
        %v5107 = vunpack.c.l.b16 %v3929
        %v5108 = vunpack.c.h.b16 %v3929
        %v5109 = vunpack.c.l.b16 %v3930
        %v5110 = vunpack.c.h.b16 %v3930
        %v5111 = vunpack.c.l.b16 %v3931
        %v5112 = vunpack.c.h.b16 %v3931
        %v5113 = vunpack.c.l.b16 %v3932
        %v5114 = vunpack.c.h.b16 %v3932
        %v5115 = vunpack.c.l.b16 %v3933
        %v5116 = vunpack.c.h.b16 %v3933
        %v5117 = vunpack.c.l.b16 %v3934
        %v5118 = vunpack.c.h.b16 %v3934
        %v5119 = vunpack.c.l.b16 %v3935
        %v5120 = vunpack.c.h.b16 %v3935
        %v5121 = vunpack.c.l.b16 %v3936
        %v5122 = vunpack.c.h.b16 %v3936
        %v5123 = vunpack.c.l.b16 %v3937
        %v5124 = vunpack.c.h.b16 %v3937
        %v5125 = vunpack.c.l.b16 %v3938
        %v5126 = vunpack.c.h.b16 %v3938
        %v5127 = vunpack.c.l.b16 %v3939
        %v5128 = vunpack.c.h.b16 %v3939
        %v5129 = vunpack.c.l.b16 %v3940
        %v5130 = vunpack.c.h.b16 %v3940
        %v5131 = vunpack.c.l.b16 %v3941
        %v5132 = vunpack.c.h.b16 %v3941
        %v5133 = vunpack.c.l.b16 %v3942
        %v5134 = vunpack.c.h.b16 %v3942
        %v5135 = vunpack.c.l.b16 %v3943
        %v5136 = vunpack.c.h.b16 %v3943
        %v5137 = vunpack.c.l.b16 %v3944
        %v5138 = vunpack.c.h.b16 %v3944
        %v5139 = vunpack.c.l.b16 %v3945
        %v5140 = vunpack.c.h.b16 %v3945
        %v5141 = vunpack.c.l.b16 %v3946
        %v5142 = vunpack.c.h.b16 %v3946
        %v5143 = vunpack.c.l.b16 %v3947
        %v5144 = vunpack.c.h.b16 %v3947
        %v5145 = vunpack.c.l.b16 %v3948
        %v5146 = vunpack.c.h.b16 %v3948
        %v5147 = vunpack.c.l.b16 %v3949
        %v5148 = vunpack.c.h.b16 %v3949
        %v5149 = vunpack.c.l.b16 %v3950
        %v5150 = vunpack.c.h.b16 %v3950
        %v5151 = vunpack.c.l.b16 %v3951
        %v5152 = vunpack.c.h.b16 %v3951
        %v5153 = vunpack.c.l.b16 %v3952
        %v5154 = vunpack.c.h.b16 %v3952
        %v5155 = vunpack.c.l.b16 %v3953
        %v5156 = vunpack.c.h.b16 %v3953
        %v5157 = vunpack.c.l.b16 %v3954
        %v5158 = vunpack.c.h.b16 %v3954
        %v5159 = vunpack.c.l.b16 %v3955
        %v5160 = vunpack.c.h.b16 %v3955
        %v5161 = vunpack.c.l.b16 %v3956
        %v5162 = vunpack.c.h.b16 %v3956
        %v5163 = vunpack.c.l.b16 %v3957
        %v5164 = vunpack.c.h.b16 %v3957
        %v5165 = vunpack.c.l.b16 %v3958
        %v5166 = vunpack.c.h.b16 %v3958
        %v5167 = vunpack.c.l.b16 %v3959
        %v5168 = vunpack.c.h.b16 %v3959
        %v5169 = vunpack.c.l.b16 %v3960
        %v5170 = vunpack.c.h.b16 %v3960
        %v5171 = vunpack.c.l.b16 %v3961
        %v5172 = vunpack.c.h.b16 %v3961
        %v5173 = vunpack.c.l.b16 %v3962
        %v5174 = vunpack.c.h.b16 %v3962
        %v5175 = vunpack.c.l.b16 %v3963
        %v5176 = vunpack.c.h.b16 %v3963
        %v5177 = vunpack.c.l.b16 %v3964
        %v5178 = vunpack.c.h.b16 %v3964
        %v5179 = vunpack.c.l.b16 %v3965
        %v5180 = vunpack.c.h.b16 %v3965
        %v5181 = vunpack.c.l.b16 %v3966
        %v5182 = vunpack.c.h.b16 %v3966
        %v5183 = vunpack.c.l.b16 %v3967
        %v5184 = vunpack.c.h.b16 %v3967
        %v5185 = vunpack.c.l.b16 %v3968
        %v5186 = vunpack.c.h.b16 %v3968
        %v5187 = vunpack.c.l.b16 %v3969
        %v5188 = vunpack.c.h.b16 %v3969
        %v5189 = vunpack.c.l.b16 %v3970
        %v5190 = vunpack.c.h.b16 %v3970
        %v5191 = vunpack.c.l.b16 %v3971
        %v5192 = vunpack.c.h.b16 %v3971
        %v5193 = vunpack.c.l.b16 %v3972
        %v5194 = vunpack.c.h.b16 %v3972
        %v5195 = vunpack.c.l.b16 %v3973
        %v5196 = vunpack.c.h.b16 %v3973
        %v5197 = vunpack.c.l.b16 %v3974
        %v5198 = vunpack.c.h.b16 %v3974
        %v5199 = vunpack.c.l.b16 %v3975
        %v5200 = vunpack.c.h.b16 %v3975
        %v5201 = vunpack.c.l.b16 %v3976
        %v5202 = vunpack.c.h.b16 %v3976
        %v5203 = vunpack.c.l.b16 %v3977
        %v5204 = vunpack.c.h.b16 %v3977
        %v5205 = vunpack.c.l.b16 %v3978
        %v5206 = vunpack.c.h.b16 %v3978
        %v5207 = vunpack.c.l.b16 %v3979
        %v5208 = vunpack.c.h.b16 %v3979
        %v5209 = vunpack.c.l.b16 %v3980
        %v5210 = vunpack.c.h.b16 %v3980
        %v5211 = vunpack.c.l.b16 %v3981
        %v5212 = vunpack.c.h.b16 %v3981
        %v5213 = vunpack.c.l.b16 %v3982
        %v5214 = vunpack.c.h.b16 %v3982
        %v5215 = vunpack.c.l.b16 %v3983
        %v5216 = vunpack.c.h.b16 %v3983
        %v5217 = vunpack.c.l.b16 %v3984
        %v5218 = vunpack.c.h.b16 %v3984
        %v5219 = vunpack.c.l.b16 %v3985
        %v5220 = vunpack.c.h.b16 %v3985
        %v5221 = vunpack.c.l.b16 %v3986
        %v5222 = vunpack.c.h.b16 %v3986
        %v5223 = vunpack.c.l.b16 %v3987
        %v5224 = vunpack.c.h.b16 %v3987
        %v5225 = vunpack.c.l.b16 %v3988
        %v5226 = vunpack.c.h.b16 %v3988
        %v5227 = vunpack.c.l.b16 %v3989
        %v5228 = vunpack.c.h.b16 %v3989
        %v5229 = vunpack.c.l.b16 %v3990
        %v5230 = vunpack.c.h.b16 %v3990
        %v5231 = vunpack.c.l.b16 %v3991
        %v5232 = vunpack.c.h.b16 %v3991
        %v5233 = vunpack.c.l.b16 %v3992
        %v5234 = vunpack.c.h.b16 %v3992
        %v5235 = vunpack.c.l.b16 %v3993
        %v5236 = vunpack.c.h.b16 %v3993
        %v5237 = vunpack.c.l.b16 %v3994
        %v5238 = vunpack.c.h.b16 %v3994
        %v5239 = vunpack.c.l.b16 %v3995
        %v5240 = vunpack.c.h.b16 %v3995
        %v5241 = vunpack.c.l.b16 %v3996
        %v5242 = vunpack.c.h.b16 %v3996
        %v5243 = vunpack.c.l.b16 %v3997
        %v5244 = vunpack.c.h.b16 %v3997
        %v5245 = vunpack.c.l.b16 %v3998
        %v5246 = vunpack.c.h.b16 %v3998
        %v5247 = vunpack.c.l.b16 %v3999
        %v5248 = vunpack.c.h.b16 %v3999
        %v5249 = vunpack.c.l.b16 %v4000
        %v5250 = vunpack.c.h.b16 %v4000
        %v5251 = vunpack.c.l.b16 %v4001
        %v5252 = vunpack.c.h.b16 %v4001
        %v5253 = vunpack.c.l.b16 %v4002
        %v5254 = vunpack.c.h.b16 %v4002
        %v5255 = vunpack.c.l.b16 %v4003
        %v5256 = vunpack.c.h.b16 %v4003
        %v5257 = vunpack.c.l.b16 %v4004
        %v5258 = vunpack.c.h.b16 %v4004
        %v5259 = vunpack.c.l.b16 %v4005
        %v5260 = vunpack.c.h.b16 %v4005
        %v5261 = vunpack.c.l.b16 %v4006
        %v5262 = vunpack.c.h.b16 %v4006
        %v5263 = vunpack.c.l.b16 %v4007
        %v5264 = vunpack.c.h.b16 %v4007
        %v5265 = vunpack.c.l.b16 %v4008
        %v5266 = vunpack.c.h.b16 %v4008
        %v5267 = vunpack.c.l.b16 %v4009
        %v5268 = vunpack.c.h.b16 %v4009
        %v5269 = vunpack.c.l.b16 %v4010
        %v5270 = vunpack.c.h.b16 %v4010
        %v5271 = vunpack.c.l.b16 %v4011
        %v5272 = vunpack.c.h.b16 %v4011
        %v5273 = vunpack.c.l.b16 %v4012
        %v5274 = vunpack.c.h.b16 %v4012
        %v5275 = vunpack.c.l.b16 %v4013
        %v5276 = vunpack.c.h.b16 %v4013
        %v5277 = vunpack.c.l.b16 %v4014
        %v5278 = vunpack.c.h.b16 %v4014
        %v5279 = vunpack.c.l.b16 %v4015
        %v5280 = vunpack.c.h.b16 %v4015
        %v5281 = vunpack.c.l.b16 %v4016
        %v5282 = vunpack.c.h.b16 %v4016
        %v5283 = vunpack.c.l.b16 %v4017
        %v5284 = vunpack.c.h.b16 %v4017
        %v5285 = vunpack.c.l.b16 %v4018
        %v5286 = vunpack.c.h.b16 %v4018
        %v5287 = vunpack.c.l.b16 %v4019
        %v5288 = vunpack.c.h.b16 %v4019
        %v5289 = vunpack.c.l.b16 %v4020
        %v5290 = vunpack.c.h.b16 %v4020
        %v5291 = vunpack.c.l.b16 %v4021
        %v5292 = vunpack.c.h.b16 %v4021
        %v5293 = vunpack.c.l.b16 %v4022
        %v5294 = vunpack.c.h.b16 %v4022
        %v5295 = vunpack.c.l.b16 %v4023
        %v5296 = vunpack.c.h.b16 %v4023
        %v5297 = vunpack.c.l.b16 %v4024
        %v5298 = vunpack.c.h.b16 %v4024
        %v5299 = vunpack.c.l.b16 %v4025
        %v5300 = vunpack.c.h.b16 %v4025
        %v5301 = vunpack.c.l.b16 %v4026
        %v5302 = vunpack.c.h.b16 %v4026
        %v5303 = vunpack.c.l.b16 %v4027
        %v5304 = vunpack.c.h.b16 %v4027
        %v5305 = vunpack.c.l.b16 %v4028
        %v5306 = vunpack.c.h.b16 %v4028
        %v5307 = vunpack.c.l.b16 %v4029
        %v5308 = vunpack.c.h.b16 %v4029
        %v5309 = vunpack.c.l.b16 %v4030
        %v5310 = vunpack.c.h.b16 %v4030
        %v5311 = vunpack.c.l.b16 %v4031
        %v5312 = vunpack.c.h.b16 %v4031
        %v5313 = vunpack.c.l.b16 %v4032
        %v5314 = vunpack.c.h.b16 %v4032
        %v5315 = vunpack.c.l.b16 %v4033
        %v5316 = vunpack.c.h.b16 %v4033
        %v5317 = vunpack.c.l.b16 %v4034
        %v5318 = vunpack.c.h.b16 %v4034
        %v5319 = vunpack.c.l.b16 %v4035
        %v5320 = vunpack.c.h.b16 %v4035
        %v5321 = vunpack.c.l.b16 %v4036
        %v5322 = vunpack.c.h.b16 %v4036
        %v5323 = vunpack.c.l.b16 %v4037
        %v5324 = vunpack.c.h.b16 %v4037
        %v5325 = vunpack.c.l.b16 %v4038
        %v5326 = vunpack.c.h.b16 %v4038
        %v5327 = vunpack.c.l.b16 %v4039
        %v5328 = vunpack.c.h.b16 %v4039
        %v5329 = vunpack.c.l.b16 %v4040
        %v5330 = vunpack.c.h.b16 %v4040
        %v5331 = vunpack.c.l.b16 %v4041
        %v5332 = vunpack.c.h.b16 %v4041
        %v5333 = vunpack.c.l.b16 %v4042
        %v5334 = vunpack.c.h.b16 %v4042
        %v5335 = vunpack.c.l.b16 %v4043
        %v5336 = vunpack.c.h.b16 %v4043
        %v5337 = vunpack.c.l.b16 %v4044
        %v5338 = vunpack.c.h.b16 %v4044
        %v5339 = vunpack.c.l.b16 %v4045
        %v5340 = vunpack.c.h.b16 %v4045
        %v5341 = vunpack.c.l.b16 %v4046
        %v5342 = vunpack.c.h.b16 %v4046
        %v5343 = vpack.c.b16 %v4485, %v4479
        %v5344 = vpack.c.b16 %v4486, %v4480
        %v5345 = vpack.c.b16 %v4487, %v4481
        %v5346 = vpack.c.b16 %v4488, %v4482
        %v5347 = vpack.c.b16 %v4489, %v4483
        %v5348 = vpack.c.b16 %v4490, %v4484
        %v5349 = vpack.c.b16 %v4497, %v4491
        %v5350 = vpack.c.b16 %v4498, %v4492
        %v5351 = vpack.c.b16 %v4499, %v4493
        %v5352 = vpack.c.b16 %v4500, %v4494
        %v5353 = vpack.c.b16 %v4501, %v4495
        %v5354 = vpack.c.b16 %v4502, %v4496
        %v5355 = vpack.c.b16 %v4509, %v4503
        %v5356 = vpack.c.b16 %v4510, %v4504
        %v5357 = vpack.c.b16 %v4511, %v4505
        %v5358 = vpack.c.b16 %v4512, %v4506
        %v5359 = vpack.c.b16 %v4513, %v4507
        %v5360 = vpack.c.b16 %v4514, %v4508
        %v5361 = vpack.c.b16 %v4521, %v4515
        %v5362 = vpack.c.b16 %v4522, %v4516
        %v5363 = vpack.c.b16 %v4523, %v4517
        %v5364 = vpack.c.b16 %v4524, %v4518
        %v5365 = vpack.c.b16 %v4525, %v4519
        %v5366 = vpack.c.b16 %v4526, %v4520
        %v5367 = vpack.c.b16 %v4533, %v4527
        %v5368 = vpack.c.b16 %v4534, %v4528
        %v5369 = vpack.c.b16 %v4535, %v4529
        %v5370 = vpack.c.b16 %v4536, %v4530
        %v5371 = vpack.c.b16 %v4537, %v4531
        %v5372 = vpack.c.b16 %v4538, %v4532
        %v5373 = vpack.c.b16 %v4545, %v4539
        %v5374 = vpack.c.b16 %v4546, %v4540
        %v5375 = vpack.c.b16 %v4547, %v4541
        %v5376 = vpack.c.b16 %v4548, %v4542
        %v5377 = vpack.c.b16 %v4549, %v4543
        %v5378 = vpack.c.b16 %v4550, %v4544
        %v5379 = vpack.c.b16 %v4557, %v4551
        %v5380 = vpack.c.b16 %v4558, %v4552
        %v5381 = vpack.c.b16 %v4559, %v4553
        %v5382 = vpack.c.b16 %v4560, %v4554
        %v5383 = vpack.c.b16 %v4561, %v4555
        %v5384 = vpack.c.b16 %v4562, %v4556
        %v5385 = vpack.c.b16 %v4569, %v4563
        %v5386 = vpack.c.b16 %v4570, %v4564
        %v5387 = vpack.c.b16 %v4571, %v4565
        %v5388 = vpack.c.b16 %v4572, %v4566
        %v5389 = vpack.c.b16 %v4573, %v4567
        %v5390 = vpack.c.b16 %v4574, %v4568
        %v5391 = vpack.c.b16 %v4581, %v4575
        %v5392 = vpack.c.b16 %v4582, %v4576
        %v5393 = vpack.c.b16 %v4583, %v4577
        %v5394 = vpack.c.b16 %v4584, %v4578
        %v5395 = vpack.c.b16 %v4585, %v4579
        %v5396 = vpack.c.b16 %v4586, %v4580
        %v5397 = vpack.c.b16 %v4593, %v4587
        %v5398 = vpack.c.b16 %v4594, %v4588
        %v5399 = vpack.c.b16 %v4595, %v4589
        %v5400 = vpack.c.b16 %v4596, %v4590
        %v5401 = vpack.c.b16 %v4597, %v4591
        %v5402 = vpack.c.b16 %v4598, %v4592
        %v5403 = vpack.c.b16 %v4605, %v4599
        %v5404 = vpack.c.b16 %v4606, %v4600
        %v5405 = vpack.c.b16 %v4607, %v4601
        %v5406 = vpack.c.b16 %v4608, %v4602
        %v5407 = vpack.c.b16 %v4609, %v4603
        %v5408 = vpack.c.b16 %v4610, %v4604
        %v5409 = vpack.c.b16 %v4617, %v4611
        %v5410 = vpack.c.b16 %v4618, %v4612
        %v5411 = vpack.c.b16 %v4619, %v4613
        %v5412 = vpack.c.b16 %v4620, %v4614
        %v5413 = vpack.c.b16 %v4621, %v4615
        %v5414 = vpack.c.b16 %v4622, %v4616
        %v5415 = vpack.c.b16 %v4629, %v4623
        %v5416 = vpack.c.b16 %v4630, %v4624
        %v5417 = vpack.c.b16 %v4631, %v4625
        %v5418 = vpack.c.b16 %v4632, %v4626
        %v5419 = vpack.c.b16 %v4633, %v4627
        %v5420 = vpack.c.b16 %v4634, %v4628
        %v5421 = vpack.c.b16 %v4641, %v4635
        %v5422 = vpack.c.b16 %v4642, %v4636
        %v5423 = vpack.c.b16 %v4643, %v4637
        %v5424 = vpack.c.b16 %v4644, %v4638
        %v5425 = vpack.c.b16 %v4645, %v4639
        %v5426 = vpack.c.b16 %v4646, %v4640
        %v5427 = vpack.c.b16 %v4653, %v4647
        %v5428 = vpack.c.b16 %v4654, %v4648
        %v5429 = vpack.c.b16 %v4655, %v4649
        %v5430 = vpack.c.b16 %v4656, %v4650
        %v5431 = vpack.c.b16 %v4657, %v4651
        %v5432 = vpack.c.b16 %v4658, %v4652
        %v5433 = vpack.c.b16 %v4665, %v4659
        %v5434 = vpack.c.b16 %v4666, %v4660
        %v5435 = vpack.c.b16 %v4667, %v4661
        %v5436 = vpack.c.b16 %v4668, %v4662
        %v5437 = vpack.c.b16 %v4669, %v4663
        %v5438 = vpack.c.b16 %v4670, %v4664
        %v5439 = vpack.c.b16 %v4677, %v4671
        %v5440 = vpack.c.b16 %v4678, %v4672
        %v5441 = vpack.c.b16 %v4679, %v4673
        %v5442 = vpack.c.b16 %v4680, %v4674
        %v5443 = vpack.c.b16 %v4681, %v4675
        %v5444 = vpack.c.b16 %v4682, %v4676
        %v5445 = vpack.c.b16 %v4689, %v4683
        %v5446 = vpack.c.b16 %v4690, %v4684
        %v5447 = vpack.c.b16 %v4691, %v4685
        %v5448 = vpack.c.b16 %v4692, %v4686
        %v5449 = vpack.c.b16 %v4693, %v4687
        %v5450 = vpack.c.b16 %v4694, %v4688
        %v5451 = vpack.c.b16 %v4701, %v4695
        %v5452 = vpack.c.b16 %v4702, %v4696
        %v5453 = vpack.c.b16 %v4703, %v4697
        %v5454 = vpack.c.b16 %v4704, %v4698
        %v5455 = vpack.c.b16 %v4705, %v4699
        %v5456 = vpack.c.b16 %v4706, %v4700
        %v5457 = vpack.c.b16 %v4713, %v4707
        %v5458 = vpack.c.b16 %v4714, %v4708
        %v5459 = vpack.c.b16 %v4715, %v4709
        %v5460 = vpack.c.b16 %v4716, %v4710
        %v5461 = vpack.c.b16 %v4717, %v4711
        %v5462 = vpack.c.b16 %v4718, %v4712
        %v5463 = vpack.c.b16 %v4725, %v4719
        %v5464 = vpack.c.b16 %v4726, %v4720
        %v5465 = vpack.c.b16 %v4727, %v4721
        %v5466 = vpack.c.b16 %v4728, %v4722
        %v5467 = vpack.c.b16 %v4729, %v4723
        %v5468 = vpack.c.b16 %v4730, %v4724
        %v5469 = vpack.c.b16 %v4737, %v4731
        %v5470 = vpack.c.b16 %v4738, %v4732
        %v5471 = vpack.c.b16 %v4739, %v4733
        %v5472 = vpack.c.b16 %v4740, %v4734
        %v5473 = vpack.c.b16 %v4741, %v4735
        %v5474 = vpack.c.b16 %v4742, %v4736
        %v5475 = vpack.c.b16 %v4749, %v4743
        %v5476 = vpack.c.b16 %v4750, %v4744
        %v5477 = vpack.c.b16 %v4751, %v4745
        %v5478 = vpack.c.b16 %v4752, %v4746
        %v5479 = vpack.c.b16 %v4753, %v4747
        %v5480 = vpack.c.b16 %v4754, %v4748
        %v5481 = vpack.c.b16 %v4761, %v4755
        %v5482 = vpack.c.b16 %v4762, %v4756
        %v5483 = vpack.c.b16 %v4763, %v4757
        %v5484 = vpack.c.b16 %v4764, %v4758
        %v5485 = vpack.c.b16 %v4765, %v4759
        %v5486 = vpack.c.b16 %v4766, %v4760
        %v5487 = vpack.c.b16 %v4773, %v4767
        %v5488 = vpack.c.b16 %v4774, %v4768
        %v5489 = vpack.c.b16 %v4775, %v4769
        %v5490 = vpack.c.b16 %v4776, %v4770
        %v5491 = vpack.c.b16 %v4777, %v4771
        %v5492 = vpack.c.b16 %v4778, %v4772
        %v5493 = vpack.c.b16 %v4785, %v4779
        %v5494 = vpack.c.b16 %v4786, %v4780
        %v5495 = vpack.c.b16 %v4787, %v4781
        %v5496 = vpack.c.b16 %v4788, %v4782
        %v5497 = vpack.c.b16 %v4789, %v4783
        %v5498 = vpack.c.b16 %v4790, %v4784
        %v5499 = vpack.c.b16 %v4797, %v4791
        %v5500 = vpack.c.b16 %v4798, %v4792
        %v5501 = vpack.c.b16 %v4799, %v4793
        %v5502 = vpack.c.b16 %v4800, %v4794
        %v5503 = vpack.c.b16 %v4801, %v4795
        %v5504 = vpack.c.b16 %v4802, %v4796
        %v5505 = vpack.c.b16 %v4809, %v4803
        %v5506 = vpack.c.b16 %v4810, %v4804
        %v5507 = vpack.c.b16 %v4811, %v4805
        %v5508 = vpack.c.b16 %v4812, %v4806
        %v5509 = vpack.c.b16 %v4813, %v4807
        %v5510 = vpack.c.b16 %v4814, %v4808
        %v5511 = vpack.c.b16 %v4821, %v4815
        %v5512 = vpack.c.b16 %v4822, %v4816
        %v5513 = vpack.c.b16 %v4823, %v4817
        %v5514 = vpack.c.b16 %v4824, %v4818
        %v5515 = vpack.c.b16 %v4825, %v4819
        %v5516 = vpack.c.b16 %v4826, %v4820
        %v5517 = vpack.c.b16 %v4833, %v4827
        %v5518 = vpack.c.b16 %v4834, %v4828
        %v5519 = vpack.c.b16 %v4835, %v4829
        %v5520 = vpack.c.b16 %v4836, %v4830
        %v5521 = vpack.c.b16 %v4837, %v4831
        %v5522 = vpack.c.b16 %v4838, %v4832
        %v5523 = vpack.c.b16 %v4845, %v4839
        %v5524 = vpack.c.b16 %v4846, %v4840
        %v5525 = vpack.c.b16 %v4847, %v4841
        %v5526 = vpack.c.b16 %v4848, %v4842
        %v5527 = vpack.c.b16 %v4849, %v4843
        %v5528 = vpack.c.b16 %v4850, %v4844
        %v5529 = vpack.c.b16 %v4857, %v4851
        %v5530 = vpack.c.b16 %v4858, %v4852
        %v5531 = vpack.c.b16 %v4859, %v4853
        %v5532 = vpack.c.b16 %v4860, %v4854
        %v5533 = vpack.c.b16 %v4861, %v4855
        %v5534 = vpack.c.b16 %v4862, %v4856
        %v5535 = vpack.c.b16 %v4869, %v4863
        %v5536 = vpack.c.b16 %v4870, %v4864
        %v5537 = vpack.c.b16 %v4871, %v4865
        %v5538 = vpack.c.b16 %v4872, %v4866
        %v5539 = vpack.c.b16 %v4873, %v4867
        %v5540 = vpack.c.b16 %v4874, %v4868
        %v5541 = vpack.c.b16 %v4881, %v4875
        %v5542 = vpack.c.b16 %v4882, %v4876
        %v5543 = vpack.c.b16 %v4883, %v4877
        %v5544 = vpack.c.b16 %v4884, %v4878
        %v5545 = vpack.c.b16 %v4885, %v4879
        %v5546 = vpack.c.b16 %v4886, %v4880
        %v5547 = vpack.c.b16 %v4893, %v4887
        %v5548 = vpack.c.b16 %v4894, %v4888
        %v5549 = vpack.c.b16 %v4895, %v4889
        %v5550 = vpack.c.b16 %v4896, %v4890
        %v5551 = vpack.c.b16 %v4897, %v4891
        %v5552 = vpack.c.b16 %v4898, %v4892
        %v5553 = vpack.c.b16 %v4905, %v4899
        %v5554 = vpack.c.b16 %v4906, %v4900
        %v5555 = vpack.c.b16 %v4907, %v4901
        %v5556 = vpack.c.b16 %v4908, %v4902
        %v5557 = vpack.c.b16 %v4909, %v4903
        %v5558 = vpack.c.b16 %v4910, %v4904
        %v5559 = vpack.c.b16 %v4917, %v4911
        %v5560 = vpack.c.b16 %v4918, %v4912
        %v5561 = vpack.c.b16 %v4919, %v4913
        %v5562 = vpack.c.b16 %v4920, %v4914
        %v5563 = vpack.c.b16 %v4921, %v4915
        %v5564 = vpack.c.b16 %v4922, %v4916
        %v5565 = vpack.c.b16 %v4929, %v4923
        %v5566 = vpack.c.b16 %v4930, %v4924
        %v5567 = vpack.c.b16 %v4931, %v4925
        %v5568 = vpack.c.b16 %v4932, %v4926
        %v5569 = vpack.c.b16 %v4933, %v4927
        %v5570 = vpack.c.b16 %v4934, %v4928
        %v5571 = vpack.c.b16 %v4941, %v4935
        %v5572 = vpack.c.b16 %v4942, %v4936
        %v5573 = vpack.c.b16 %v4943, %v4937
        %v5574 = vpack.c.b16 %v4944, %v4938
        %v5575 = vpack.c.b16 %v4945, %v4939
        %v5576 = vpack.c.b16 %v4946, %v4940
        %v5577 = vpack.c.b16 %v4953, %v4947
        %v5578 = vpack.c.b16 %v4954, %v4948
        %v5579 = vpack.c.b16 %v4955, %v4949
        %v5580 = vpack.c.b16 %v4956, %v4950
        %v5581 = vpack.c.b16 %v4957, %v4951
        %v5582 = vpack.c.b16 %v4958, %v4952
        %v5583 = vpack.c.b16 %v4965, %v4959
        %v5584 = vpack.c.b16 %v4966, %v4960
        %v5585 = vpack.c.b16 %v4967, %v4961
        %v5586 = vpack.c.b16 %v4968, %v4962
        %v5587 = vpack.c.b16 %v4969, %v4963
        %v5588 = vpack.c.b16 %v4970, %v4964
        %v5589 = vpack.c.b16 %v4977, %v4971
        %v5590 = vpack.c.b16 %v4978, %v4972
        %v5591 = vpack.c.b16 %v4979, %v4973
        %v5592 = vpack.c.b16 %v4980, %v4974
        %v5593 = vpack.c.b16 %v4981, %v4975
        %v5594 = vpack.c.b16 %v4982, %v4976
        %v5595 = vpack.c.b16 %v4989, %v4983
        %v5596 = vpack.c.b16 %v4990, %v4984
        %v5597 = vpack.c.b16 %v4991, %v4985
        %v5598 = vpack.c.b16 %v4992, %v4986
        %v5599 = vpack.c.b16 %v4993, %v4987
        %v5600 = vpack.c.b16 %v4994, %v4988
        %v5601 = vpack.c.b16 %v5001, %v4995
        %v5602 = vpack.c.b16 %v5002, %v4996
        %v5603 = vpack.c.b16 %v5003, %v4997
        %v5604 = vpack.c.b16 %v5004, %v4998
        %v5605 = vpack.c.b16 %v5005, %v4999
        %v5606 = vpack.c.b16 %v5006, %v5000
        %v5607 = vpack.c.b16 %v5013, %v5007
        %v5608 = vpack.c.b16 %v5014, %v5008
        %v5609 = vpack.c.b16 %v5015, %v5009
        %v5610 = vpack.c.b16 %v5016, %v5010
        %v5611 = vpack.c.b16 %v5017, %v5011
        %v5612 = vpack.c.b16 %v5018, %v5012
        %v5613 = vpack.c.b16 %v5025, %v5019
        %v5614 = vpack.c.b16 %v5026, %v5020
        %v5615 = vpack.c.b16 %v5027, %v5021
        %v5616 = vpack.c.b16 %v5028, %v5022
        %v5617 = vpack.c.b16 %v5029, %v5023
        %v5618 = vpack.c.b16 %v5030, %v5024
        %v5619 = vpack.c.b16 %v5037, %v5031
        %v5620 = vpack.c.b16 %v5038, %v5032
        %v5621 = vpack.c.b16 %v5039, %v5033
        %v5622 = vpack.c.b16 %v5040, %v5034
        %v5623 = vpack.c.b16 %v5041, %v5035
        %v5624 = vpack.c.b16 %v5042, %v5036
        %v5625 = vpack.c.b16 %v5049, %v5043
        %v5626 = vpack.c.b16 %v5050, %v5044
        %v5627 = vpack.c.b16 %v5051, %v5045
        %v5628 = vpack.c.b16 %v5052, %v5046
        %v5629 = vpack.c.b16 %v5053, %v5047
        %v5630 = vpack.c.b16 %v5054, %v5048
        %v5631 = vpack.c.b16 %v5061, %v5055
        %v5632 = vpack.c.b16 %v5062, %v5056
        %v5633 = vpack.c.b16 %v5063, %v5057
        %v5634 = vpack.c.b16 %v5064, %v5058
        %v5635 = vpack.c.b16 %v5065, %v5059
        %v5636 = vpack.c.b16 %v5066, %v5060
        %v5637 = vpack.c.b16 %v5073, %v5067
        %v5638 = vpack.c.b16 %v5074, %v5068
        %v5639 = vpack.c.b16 %v5075, %v5069
        %v5640 = vpack.c.b16 %v5076, %v5070
        %v5641 = vpack.c.b16 %v5077, %v5071
        %v5642 = vpack.c.b16 %v5078, %v5072
        %v5643 = vpack.c.b16 %v5085, %v5079
        %v5644 = vpack.c.b16 %v5086, %v5080
        %v5645 = vpack.c.b16 %v5087, %v5081
        %v5646 = vpack.c.b16 %v5088, %v5082
        %v5647 = vpack.c.b16 %v5089, %v5083
        %v5648 = vpack.c.b16 %v5090, %v5084
        %v5649 = vpack.c.b16 %v5097, %v5091
        %v5650 = vpack.c.b16 %v5098, %v5092
        %v5651 = vpack.c.b16 %v5099, %v5093
        %v5652 = vpack.c.b16 %v5100, %v5094
        %v5653 = vpack.c.b16 %v5101, %v5095
        %v5654 = vpack.c.b16 %v5102, %v5096
        %v5655 = vpack.c.b16 %v5109, %v5103
        %v5656 = vpack.c.b16 %v5110, %v5104
        %v5657 = vpack.c.b16 %v5111, %v5105
        %v5658 = vpack.c.b16 %v5112, %v5106
        %v5659 = vpack.c.b16 %v5113, %v5107
        %v5660 = vpack.c.b16 %v5114, %v5108
        %v5661 = vpack.c.b16 %v5121, %v5115
        %v5662 = vpack.c.b16 %v5122, %v5116
        %v5663 = vpack.c.b16 %v5123, %v5117
        %v5664 = vpack.c.b16 %v5124, %v5118
        %v5665 = vpack.c.b16 %v5125, %v5119
        %v5666 = vpack.c.b16 %v5126, %v5120
        %v5667 = vpack.c.b16 %v5133, %v5127
        %v5668 = vpack.c.b16 %v5134, %v5128
        %v5669 = vpack.c.b16 %v5135, %v5129
        %v5670 = vpack.c.b16 %v5136, %v5130
        %v5671 = vpack.c.b16 %v5137, %v5131
        %v5672 = vpack.c.b16 %v5138, %v5132
        %v5673 = vpack.c.b16 %v5145, %v5139
        %v5674 = vpack.c.b16 %v5146, %v5140
        %v5675 = vpack.c.b16 %v5147, %v5141
        %v5676 = vpack.c.b16 %v5148, %v5142
        %v5677 = vpack.c.b16 %v5149, %v5143
        %v5678 = vpack.c.b16 %v5150, %v5144
        %v5679 = vpack.c.b16 %v5157, %v5151
        %v5680 = vpack.c.b16 %v5158, %v5152
        %v5681 = vpack.c.b16 %v5159, %v5153
        %v5682 = vpack.c.b16 %v5160, %v5154
        %v5683 = vpack.c.b16 %v5161, %v5155
        %v5684 = vpack.c.b16 %v5162, %v5156
        %v5685 = vpack.c.b16 %v5169, %v5163
        %v5686 = vpack.c.b16 %v5170, %v5164
        %v5687 = vpack.c.b16 %v5171, %v5165
        %v5688 = vpack.c.b16 %v5172, %v5166
        %v5689 = vpack.c.b16 %v5173, %v5167
        %v5690 = vpack.c.b16 %v5174, %v5168
        %v5691 = vpack.c.b16 %v5181, %v5175
        %v5692 = vpack.c.b16 %v5182, %v5176
        %v5693 = vpack.c.b16 %v5183, %v5177
        %v5694 = vpack.c.b16 %v5184, %v5178
        %v5695 = vpack.c.b16 %v5185, %v5179
        %v5696 = vpack.c.b16 %v5186, %v5180
        %v5697 = vpack.c.b16 %v5193, %v5187
        %v5698 = vpack.c.b16 %v5194, %v5188
        %v5699 = vpack.c.b16 %v5195, %v5189
        %v5700 = vpack.c.b16 %v5196, %v5190
        %v5701 = vpack.c.b16 %v5197, %v5191
        %v5702 = vpack.c.b16 %v5198, %v5192
        %v5703 = vpack.c.b16 %v5205, %v5199
        %v5704 = vpack.c.b16 %v5206, %v5200
        %v5705 = vpack.c.b16 %v5207, %v5201
        %v5706 = vpack.c.b16 %v5208, %v5202
        %v5707 = vpack.c.b16 %v5209, %v5203
        %v5708 = vpack.c.b16 %v5210, %v5204
        %v5709 = vpack.c.b16 %v5217, %v5211
        %v5710 = vpack.c.b16 %v5218, %v5212
        %v5711 = vpack.c.b16 %v5219, %v5213
        %v5712 = vpack.c.b16 %v5220, %v5214
        %v5713 = vpack.c.b16 %v5221, %v5215
        %v5714 = vpack.c.b16 %v5222, %v5216
        %v5715 = vpack.c.b16 %v5229, %v5223
        %v5716 = vpack.c.b16 %v5230, %v5224
        %v5717 = vpack.c.b16 %v5231, %v5225
        %v5718 = vpack.c.b16 %v5232, %v5226
        %v5719 = vpack.c.b16 %v5233, %v5227
        %v5720 = vpack.c.b16 %v5234, %v5228
        %v5721 = vpack.c.b16 %v5241, %v5235
        %v5722 = vpack.c.b16 %v5242, %v5236
        %v5723 = vpack.c.b16 %v5243, %v5237
        %v5724 = vpack.c.b16 %v5244, %v5238
        %v5725 = vpack.c.b16 %v5245, %v5239
        %v5726 = vpack.c.b16 %v5246, %v5240
        %v5727 = vpack.c.b16 %v5253, %v5247
        %v5728 = vpack.c.b16 %v5254, %v5248
        %v5729 = vpack.c.b16 %v5255, %v5249
        %v5730 = vpack.c.b16 %v5256, %v5250
        %v5731 = vpack.c.b16 %v5257, %v5251
        %v5732 = vpack.c.b16 %v5258, %v5252
        %v5733 = vpack.c.b16 %v5265, %v5259
        %v5734 = vpack.c.b16 %v5266, %v5260
        %v5735 = vpack.c.b16 %v5267, %v5261
        %v5736 = vpack.c.b16 %v5268, %v5262
        %v5737 = vpack.c.b16 %v5269, %v5263
        %v5738 = vpack.c.b16 %v5270, %v5264
        %v5739 = vpack.c.b16 %v5277, %v5271
        %v5740 = vpack.c.b16 %v5278, %v5272
        %v5741 = vpack.c.b16 %v5279, %v5273
        %v5742 = vpack.c.b16 %v5280, %v5274
        %v5743 = vpack.c.b16 %v5281, %v5275
        %v5744 = vpack.c.b16 %v5282, %v5276
        %v5745 = vpack.c.b16 %v5289, %v5283
        %v5746 = vpack.c.b16 %v5290, %v5284
        %v5747 = vpack.c.b16 %v5291, %v5285
        %v5748 = vpack.c.b16 %v5292, %v5286
        %v5749 = vpack.c.b16 %v5293, %v5287
        %v5750 = vpack.c.b16 %v5294, %v5288
        %v5751 = vpack.c.b16 %v5301, %v5295
        %v5752 = vpack.c.b16 %v5302, %v5296
        %v5753 = vpack.c.b16 %v5303, %v5297
        %v5754 = vpack.c.b16 %v5304, %v5298
        %v5755 = vpack.c.b16 %v5305, %v5299
        %v5756 = vpack.c.b16 %v5306, %v5300
        %v5757 = vpack.c.b16 %v5313, %v5307
        %v5758 = vpack.c.b16 %v5314, %v5308
        %v5759 = vpack.c.b16 %v5315, %v5309
        %v5760 = vpack.c.b16 %v5316, %v5310
        %v5761 = vpack.c.b16 %v5317, %v5311
        %v5762 = vpack.c.b16 %v5318, %v5312
        %v5763 = vpack.c.b16 %v5325, %v5319
        %v5764 = vpack.c.b16 %v5326, %v5320
        %v5765 = vpack.c.b16 %v5327, %v5321
        %v5766 = vpack.c.b16 %v5328, %v5322
        %v5767 = vpack.c.b16 %v5329, %v5323
        %v5768 = vpack.c.b16 %v5330, %v5324
        %v5769 = vpack.c.b16 %v5337, %v5331
        %v5770 = vpack.c.b16 %v5338, %v5332
        %v5771 = vpack.c.b16 %v5339, %v5333
        %v5772 = vpack.c.b16 %v5340, %v5334
        %v5773 = vpack.c.b16 %v5341, %v5335
        %v5774 = vpack.c.b16 %v5342, %v5336
        %6207 = vmatprep.subr.bf16.mxu0 %v5386
        %6208 = vmatpush1.bf16.msra.mxu0 %v5385
        %6209 = vmatprep.subr.bf16.mxu0 %v5380
        %6210 = vmatpush1.bf16.msra.mxu0 %v5379
        %6211 = vmatprep.subr.bf16.mxu0 %v5374
        %6212 = vmatpush1.bf16.msra.mxu0 %v5373
        %6213 = vmatprep.subr.bf16.mxu0 %v5368
        %6214 = vmatpush1.bf16.msra.mxu0 %v5367
        %6215 = vmatprep.subr.bf16.mxu0 %v5362
        %6216 = vmatpush1.bf16.msra.mxu0 %v5361
        %6217 = vmatprep.subr.bf16.mxu0 %v5356
        %6218 = vmatpush1.bf16.msra.mxu0 %v5355
        %6219 = vmatprep.subr.bf16.mxu0 %v5350
        %6220 = vmatpush1.bf16.msra.mxu0 %v5349
        %6221 = vmatprep.subr.bf16.mxu0 %v5344
        %6222 = vmatpush1.bf16.msra.mxu0 %v5343
        %6223 = vmatprep.subr.bf16.mxu0 %v5434
        %6224 = vmatpush2.bf16.msra.mxu0 %v5433
        %6225 = vmatprep.subr.bf16.mxu0 %v5428
        %6226 = vmatpush2.bf16.msra.mxu0 %v5427
        %6227 = vmatprep.subr.bf16.mxu0 %v5422
        %6228 = vmatpush2.bf16.msra.mxu0 %v5421
        %6229 = vmatprep.subr.bf16.mxu0 %v5416
        %6230 = vmatpush2.bf16.msra.mxu0 %v5415
        %6231 = vmatprep.subr.bf16.mxu0 %v5410
        %6232 = vmatpush2.bf16.msra.mxu0 %v5409
        %6233 = vmatprep.subr.bf16.mxu0 %v5404
        %6234 = vmatpush2.bf16.msra.mxu0 %v5403
        %6235 = vmatprep.subr.bf16.mxu0 %v5398
        %6236 = vmatpush2.bf16.msra.mxu0 %v5397
        %6237 = vmatprep.subr.bf16.mxu0 %v5392
        %6238 = vmatpush2.bf16.msra.mxu0 %v5391
        %6239 = vmatprep.mubr.bf16.mxu0 %v3607
        %6240 = vmatmul.mubr.bf16.gmra.mxu0 %v3606
        %v6241 = vpop.f32.mrf.mxu0
        %v6242 = vadd.f32 0.0, %v6241
        %v6243 = vpop.f32.mrf.mxu0
        %v6244 = vadd.f32 0.0, %v6243
        %v6245 = vpop.f32.mrf.mxu0
        %v6246 = vpop.f32.mrf.mxu0
        %6247 = vdwg.mxu0
        %6248 = vmatprep.subr.bf16.mxu0 %v5482
        %6249 = vmatpush1.bf16.msra.mxu0 %v5481
        %6250 = vmatprep.subr.bf16.mxu0 %v5476
        %6251 = vmatpush1.bf16.msra.mxu0 %v5475
        %6252 = vmatprep.subr.bf16.mxu0 %v5470
        %6253 = vmatpush1.bf16.msra.mxu0 %v5469
        %6254 = vmatprep.subr.bf16.mxu0 %v5464
        %6255 = vmatpush1.bf16.msra.mxu0 %v5463
        %6256 = vmatprep.subr.bf16.mxu0 %v5458
        %6257 = vmatpush1.bf16.msra.mxu0 %v5457
        %6258 = vmatprep.subr.bf16.mxu0 %v5452
        %6259 = vmatpush1.bf16.msra.mxu0 %v5451
        %6260 = vmatprep.subr.bf16.mxu0 %v5446
        %6261 = vmatpush1.bf16.msra.mxu0 %v5445
        %6262 = vmatprep.subr.bf16.mxu0 %v5440
        %6263 = vmatpush1.bf16.msra.mxu0 %v5439
        %6264 = vmatprep.subr.bf16.mxu0 %v5530
        %6265 = vmatpush2.bf16.msra.mxu0 %v5529
        %6266 = vmatprep.subr.bf16.mxu0 %v5524
        %6267 = vmatpush2.bf16.msra.mxu0 %v5523
        %6268 = vmatprep.subr.bf16.mxu0 %v5518
        %6269 = vmatpush2.bf16.msra.mxu0 %v5517
        %6270 = vmatprep.subr.bf16.mxu0 %v5512
        %6271 = vmatpush2.bf16.msra.mxu0 %v5511
        %6272 = vmatprep.subr.bf16.mxu0 %v5506
        %6273 = vmatpush2.bf16.msra.mxu0 %v5505
        %6274 = vmatprep.subr.bf16.mxu0 %v5500
        %6275 = vmatpush2.bf16.msra.mxu0 %v5499
        %6276 = vmatprep.subr.bf16.mxu0 %v5494
        %6277 = vmatpush2.bf16.msra.mxu0 %v5493
        %6278 = vmatprep.subr.bf16.mxu0 %v5488
        %6279 = vmatpush2.bf16.msra.mxu0 %v5487
        %6280 = vmatprep.mubr.bf16.mxu0 %v3609
        %6281 = vmatmul.mubr.bf16.gmra.mxu0 %v3608
        %v6282 = vpop.f32.mrf.mxu0
        %v6283 = vadd.f32 %v6242, %v6282
        %v6284 = vpop.f32.mrf.mxu0
        %v6285 = vadd.f32 %v6244, %v6284
        %v6286 = vpop.f32.mrf.mxu0
        %v6287 = vpop.f32.mrf.mxu0
        %6288 = vdwg.mxu0
        %6289 = vmatprep.subr.bf16.mxu0 %v5578
        %6290 = vmatpush1.bf16.msra.mxu0 %v5577
        %6291 = vmatprep.subr.bf16.mxu0 %v5572
        %6292 = vmatpush1.bf16.msra.mxu0 %v5571
        %6293 = vmatprep.subr.bf16.mxu0 %v5566
        %6294 = vmatpush1.bf16.msra.mxu0 %v5565
        %6295 = vmatprep.subr.bf16.mxu0 %v5560
        %6296 = vmatpush1.bf16.msra.mxu0 %v5559
        %6297 = vmatprep.subr.bf16.mxu0 %v5554
        %6298 = vmatpush1.bf16.msra.mxu0 %v5553
        %6299 = vmatprep.subr.bf16.mxu0 %v5548
        %6300 = vmatpush1.bf16.msra.mxu0 %v5547
        %6301 = vmatprep.subr.bf16.mxu0 %v5542
        %6302 = vmatpush1.bf16.msra.mxu0 %v5541
        %6303 = vmatprep.subr.bf16.mxu0 %v5536
        %6304 = vmatpush1.bf16.msra.mxu0 %v5535
        %6305 = vmatprep.subr.bf16.mxu0 %v5626
        %6306 = vmatpush2.bf16.msra.mxu0 %v5625
        %6307 = vmatprep.subr.bf16.mxu0 %v5620
        %6308 = vmatpush2.bf16.msra.mxu0 %v5619
        %6309 = vmatprep.subr.bf16.mxu0 %v5614
        %6310 = vmatpush2.bf16.msra.mxu0 %v5613
        %6311 = vmatprep.subr.bf16.mxu0 %v5608
        %6312 = vmatpush2.bf16.msra.mxu0 %v5607
        %6313 = vmatprep.subr.bf16.mxu0 %v5602
        %6314 = vmatpush2.bf16.msra.mxu0 %v5601
        %6315 = vmatprep.subr.bf16.mxu0 %v5596
        %6316 = vmatpush2.bf16.msra.mxu0 %v5595
        %6317 = vmatprep.subr.bf16.mxu0 %v5590
        %6318 = vmatpush2.bf16.msra.mxu0 %v5589
        %6319 = vmatprep.subr.bf16.mxu0 %v5584
        %6320 = vmatpush2.bf16.msra.mxu0 %v5583
        %6321 = vmatprep.mubr.bf16.mxu0 %v3611
        %6322 = vmatmul.mubr.bf16.gmra.mxu0 %v3610
        %v6323 = vpop.f32.mrf.mxu0
        %v6324 = vadd.f32 %v6283, %v6323
        %v6325 = vpop.f32.mrf.mxu0
        %v6326 = vadd.f32 %v6285, %v6325
        %v6327 = vpop.f32.mrf.mxu0
        %v6328 = vpop.f32.mrf.mxu0
        %6329 = vdwg.mxu0
        %6330 = vmatprep.subr.bf16.mxu0 %v5674
        %6331 = vmatpush1.bf16.msra.mxu0 %v5673
        %6332 = vmatprep.subr.bf16.mxu0 %v5668
        %6333 = vmatpush1.bf16.msra.mxu0 %v5667
        %6334 = vmatprep.subr.bf16.mxu0 %v5662
        %6335 = vmatpush1.bf16.msra.mxu0 %v5661
        %6336 = vmatprep.subr.bf16.mxu0 %v5656
        %6337 = vmatpush1.bf16.msra.mxu0 %v5655
        %6338 = vmatprep.subr.bf16.mxu0 %v5650
        %6339 = vmatpush1.bf16.msra.mxu0 %v5649
        %6340 = vmatprep.subr.bf16.mxu0 %v5644
        %6341 = vmatpush1.bf16.msra.mxu0 %v5643
        %6342 = vmatprep.subr.bf16.mxu0 %v5638
        %6343 = vmatpush1.bf16.msra.mxu0 %v5637
        %6344 = vmatprep.subr.bf16.mxu0 %v5632
        %6345 = vmatpush1.bf16.msra.mxu0 %v5631
        %6346 = vmatprep.subr.bf16.mxu0 %v5722
        %6347 = vmatpush2.bf16.msra.mxu0 %v5721
        %6348 = vmatprep.subr.bf16.mxu0 %v5716
        %6349 = vmatpush2.bf16.msra.mxu0 %v5715
        %6350 = vmatprep.subr.bf16.mxu0 %v5710
        %6351 = vmatpush2.bf16.msra.mxu0 %v5709
        %6352 = vmatprep.subr.bf16.mxu0 %v5704
        %6353 = vmatpush2.bf16.msra.mxu0 %v5703
        %6354 = vmatprep.subr.bf16.mxu0 %v5698
        %6355 = vmatpush2.bf16.msra.mxu0 %v5697
        %6356 = vmatprep.subr.bf16.mxu0 %v5692
        %6357 = vmatpush2.bf16.msra.mxu0 %v5691
        %6358 = vmatprep.subr.bf16.mxu0 %v5686
        %6359 = vmatpush2.bf16.msra.mxu0 %v5685
        %6360 = vmatprep.subr.bf16.mxu0 %v5680
        %6361 = vmatpush2.bf16.msra.mxu0 %v5679
        %6362 = vmatprep.mubr.bf16.mxu0 %v3613
        %6363 = vmatmul.mubr.bf16.gmra.mxu0 %v3612
        %v6364 = vpop.f32.mrf.mxu0
        %v6365 = vadd.f32 %v6324, %v6364
        %v6366 = vpop.f32.mrf.mxu0
        %v6367 = vadd.f32 %v6326, %v6366
        %v6368 = vpop.f32.mrf.mxu0
        %v6369 = vpop.f32.mrf.mxu0
        %6370 = vdwg.mxu0
        %6371 = vmatprep.subr.bf16.mxu0 %v5770
        %6372 = vmatpush1.bf16.msra.mxu0 %v5769
        %6373 = vmatprep.subr.bf16.mxu0 %v5764
        %6374 = vmatpush1.bf16.msra.mxu0 %v5763
        %6375 = vmatprep.subr.bf16.mxu0 %v5758
        %6376 = vmatpush1.bf16.msra.mxu0 %v5757
        %6377 = vmatprep.subr.bf16.mxu0 %v5752
        %6378 = vmatpush1.bf16.msra.mxu0 %v5751
        %6379 = vmatprep.subr.bf16.mxu0 %v5746
        %6380 = vmatpush1.bf16.msra.mxu0 %v5745
        %6381 = vmatprep.subr.bf16.mxu0 %v5740
        %6382 = vmatpush1.bf16.msra.mxu0 %v5739
        %6383 = vmatprep.subr.bf16.mxu0 %v5734
        %6384 = vmatpush1.bf16.msra.mxu0 %v5733
        %6385 = vmatprep.subr.bf16.mxu0 %v5728
        %6386 = vmatpush1.bf16.msra.mxu0 %v5727
        %6387 = vmatprep.subr.bf16.mxu0 0
        %6388 = vmatpush2.bf16.msra.mxu0 0
        %6389 = vmatprep.subr.bf16.mxu0 0
        %6390 = vmatpush2.bf16.msra.mxu0 0
        %6391 = vmatprep.subr.bf16.mxu0 0
        %6392 = vmatpush2.bf16.msra.mxu0 0
        %6393 = vmatprep.subr.bf16.mxu0 0
        %6394 = vmatpush2.bf16.msra.mxu0 0
        %6395 = vmatprep.subr.bf16.mxu0 0
        %6396 = vmatpush2.bf16.msra.mxu0 0
        %6397 = vmatprep.subr.bf16.mxu0 0
        %6398 = vmatpush2.bf16.msra.mxu0 0
        %6399 = vmatprep.subr.bf16.mxu0 0
        %6400 = vmatpush2.bf16.msra.mxu0 0
        %6401 = vmatprep.subr.bf16.mxu0 0
        %6402 = vmatpush2.bf16.msra.mxu0 0
        %6403 = vmatprep.mubr.bf16.mxu0 0
        %6404 = vmatmul.mubr.bf16.gmra.mxu0 %v3614
        %v6405 = vpop.f32.mrf.mxu0
        %v6406 = vadd.f32 %v6365, %v6405
        %v6407 = vpop.f32.mrf.mxu0
        %v6408 = vadd.f32 %v6367, %v6407
        %v6409 = vpop.f32.mrf.mxu0
        %v6410 = vpop.f32.mrf.mxu0
        %6411 = vdwg.mxu0
        %6412 = vmatprep.subr.bf16.mxu0 %v5388
        %6413 = vmatpush1.bf16.msra.mxu0 %v5387
        %6414 = vmatprep.subr.bf16.mxu0 %v5382
        %6415 = vmatpush1.bf16.msra.mxu0 %v5381
        %6416 = vmatprep.subr.bf16.mxu0 %v5376
        %6417 = vmatpush1.bf16.msra.mxu0 %v5375
        %6418 = vmatprep.subr.bf16.mxu0 %v5370
        %6419 = vmatpush1.bf16.msra.mxu0 %v5369
        %6420 = vmatprep.subr.bf16.mxu0 %v5364
        %6421 = vmatpush1.bf16.msra.mxu0 %v5363
        %6422 = vmatprep.subr.bf16.mxu0 %v5358
        %6423 = vmatpush1.bf16.msra.mxu0 %v5357
        %6424 = vmatprep.subr.bf16.mxu0 %v5352
        %6425 = vmatpush1.bf16.msra.mxu0 %v5351
        %6426 = vmatprep.subr.bf16.mxu0 %v5346
        %6427 = vmatpush1.bf16.msra.mxu0 %v5345
        %6428 = vmatprep.subr.bf16.mxu0 %v5436
        %6429 = vmatpush2.bf16.msra.mxu0 %v5435
        %6430 = vmatprep.subr.bf16.mxu0 %v5430
        %6431 = vmatpush2.bf16.msra.mxu0 %v5429
        %6432 = vmatprep.subr.bf16.mxu0 %v5424
        %6433 = vmatpush2.bf16.msra.mxu0 %v5423
        %6434 = vmatprep.subr.bf16.mxu0 %v5418
        %6435 = vmatpush2.bf16.msra.mxu0 %v5417
        %6436 = vmatprep.subr.bf16.mxu0 %v5412
        %6437 = vmatpush2.bf16.msra.mxu0 %v5411
        %6438 = vmatprep.subr.bf16.mxu0 %v5406
        %6439 = vmatpush2.bf16.msra.mxu0 %v5405
        %6440 = vmatprep.subr.bf16.mxu0 %v5400
        %6441 = vmatpush2.bf16.msra.mxu0 %v5399
        %6442 = vmatprep.subr.bf16.mxu0 %v5394
        %6443 = vmatpush2.bf16.msra.mxu0 %v5393
        %6444 = vmatprep.mubr.bf16.mxu0 %v3607
        %6445 = vmatmul.mubr.bf16.gmra.mxu0 %v3606
        %v6446 = vpop.f32.mrf.mxu0
        %v6447 = vadd.f32 0.0, %v6446
        %v6448 = vpop.f32.mrf.mxu0
        %v6449 = vadd.f32 0.0, %v6448
        %v6450 = vpop.f32.mrf.mxu0
        %v6451 = vpop.f32.mrf.mxu0
        %6452 = vdwg.mxu0
        %6453 = vmatprep.subr.bf16.mxu0 %v5484
        %6454 = vmatpush1.bf16.msra.mxu0 %v5483
        %6455 = vmatprep.subr.bf16.mxu0 %v5478
        %6456 = vmatpush1.bf16.msra.mxu0 %v5477
        %6457 = vmatprep.subr.bf16.mxu0 %v5472
        %6458 = vmatpush1.bf16.msra.mxu0 %v5471
        %6459 = vmatprep.subr.bf16.mxu0 %v5466
        %6460 = vmatpush1.bf16.msra.mxu0 %v5465
        %6461 = vmatprep.subr.bf16.mxu0 %v5460
        %6462 = vmatpush1.bf16.msra.mxu0 %v5459
        %6463 = vmatprep.subr.bf16.mxu0 %v5454
        %6464 = vmatpush1.bf16.msra.mxu0 %v5453
        %6465 = vmatprep.subr.bf16.mxu0 %v5448
        %6466 = vmatpush1.bf16.msra.mxu0 %v5447
        %6467 = vmatprep.subr.bf16.mxu0 %v5442
        %6468 = vmatpush1.bf16.msra.mxu0 %v5441
        %6469 = vmatprep.subr.bf16.mxu0 %v5532
        %6470 = vmatpush2.bf16.msra.mxu0 %v5531
        %6471 = vmatprep.subr.bf16.mxu0 %v5526
        %6472 = vmatpush2.bf16.msra.mxu0 %v5525
        %6473 = vmatprep.subr.bf16.mxu0 %v5520
        %6474 = vmatpush2.bf16.msra.mxu0 %v5519
        %6475 = vmatprep.subr.bf16.mxu0 %v5514
        %6476 = vmatpush2.bf16.msra.mxu0 %v5513
        %6477 = vmatprep.subr.bf16.mxu0 %v5508
        %6478 = vmatpush2.bf16.msra.mxu0 %v5507
        %6479 = vmatprep.subr.bf16.mxu0 %v5502
        %6480 = vmatpush2.bf16.msra.mxu0 %v5501
        %6481 = vmatprep.subr.bf16.mxu0 %v5496
        %6482 = vmatpush2.bf16.msra.mxu0 %v5495
        %6483 = vmatprep.subr.bf16.mxu0 %v5490
        %6484 = vmatpush2.bf16.msra.mxu0 %v5489
        %6485 = vmatprep.mubr.bf16.mxu0 %v3609
        %6486 = vmatmul.mubr.bf16.gmra.mxu0 %v3608
        %v6487 = vpop.f32.mrf.mxu0
        %v6488 = vadd.f32 %v6447, %v6487
        %v6489 = vpop.f32.mrf.mxu0
        %v6490 = vadd.f32 %v6449, %v6489
        %v6491 = vpop.f32.mrf.mxu0
        %v6492 = vpop.f32.mrf.mxu0
        %6493 = vdwg.mxu0
        %6494 = vmatprep.subr.bf16.mxu0 %v5580
        %6495 = vmatpush1.bf16.msra.mxu0 %v5579
        %6496 = vmatprep.subr.bf16.mxu0 %v5574
        %6497 = vmatpush1.bf16.msra.mxu0 %v5573
        %6498 = vmatprep.subr.bf16.mxu0 %v5568
        %6499 = vmatpush1.bf16.msra.mxu0 %v5567
        %6500 = vmatprep.subr.bf16.mxu0 %v5562
        %6501 = vmatpush1.bf16.msra.mxu0 %v5561
        %6502 = vmatprep.subr.bf16.mxu0 %v5556
        %6503 = vmatpush1.bf16.msra.mxu0 %v5555
        %6504 = vmatprep.subr.bf16.mxu0 %v5550
        %6505 = vmatpush1.bf16.msra.mxu0 %v5549
        %6506 = vmatprep.subr.bf16.mxu0 %v5544
        %6507 = vmatpush1.bf16.msra.mxu0 %v5543
        %6508 = vmatprep.subr.bf16.mxu0 %v5538
        %6509 = vmatpush1.bf16.msra.mxu0 %v5537
        %6510 = vmatprep.subr.bf16.mxu0 %v5628
        %6511 = vmatpush2.bf16.msra.mxu0 %v5627
        %6512 = vmatprep.subr.bf16.mxu0 %v5622
        %6513 = vmatpush2.bf16.msra.mxu0 %v5621
        %6514 = vmatprep.subr.bf16.mxu0 %v5616
        %6515 = vmatpush2.bf16.msra.mxu0 %v5615
        %6516 = vmatprep.subr.bf16.mxu0 %v5610
        %6517 = vmatpush2.bf16.msra.mxu0 %v5609
        %6518 = vmatprep.subr.bf16.mxu0 %v5604
        %6519 = vmatpush2.bf16.msra.mxu0 %v5603
        %6520 = vmatprep.subr.bf16.mxu0 %v5598
        %6521 = vmatpush2.bf16.msra.mxu0 %v5597
        %6522 = vmatprep.subr.bf16.mxu0 %v5592
        %6523 = vmatpush2.bf16.msra.mxu0 %v5591
        %6524 = vmatprep.subr.bf16.mxu0 %v5586
        %6525 = vmatpush2.bf16.msra.mxu0 %v5585
        %6526 = vmatprep.mubr.bf16.mxu0 %v3611
        %6527 = vmatmul.mubr.bf16.gmra.mxu0 %v3610
        %v6528 = vpop.f32.mrf.mxu0
        %v6529 = vadd.f32 %v6488, %v6528
        %v6530 = vpop.f32.mrf.mxu0
        %v6531 = vadd.f32 %v6490, %v6530
        %v6532 = vpop.f32.mrf.mxu0
        %v6533 = vpop.f32.mrf.mxu0
        %6534 = vdwg.mxu0
        %6535 = vmatprep.subr.bf16.mxu0 %v5676
        %6536 = vmatpush1.bf16.msra.mxu0 %v5675
        %6537 = vmatprep.subr.bf16.mxu0 %v5670
        %6538 = vmatpush1.bf16.msra.mxu0 %v5669
        %6539 = vmatprep.subr.bf16.mxu0 %v5664
        %6540 = vmatpush1.bf16.msra.mxu0 %v5663
        %6541 = vmatprep.subr.bf16.mxu0 %v5658
        %6542 = vmatpush1.bf16.msra.mxu0 %v5657
        %6543 = vmatprep.subr.bf16.mxu0 %v5652
        %6544 = vmatpush1.bf16.msra.mxu0 %v5651
        %6545 = vmatprep.subr.bf16.mxu0 %v5646
        %6546 = vmatpush1.bf16.msra.mxu0 %v5645
        %6547 = vmatprep.subr.bf16.mxu0 %v5640
        %6548 = vmatpush1.bf16.msra.mxu0 %v5639
        %6549 = vmatprep.subr.bf16.mxu0 %v5634
        %6550 = vmatpush1.bf16.msra.mxu0 %v5633
        %6551 = vmatprep.subr.bf16.mxu0 %v5724
        %6552 = vmatpush2.bf16.msra.mxu0 %v5723
        %6553 = vmatprep.subr.bf16.mxu0 %v5718
        %6554 = vmatpush2.bf16.msra.mxu0 %v5717
        %6555 = vmatprep.subr.bf16.mxu0 %v5712
        %6556 = vmatpush2.bf16.msra.mxu0 %v5711
        %6557 = vmatprep.subr.bf16.mxu0 %v5706
        %6558 = vmatpush2.bf16.msra.mxu0 %v5705
        %6559 = vmatprep.subr.bf16.mxu0 %v5700
        %6560 = vmatpush2.bf16.msra.mxu0 %v5699
        %6561 = vmatprep.subr.bf16.mxu0 %v5694
        %6562 = vmatpush2.bf16.msra.mxu0 %v5693
        %6563 = vmatprep.subr.bf16.mxu0 %v5688
        %6564 = vmatpush2.bf16.msra.mxu0 %v5687
        %6565 = vmatprep.subr.bf16.mxu0 %v5682
        %6566 = vmatpush2.bf16.msra.mxu0 %v5681
        %6567 = vmatprep.mubr.bf16.mxu0 %v3613
        %6568 = vmatmul.mubr.bf16.gmra.mxu0 %v3612
        %v6569 = vpop.f32.mrf.mxu0
        %v6570 = vadd.f32 %v6529, %v6569
        %v6571 = vpop.f32.mrf.mxu0
        %v6572 = vadd.f32 %v6531, %v6571
        %v6573 = vpop.f32.mrf.mxu0
        %v6574 = vpop.f32.mrf.mxu0
        %6575 = vdwg.mxu0
        %6576 = vmatprep.subr.bf16.mxu0 %v5772
        %6577 = vmatpush1.bf16.msra.mxu0 %v5771
        %6578 = vmatprep.subr.bf16.mxu0 %v5766
        %6579 = vmatpush1.bf16.msra.mxu0 %v5765
        %6580 = vmatprep.subr.bf16.mxu0 %v5760
        %6581 = vmatpush1.bf16.msra.mxu0 %v5759
        %6582 = vmatprep.subr.bf16.mxu0 %v5754
        %6583 = vmatpush1.bf16.msra.mxu0 %v5753
        %6584 = vmatprep.subr.bf16.mxu0 %v5748
        %6585 = vmatpush1.bf16.msra.mxu0 %v5747
        %6586 = vmatprep.subr.bf16.mxu0 %v5742
        %6587 = vmatpush1.bf16.msra.mxu0 %v5741
        %6588 = vmatprep.subr.bf16.mxu0 %v5736
        %6589 = vmatpush1.bf16.msra.mxu0 %v5735
        %6590 = vmatprep.subr.bf16.mxu0 %v5730
        %6591 = vmatpush1.bf16.msra.mxu0 %v5729
        %6592 = vmatprep.subr.bf16.mxu0 0
        %6593 = vmatpush2.bf16.msra.mxu0 0
        %6594 = vmatprep.subr.bf16.mxu0 0
        %6595 = vmatpush2.bf16.msra.mxu0 0
        %6596 = vmatprep.subr.bf16.mxu0 0
        %6597 = vmatpush2.bf16.msra.mxu0 0
        %6598 = vmatprep.subr.bf16.mxu0 0
        %6599 = vmatpush2.bf16.msra.mxu0 0
        %6600 = vmatprep.subr.bf16.mxu0 0
        %6601 = vmatpush2.bf16.msra.mxu0 0
        %6602 = vmatprep.subr.bf16.mxu0 0
        %6603 = vmatpush2.bf16.msra.mxu0 0
        %6604 = vmatprep.subr.bf16.mxu0 0
        %6605 = vmatpush2.bf16.msra.mxu0 0
        %6606 = vmatprep.subr.bf16.mxu0 0
        %6607 = vmatpush2.bf16.msra.mxu0 0
        %6608 = vmatprep.mubr.bf16.mxu0 0
        %6609 = vmatmul.mubr.bf16.gmra.mxu0 %v3614
        %v6610 = vpop.f32.mrf.mxu0
        %v6611 = vadd.f32 %v6570, %v6610
        %v6612 = vpop.f32.mrf.mxu0
        %v6613 = vadd.f32 %v6572, %v6612
        %v6614 = vpop.f32.mrf.mxu0
        %v6615 = vpop.f32.mrf.mxu0
        %6616 = vdwg.mxu0
        %6617 = vmatprep.subr.bf16.mxu0 %v5390
        %6618 = vmatpush1.bf16.msra.mxu0 %v5389
        %6619 = vmatprep.subr.bf16.mxu0 %v5384
        %6620 = vmatpush1.bf16.msra.mxu0 %v5383
        %6621 = vmatprep.subr.bf16.mxu0 %v5378
        %6622 = vmatpush1.bf16.msra.mxu0 %v5377
        %6623 = vmatprep.subr.bf16.mxu0 %v5372
        %6624 = vmatpush1.bf16.msra.mxu0 %v5371
        %6625 = vmatprep.subr.bf16.mxu0 %v5366
        %6626 = vmatpush1.bf16.msra.mxu0 %v5365
        %6627 = vmatprep.subr.bf16.mxu0 %v5360
        %6628 = vmatpush1.bf16.msra.mxu0 %v5359
        %6629 = vmatprep.subr.bf16.mxu0 %v5354
        %6630 = vmatpush1.bf16.msra.mxu0 %v5353
        %6631 = vmatprep.subr.bf16.mxu0 %v5348
        %6632 = vmatpush1.bf16.msra.mxu0 %v5347
        %6633 = vmatprep.subr.bf16.mxu0 %v5438
        %6634 = vmatpush2.bf16.msra.mxu0 %v5437
        %6635 = vmatprep.subr.bf16.mxu0 %v5432
        %6636 = vmatpush2.bf16.msra.mxu0 %v5431
        %6637 = vmatprep.subr.bf16.mxu0 %v5426
        %6638 = vmatpush2.bf16.msra.mxu0 %v5425
        %6639 = vmatprep.subr.bf16.mxu0 %v5420
        %6640 = vmatpush2.bf16.msra.mxu0 %v5419
        %6641 = vmatprep.subr.bf16.mxu0 %v5414
        %6642 = vmatpush2.bf16.msra.mxu0 %v5413
        %6643 = vmatprep.subr.bf16.mxu0 %v5408
        %6644 = vmatpush2.bf16.msra.mxu0 %v5407
        %6645 = vmatprep.subr.bf16.mxu0 %v5402
        %6646 = vmatpush2.bf16.msra.mxu0 %v5401
        %6647 = vmatprep.subr.bf16.mxu0 %v5396
        %6648 = vmatpush2.bf16.msra.mxu0 %v5395
        %6649 = vmatprep.mubr.bf16.mxu0 %v3607
        %6650 = vmatmul.mubr.bf16.gmra.mxu0 %v3606
        %v6651 = vpop.f32.mrf.mxu0
        %v6652 = vadd.f32 0.0, %v6651
        %v6653 = vpop.f32.mrf.mxu0
        %v6654 = vadd.f32 0.0, %v6653
        %v6655 = vpop.f32.mrf.mxu0
        %v6656 = vpop.f32.mrf.mxu0
        %6657 = vdwg.mxu0
        %6658 = vmatprep.subr.bf16.mxu0 %v5486
        %6659 = vmatpush1.bf16.msra.mxu0 %v5485
        %6660 = vmatprep.subr.bf16.mxu0 %v5480
        %6661 = vmatpush1.bf16.msra.mxu0 %v5479
        %6662 = vmatprep.subr.bf16.mxu0 %v5474
        %6663 = vmatpush1.bf16.msra.mxu0 %v5473
        %6664 = vmatprep.subr.bf16.mxu0 %v5468
        %6665 = vmatpush1.bf16.msra.mxu0 %v5467
        %6666 = vmatprep.subr.bf16.mxu0 %v5462
        %6667 = vmatpush1.bf16.msra.mxu0 %v5461
        %6668 = vmatprep.subr.bf16.mxu0 %v5456
        %6669 = vmatpush1.bf16.msra.mxu0 %v5455
        %6670 = vmatprep.subr.bf16.mxu0 %v5450
        %6671 = vmatpush1.bf16.msra.mxu0 %v5449
        %6672 = vmatprep.subr.bf16.mxu0 %v5444
        %6673 = vmatpush1.bf16.msra.mxu0 %v5443
        %6674 = vmatprep.subr.bf16.mxu0 %v5534
        %6675 = vmatpush2.bf16.msra.mxu0 %v5533
        %6676 = vmatprep.subr.bf16.mxu0 %v5528
        %6677 = vmatpush2.bf16.msra.mxu0 %v5527
        %6678 = vmatprep.subr.bf16.mxu0 %v5522
        %6679 = vmatpush2.bf16.msra.mxu0 %v5521
        %6680 = vmatprep.subr.bf16.mxu0 %v5516
        %6681 = vmatpush2.bf16.msra.mxu0 %v5515
        %6682 = vmatprep.subr.bf16.mxu0 %v5510
        %6683 = vmatpush2.bf16.msra.mxu0 %v5509
        %6684 = vmatprep.subr.bf16.mxu0 %v5504
        %6685 = vmatpush2.bf16.msra.mxu0 %v5503
        %6686 = vmatprep.subr.bf16.mxu0 %v5498
        %6687 = vmatpush2.bf16.msra.mxu0 %v5497
        %6688 = vmatprep.subr.bf16.mxu0 %v5492
        %6689 = vmatpush2.bf16.msra.mxu0 %v5491
        %6690 = vmatprep.mubr.bf16.mxu0 %v3609
        %6691 = vmatmul.mubr.bf16.gmra.mxu0 %v3608
        %v6692 = vpop.f32.mrf.mxu0
        %v6693 = vadd.f32 %v6652, %v6692
        %v6694 = vpop.f32.mrf.mxu0
        %v6695 = vadd.f32 %v6654, %v6694
        %v6696 = vpop.f32.mrf.mxu0
        %v6697 = vpop.f32.mrf.mxu0
        %6698 = vdwg.mxu0
        %6699 = vmatprep.subr.bf16.mxu0 %v5582
        %6700 = vmatpush1.bf16.msra.mxu0 %v5581
        %6701 = vmatprep.subr.bf16.mxu0 %v5576
        %6702 = vmatpush1.bf16.msra.mxu0 %v5575
        %6703 = vmatprep.subr.bf16.mxu0 %v5570
        %6704 = vmatpush1.bf16.msra.mxu0 %v5569
        %6705 = vmatprep.subr.bf16.mxu0 %v5564
        %6706 = vmatpush1.bf16.msra.mxu0 %v5563
        %6707 = vmatprep.subr.bf16.mxu0 %v5558
        %6708 = vmatpush1.bf16.msra.mxu0 %v5557
        %6709 = vmatprep.subr.bf16.mxu0 %v5552
        %6710 = vmatpush1.bf16.msra.mxu0 %v5551
        %6711 = vmatprep.subr.bf16.mxu0 %v5546
        %6712 = vmatpush1.bf16.msra.mxu0 %v5545
        %6713 = vmatprep.subr.bf16.mxu0 %v5540
        %6714 = vmatpush1.bf16.msra.mxu0 %v5539
        %6715 = vmatprep.subr.bf16.mxu0 %v5630
        %6716 = vmatpush2.bf16.msra.mxu0 %v5629
        %6717 = vmatprep.subr.bf16.mxu0 %v5624
        %6718 = vmatpush2.bf16.msra.mxu0 %v5623
        %6719 = vmatprep.subr.bf16.mxu0 %v5618
        %6720 = vmatpush2.bf16.msra.mxu0 %v5617
        %6721 = vmatprep.subr.bf16.mxu0 %v5612
        %6722 = vmatpush2.bf16.msra.mxu0 %v5611
        %6723 = vmatprep.subr.bf16.mxu0 %v5606
        %6724 = vmatpush2.bf16.msra.mxu0 %v5605
        %6725 = vmatprep.subr.bf16.mxu0 %v5600
        %6726 = vmatpush2.bf16.msra.mxu0 %v5599
        %6727 = vmatprep.subr.bf16.mxu0 %v5594
        %6728 = vmatpush2.bf16.msra.mxu0 %v5593
        %6729 = vmatprep.subr.bf16.mxu0 %v5588
        %6730 = vmatpush2.bf16.msra.mxu0 %v5587
        %6731 = vmatprep.mubr.bf16.mxu0 %v3611
        %6732 = vmatmul.mubr.bf16.gmra.mxu0 %v3610
        %v6733 = vpop.f32.mrf.mxu0
        %v6734 = vadd.f32 %v6693, %v6733
        %v6735 = vpop.f32.mrf.mxu0
        %v6736 = vadd.f32 %v6695, %v6735
        %v6737 = vpop.f32.mrf.mxu0
        %v6738 = vpop.f32.mrf.mxu0
        %6739 = vdwg.mxu0
        %6740 = vmatprep.subr.bf16.mxu0 %v5678
        %6741 = vmatpush1.bf16.msra.mxu0 %v5677
        %6742 = vmatprep.subr.bf16.mxu0 %v5672
        %6743 = vmatpush1.bf16.msra.mxu0 %v5671
        %6744 = vmatprep.subr.bf16.mxu0 %v5666
        %6745 = vmatpush1.bf16.msra.mxu0 %v5665
        %6746 = vmatprep.subr.bf16.mxu0 %v5660
        %6747 = vmatpush1.bf16.msra.mxu0 %v5659
        %6748 = vmatprep.subr.bf16.mxu0 %v5654
        %6749 = vmatpush1.bf16.msra.mxu0 %v5653
        %6750 = vmatprep.subr.bf16.mxu0 %v5648
        %6751 = vmatpush1.bf16.msra.mxu0 %v5647
        %6752 = vmatprep.subr.bf16.mxu0 %v5642
        %6753 = vmatpush1.bf16.msra.mxu0 %v5641
        %6754 = vmatprep.subr.bf16.mxu0 %v5636
        %6755 = vmatpush1.bf16.msra.mxu0 %v5635
        %6756 = vmatprep.subr.bf16.mxu0 %v5726
        %6757 = vmatpush2.bf16.msra.mxu0 %v5725
        %6758 = vmatprep.subr.bf16.mxu0 %v5720
        %6759 = vmatpush2.bf16.msra.mxu0 %v5719
        %6760 = vmatprep.subr.bf16.mxu0 %v5714
        %6761 = vmatpush2.bf16.msra.mxu0 %v5713
        %6762 = vmatprep.subr.bf16.mxu0 %v5708
        %6763 = vmatpush2.bf16.msra.mxu0 %v5707
        %6764 = vmatprep.subr.bf16.mxu0 %v5702
        %6765 = vmatpush2.bf16.msra.mxu0 %v5701
        %6766 = vmatprep.subr.bf16.mxu0 %v5696
        %6767 = vmatpush2.bf16.msra.mxu0 %v5695
        %6768 = vmatprep.subr.bf16.mxu0 %v5690
        %6769 = vmatpush2.bf16.msra.mxu0 %v5689
        %6770 = vmatprep.subr.bf16.mxu0 %v5684
        %6771 = vmatpush2.bf16.msra.mxu0 %v5683
        %6772 = vmatprep.mubr.bf16.mxu0 %v3613
        %6773 = vmatmul.mubr.bf16.gmra.mxu0 %v3612
        %v6774 = vpop.f32.mrf.mxu0
        %v6775 = vadd.f32 %v6734, %v6774
        %v6776 = vpop.f32.mrf.mxu0
        %v6777 = vadd.f32 %v6736, %v6776
        %v6778 = vpop.f32.mrf.mxu0
        %v6779 = vpop.f32.mrf.mxu0
        %6780 = vdwg.mxu0
        %6781 = vmatprep.subr.bf16.mxu0 %v5774
        %6782 = vmatpush1.bf16.msra.mxu0 %v5773
        %6783 = vmatprep.subr.bf16.mxu0 %v5768
        %6784 = vmatpush1.bf16.msra.mxu0 %v5767
        %6785 = vmatprep.subr.bf16.mxu0 %v5762
        %6786 = vmatpush1.bf16.msra.mxu0 %v5761
        %6787 = vmatprep.subr.bf16.mxu0 %v5756
        %6788 = vmatpush1.bf16.msra.mxu0 %v5755
        %6789 = vmatprep.subr.bf16.mxu0 %v5750
        %6790 = vmatpush1.bf16.msra.mxu0 %v5749
        %6791 = vmatprep.subr.bf16.mxu0 %v5744
        %6792 = vmatpush1.bf16.msra.mxu0 %v5743
        %6793 = vmatprep.subr.bf16.mxu0 %v5738
        %6794 = vmatpush1.bf16.msra.mxu0 %v5737
        %6795 = vmatprep.subr.bf16.mxu0 %v5732
        %6796 = vmatpush1.bf16.msra.mxu0 %v5731
        %6797 = vmatprep.subr.bf16.mxu0 0
        %6798 = vmatpush2.bf16.msra.mxu0 0
        %6799 = vmatprep.subr.bf16.mxu0 0
        %6800 = vmatpush2.bf16.msra.mxu0 0
        %6801 = vmatprep.subr.bf16.mxu0 0
        %6802 = vmatpush2.bf16.msra.mxu0 0
        %6803 = vmatprep.subr.bf16.mxu0 0
        %6804 = vmatpush2.bf16.msra.mxu0 0
        %6805 = vmatprep.subr.bf16.mxu0 0
        %6806 = vmatpush2.bf16.msra.mxu0 0
        %6807 = vmatprep.subr.bf16.mxu0 0
        %6808 = vmatpush2.bf16.msra.mxu0 0
        %6809 = vmatprep.subr.bf16.mxu0 0
        %6810 = vmatpush2.bf16.msra.mxu0 0
        %6811 = vmatprep.subr.bf16.mxu0 0
        %6812 = vmatpush2.bf16.msra.mxu0 0
        %6813 = vmatprep.mubr.bf16.mxu0 0
        %6814 = vmatmul.mubr.bf16.gmra.mxu0 %v3614
        %v6815 = vpop.f32.mrf.mxu0
        %v6816 = vadd.f32 %v6775, %v6815
        %v6817 = vpop.f32.mrf.mxu0
        %v6818 = vadd.f32 %v6777, %v6817
        %v6819 = vpop.f32.mrf.mxu0
        %v6820 = vpop.f32.mrf.mxu0
        %6821 = vdwg.mxu0
        %v6822 = vadd.f32 %v3600, %v6406
        %v6823 = vadd.f32 %v3601, %v6408
        %v6824 = vadd.f32 %v3602, %v6611
        %v6825 = vadd.f32 %v3603, %v6613
        %v6826 = vadd.f32 %v3604, %v6816
        %v6827 = vadd.f32 %v3605, %v6818
        %6828 = vst [vmem:[#allocation7] sm:$0xff] %v6822
        %6829 = vst [vmem:[#allocation7 + $0x8] sm:$0xff] %v6823
        %6830 = vst [vmem:[#allocation7 + $0x10] sm:$0xff] %v6824
        %6831 = vst [vmem:[#allocation7 + $0x18] sm:$0xff] %v6825
        %6832 = vst [vmem:[#allocation7 + $0x20] sm:$0xff] %v6826
        %6833 = vst [vmem:[#allocation7 + $0x28] sm:$0xff] %v6827
        // Predicated region
        $region45: #{mini_model_forward.1} parent=31 // pred_check
          %p6834 = pneg %p107
        $region46: #{mini_model_forward.1} parent=31 // pred_check_branch
          %6836 = sbr.rel (%p6834) target = $region48
        $region47: #{mini_model_forward.1} parent=31 // pred_region
          %s6838 = ssub.s32 768, 768
          %6839 = vsyncadd [#allocation4], %s6838
          %s6841 = sshll.u32 [#allocation7], 4
          %s6842 = int_to_ptr.vmem [resolvable:$true] %s6841
          %6844 = dma.vmem_to_hbm [thread:$0]  %s6842, 768, %s3, [#allocation4]
        $region48: #{mini_model_forward.1} parent=31 // pred_fallthru
          _
        // Predicated region
        $region49: #{mini_model_forward.1} parent=31 // pred_check
          %p6845 = pneg %p107
        $region50: #{mini_model_forward.1} parent=31 // pred_check_branch
          %6847 = sbr.rel (%p6845) target = $region52
        $region51: #{mini_model_forward.1} parent=31 // pred_region
          %6848 = dma.done [#allocation4], 768
        $region52: #{mini_model_forward.1} parent=31 // pred_fallthru
          _
      $region32: #{mini_model_forward.1} parent=5 // pred_fallthru
        _
      %p6849 = scmp.le.s32.totalorder 2, %s16
      // Predicated region
      $region53: #{mini_model_forward.1} parent=5 // pred_check
        %p6850 = pneg %p6849
      $region54: #{mini_model_forward.1} parent=5 // pred_check_branch
        %6852 = sbr.rel (%p6850) target = $region56
      $region55: #{mini_model_forward.1} parent=5 // pred_region
        %s6853 = ssub.s32 %s16, 2
      $region56: #{mini_model_forward.1} parent=5 // pred_fallthru
        _
    $region6: #{mini_model_forward.1} parent=1 // loop_footer
      %s20 = sadd.s32 1, %s16
    $region7: #{mini_model_forward.1} parent=1 // loop_footer_branch
      %15 = sbr.rel target = $region3
    $region8: #{mini_model_forward.1} parent=1 // loop_exit
      _
    %6854 = vsyncpa [#allocation3], 1
    %s6855 = scalar_lea.sflag [#allocation3], 1
    %6856 = vsyncpa %s6855, 1
    %6857 = vsyncpa [#allocation6], 1
    %s6858 = scalar_lea.sflag [#allocation6], 1
    %6859 = vsyncpa %s6858, 1
    %6860 = vsyncpa [#allocation4], 1
    %s6861 = scalar_lea.sflag [#allocation4], 1
    %6862 = vsyncpa %s6861, 1

</llo_original>
